<compile_context>
chip_gen: v7x
topology: tpu7x:2x2x1
jax: 0.10.0
libtpu: 0.0.40
codegen_flags: <defaults>
</compile_context>

<pallas_src>
import jax
import jax.numpy as jnp
from jax import lax
from jax.experimental import pallas as pl
from jax.experimental.pallas import tpu as pltpu

N = 16            # number of skill nodes per graph
D = 32            # skill_embed_dim
H = 3             # attention heads (concat=False -> mean over heads)
HN = H * N        # 48
B_TILE = 4        # graphs per grid step; B_TILE * D = 128 -> lane-dense out block
PRESERVE = 0.1    # self.preserve_ratio
NEG_SLOPE = 0.2   # leaky_relu negative slope
NEG_INF = -1e30

# --- packed parameter slab layout (per layer, stacked along rows) ------------
LANE = 128
PCOLS = H * LANE           # 384 : W_h in lanes [h*128, h*128+32)
ROW_B = D                  # 32  : bias row (bias in lanes [:D])
ROW_V = 40                 # 40  : start of vsrc/vdst rows (8-aligned)
PROWS = ROW_V + HN         # 88  : rows per layer slab; full slab is [2*88, 384]
DST_LANE = LANE            # vdst_exp sits at lanes [128:160) of the vsrc rows


def gat_kernel(x_ref, mask_ref, p_ref, o_ref):
    x_all = x_ref[...]                                   # [B_TILE*N, D]

    def layer(xin_all, layer_idx):
        base = layer_idx * PROWS                                         # static
        w_aug = p_ref[base:base + D, :]                                  # [D, 384]
        bias = p_ref[base + ROW_B:base + ROW_B + 1, :D]                  # [1, D]
        vsrc = p_ref[base + ROW_V:base + ROW_V + HN, :D]                 # [HN, D]
        vdst = p_ref[base + ROW_V:base + ROW_V + HN,
                     DST_LANE:DST_LANE + D]                              # [HN, D]

        # One MXU push for all graphs / heads; head blocks are tile-aligned.
        z_all = jnp.dot(xin_all, w_aug,
                        preferred_element_type=jnp.float32)              # [B_TILE*N, 384]

        outs = []
        for b in range(B_TILE):                      # static unroll over graphs
            xb = xin_all[b * N:(b + 1) * N, :]       # [N, D]  (8-aligned row slice)
            zb = z_all[b * N:(b + 1) * N, :]         # [N, 384]

            # src scores, all heads in one dot: [HN, D] . [N, D]^T -> [HN, N]
            src = lax.dot_general(vsrc, xb, (((1,), (1,)), ((), ())),
                                  preferred_element_type=jnp.float32)
            # dst scores: one VPU multiply + one lane reduce (no 1-lane extracts)
            x3 = jnp.concatenate([xb, xb, xb], axis=0)                   # [HN, D]
            dst = jnp.sum(x3 * vdst, axis=-1, keepdims=True)             # [HN, 1]

            logits = dst + src                                           # [HN, N]
            logits = jnp.where(logits > 0, logits, NEG_SLOPE * logits)   # leaky_relu
            logits = logits + mask_ref[b * HN:(b + 1) * HN, :]           # mask non-edges
            m = jnp.max(logits, axis=-1, keepdims=True)
            p = jnp.exp(logits - m)                                      # masked -> 0
            ssum = jnp.sum(p, axis=-1, keepdims=True)
            # softmax normalization and the /H head-mean in one EUP reciprocal
            attn = p * (pl.reciprocal(ssum, approx=True) * (1.0 / H))    # [HN, N]

            # one aggregation push; head diagonal blocks are lane-tile aligned
            y = jnp.dot(attn, zb, preferred_element_type=jnp.float32)    # [HN, 384]
            agg = (y[0:N, 0:D]
                   + y[N:2 * N, LANE:LANE + D]
                   + y[2 * N:3 * N, 2 * LANE:2 * LANE + D])              # [N, D]
            outs.append(agg + bias)
        return jnp.concatenate(outs, axis=0)                             # [B_TILE*N, D]

    t1 = layer(x_all, 0)
    t = jnp.maximum(PRESERVE * x_all + (1.0 - PRESERVE) * t1, 0.0)
    t2 = layer(t, 1)
    # lane-dense output block: graphs stacked along lanes -> [N, B_TILE*D] = [16, 128]
    o_ref[...] = jnp.concatenate(
        [t2[b * N:(b + 1) * N, :] for b in range(B_TILE)], axis=1)


def gat_forward(x_flat, add_mask, packed_params, *, batch):
    """x_flat: [batch*N, D], add_mask: [batch*H*N, N], packed_params: [2*PROWS, PCOLS].
    Returns [N, batch*D] (graph b in lanes [b*D:(b+1)*D])."""
    assert batch % B_TILE == 0
    steps = batch // B_TILE

    flops_graph_layer = (2 * N * D * PCOLS         # projection (incl. padded lanes)
                         + 2 * HN * D * N          # src scores
                         + 2 * HN * D              # dst scores (mul + reduce)
                         + 2 * HN * N * PCOLS)     # aggregation
    ce = pl.CostEstimate(
        flops=2 * batch * flops_graph_layer,
        transcendentals=2 * batch * (HN * N + HN),
        bytes_accessed=4 * (batch * N * D + batch * HN * N
                            + 2 * PROWS * PCOLS + N * batch * D),
    )
    return pl.pallas_call(
        gat_kernel,
        out_shape=jax.ShapeDtypeStruct((N, batch * D), jnp.float32),
        grid=(steps,),
        in_specs=[
            pl.BlockSpec((B_TILE * N, D), lambda g: (g, 0)),        # x tile per step
            pl.BlockSpec((B_TILE * HN, N), lambda g: (g, 0)),       # mask tile per step
            pl.BlockSpec((2 * PROWS, PCOLS), lambda g: (0, 0)),     # params: VMEM-resident
        ],
        out_specs=pl.BlockSpec((N, B_TILE * D), lambda g: (0, g)),  # lane-dense [16, 128]
        compiler_params=pltpu.CompilerParams(
            dimension_semantics=("parallel",)),                     # 2 TCs on v7x
        cost_estimate=ce,
    )(x_flat, add_mask, packed_params)


# ----------------------------- host-side packing -----------------------------
def _glorot(key, shape):
    fan_in, fan_out = shape[-2], shape[-1]
    lim = (6.0 / (fan_in + fan_out)) ** 0.5
    return jax.random.uniform(key, shape, jnp.float32, -lim, lim)


def init_params(key):
    ks = jax.random.split(key, 6)
    return {
        "w1":  _glorot(ks[0], (D, H * D)),
        "as1": _glorot(ks[1], (H, D)),
        "ad1": _glorot(ks[2], (H, D)),
        "b1":  jnp.zeros((1, D), jnp.float32),
        "w2":  _glorot(ks[3], (D, H * D)),
        "as2": _glorot(ks[4], (H, D)),
        "ad2": _glorot(ks[5], (H, D)),
        "b2":  jnp.zeros((1, D), jnp.float32),
    }


def pack_params(p):
    """Fold attention vectors into per-head weight vectors and pack both layers
    into one 128-lane-tile-aligned slab (fetched once, VMEM-resident)."""
    hi = jax.lax.Precision.HIGHEST

    def pack_layer(w, a_s, a_d, b):
        w3 = w.reshape(D, H, D)                                     # w3[:, h, :] = W_h
        v_src = jnp.einsum("dhe,he->hd", w3, a_s, precision=hi)     # [H, D]
        v_dst = jnp.einsum("dhe,he->hd", w3, a_d, precision=hi)     # [H, D]
        slab = jnp.zeros((PROWS, PCOLS), jnp.float32)
        for h in range(H):                                          # W_h tile-aligned
            slab = slab.at[:D, h * LANE:h * LANE + D].set(w3[:, h, :])
        slab = slab.at[ROW_B, :D].set(b.reshape(-1))
        slab = slab.at[ROW_V:ROW_V + HN, :D].set(jnp.repeat(v_src, N, axis=0))
        slab = slab.at[ROW_V:ROW_V + HN,
                       DST_LANE:DST_LANE + D].set(jnp.repeat(v_dst, N, axis=0))
        return slab

    l1 = pack_layer(p["w1"], p["as1"], p["ad1"], p["b1"])
    l2 = pack_layer(p["w2"], p["as2"], p["ad2"], p["b2"])
    return jnp.concatenate([l1, l2], axis=0)                        # [2*PROWS, PCOLS]


def make_additive_mask(adj_batch):
    """adj_batch: [B, N, N]. Returns [B*H*N, N]: 0 where edge, -1e30 elsewhere,
    pre-tiled across heads per graph (rows ordered (graph, head, dst))."""
    bsz = adj_batch.shape[0]
    m = jnp.where(adj_batch > 0.5, 0.0, NEG_INF).astype(jnp.float32)   # [B, N, N]
    m = jnp.tile(m, (1, H, 1))                                         # [B, H*N, N]
    return m.reshape(bsz * HN, N)


# ------------------------- independent pure-JAX reference --------------------
def reference_forward(x_batch, adj_batch, params):
    """Naive per-head GAT (unfused, independent of the kernel's math layout)."""
    hi = jax.lax.Precision.HIGHEST

    def gat_layer(xin, adj_b, w, a_s, a_d, b):
        xp = jnp.dot(xin, w, precision=hi)                 # [N, H*D]
        head_outs = []
        for h in range(H):
            xh = xp[:, h * D:(h + 1) * D]                  # [N, D]
            e_src = jnp.dot(xh, a_s[h], precision=hi)      # [N]
            e_dst = jnp.dot(xh, a_d[h], precision=hi)      # [N]
            e = e_dst[:, None] + e_src[None, :]            # [N(dst), N(src)]
            e = jnp.where(e > 0, e, NEG_SLOPE * e)
            e = jnp.where(adj_b, e, NEG_INF)
            alpha = jax.nn.softmax(e, axis=-1)
            head_outs.append(jnp.dot(alpha, xh, precision=hi))
        return sum(head_outs) / H + b

    def per_graph(x, adj):
        adj_b = adj > 0.5
        t1 = gat_layer(x, adj_b, params["w1"], params["as1"], params["ad1"], params["b1"])
        t = jnp.maximum(PRESERVE * x + (1.0 - PRESERVE) * t1, 0.0)
        return gat_layer(t, adj_b, params["w2"], params["as2"], params["ad2"], params["b2"])

    return jax.vmap(per_graph)(x_batch, adj_batch)


if __name__ == "__main__":
    B = 8                                       # graphs / timesteps per call
    key = jax.random.PRNGKey(0)
    k_x, k_src, k_dst, k_p = jax.random.split(key, 4)

    # per-graph node features (skill embeddings)
    x_batch = jax.random.normal(k_x, (B, N, D), jnp.float32)

    # per-graph random edge lists -> dense adjacency adj[b, dst, src] + self-loops
    # (self-loops guarantee every softmax row has at least one unmasked entry)
    E = 48
    src = jax.random.randint(k_src, (B, E), 0, N)
    dst = jax.random.randint(k_dst, (B, E), 0, N)
    bidx = jnp.arange(B)[:, None]
    adj = jnp.zeros((B, N, N), jnp.float32).at[bidx, dst, src].set(1.0)
    adj = jnp.maximum(adj, jnp.eye(N, dtype=jnp.float32)[None, :, :])

    params = init_params(k_p)
    packed = pack_params(params)
    add_mask = make_additive_mask(adj)          # [B*H*N, N]
    x_flat = x_batch.reshape(B * N, D)          # [B*N, D]

    out_flat = jax.block_until_ready(gat_forward(x_flat, add_mask, packed, batch=B))
    out = out_flat.reshape(N, B, D).transpose(1, 0, 2)          # [B, N, D]

    ref = jax.block_until_ready(reference_forward(x_batch, adj, params))

    assert out.shape == (B, N, D)
    err = float(jnp.max(jnp.abs(out - ref)))
    # tolerance relaxed to cover the approx (EUP) reciprocal in the kernel
    assert jnp.allclose(out, ref, rtol=5e-3, atol=5e-3), \
        f"kernel != reference (max abs err {err})"

    print("KERNEL_OK")
</pallas_src>

<mosaic_0001>
module attributes {stable_mosaic.version = 11 : i64} {
  func.func @gat_kernel(%arg0: i32, %arg1: memref<64x32xf32, #tpu.memory_space<vmem>>, %arg2: memref<192x16xf32, #tpu.memory_space<vmem>>, %arg3: memref<176x384xf32, #tpu.memory_space<vmem>>, %arg4: memref<16x128xf32, #tpu.memory_space<vmem>>) attributes {dimension_semantics = [#tpu.dimension_semantics<parallel>], iteration_bounds = array<i64: 2>, scalar_prefetch = 0 : i64, scratch_operands = 0 : i64, tpu.core_type = #tpu.core_type<tc>, window_params = [{transform_indices = @transform_0, window_bounds = array<i64: 64, 32>}, {transform_indices = @transform_1, window_bounds = array<i64: 192, 16>}, {pipeline_mode = #tpu.pipeline_mode<synchronous>, transform_indices = @transform_2, window_bounds = array<i64: 176, 384>}, {transform_indices = @transform_3, window_bounds = array<i64: 16, 128>}]} {
    %c0 = arith.constant 0 : index
    %c0_0 = arith.constant 0 : index
    %0 = vector.load %arg1[%c0, %c0_0] : memref<64x32xf32, #tpu.memory_space<vmem>>, vector<64x32xf32>
    %c0_1 = arith.constant 0 : index
    %c0_2 = arith.constant 0 : index
    %1 = vector.load %arg3[%c0_1, %c0_2] : memref<176x384xf32, #tpu.memory_space<vmem>>, vector<32x384xf32>
    %c32 = arith.constant 32 : index
    %c0_3 = arith.constant 0 : index
    %2 = vector.load %arg3[%c32, %c0_3] : memref<176x384xf32, #tpu.memory_space<vmem>>, vector<1x32xf32>
    %c40 = arith.constant 40 : index
    %c0_4 = arith.constant 0 : index
    %3 = vector.load %arg3[%c40, %c0_4] : memref<176x384xf32, #tpu.memory_space<vmem>>, vector<48x32xf32>
    %c40_5 = arith.constant 40 : index
    %c128 = arith.constant 128 : index
    %4 = vector.load %arg3[%c40_5, %c128] : memref<176x384xf32, #tpu.memory_space<vmem>>, vector<48x32xf32>
    %cst = arith.constant dense<0.000000e+00> : vector<64x384xf32>
    %5 = tpu.matmul %0, %1, %cst {dimension_numbers = #tpu.dot_dimension_numbers<[1], [0], [0], [1], [0, 0, 1, 1], [], []>} : vector<64x32xf32>, vector<32x384xf32>, vector<64x384xf32> -> vector<64x384xf32>
    %6 = vector.extract_strided_slice %0 {offsets = [0, 0], sizes = [16, 32], strides = [1, 1]} : vector<64x32xf32> to vector<16x32xf32>
    %7 = vector.extract_strided_slice %5 {offsets = [0, 0], sizes = [16, 384], strides = [1, 1]} : vector<64x384xf32> to vector<16x384xf32>
    %cst_6 = arith.constant dense<0.000000e+00> : vector<48x16xf32>
    %8 = tpu.matmul %3, %6, %cst_6 {dimension_numbers = #tpu.dot_dimension_numbers<[1], [1], [0], [0], [0, 0, 1, 0], [], []>} : vector<48x32xf32>, vector<16x32xf32>, vector<48x16xf32> -> vector<48x16xf32>
    %9 = tpu.concatenate %6, %6, %6 in 0 : vector<16x32xf32>, vector<16x32xf32>, vector<16x32xf32> -> vector<48x32xf32>
    %10 = arith.mulf %9, %4 : vector<48x32xf32>
    %cst_7 = arith.constant dense<0.000000e+00> : vector<48xf32>
    %11 = vector.multi_reduction <add>, %10, %cst_7 [1] : vector<48x32xf32> to vector<48xf32>
    %12 = vector.shape_cast %11 : vector<48xf32> to vector<48x1xf32>
    %13 = vector.broadcast %12 : vector<48x1xf32> to vector<48x16xf32>
    %14 = arith.addf %13, %8 : vector<48x16xf32>
    %cst_8 = arith.constant 0.000000e+00 : f32
    %15 = vector.broadcast %cst_8 : f32 to vector<48x16xf32>
    %16 = arith.cmpf ogt, %14, %15 : vector<48x16xf32>
    %cst_9 = arith.constant 2.000000e-01 : f32
    %17 = vector.broadcast %cst_9 : f32 to vector<48x16xf32>
    %18 = arith.mulf %17, %14 : vector<48x16xf32>
    %19 = arith.select %16, %14, %18 : vector<48x16xi1>, vector<48x16xf32>
    %c0_10 = arith.constant 0 : index
    %c0_11 = arith.constant 0 : index
    %20 = vector.load %arg2[%c0_10, %c0_11] : memref<192x16xf32, #tpu.memory_space<vmem>>, vector<48x16xf32>
    %21 = arith.addf %19, %20 : vector<48x16xf32>
    %cst_12 = arith.constant dense<0xFF800000> : vector<48xf32>
    %22 = vector.multi_reduction <maximumf>, %21, %cst_12 [1] : vector<48x16xf32> to vector<48xf32>
    %23 = vector.shape_cast %22 : vector<48xf32> to vector<48x1xf32>
    %24 = vector.broadcast %23 : vector<48x1xf32> to vector<48x16xf32>
    %25 = arith.subf %21, %24 : vector<48x16xf32>
    %26 = math.exp %25 : vector<48x16xf32>
    %cst_13 = arith.constant dense<0.000000e+00> : vector<48xf32>
    %27 = vector.multi_reduction <add>, %26, %cst_13 [1] : vector<48x16xf32> to vector<48xf32>
    %28 = vector.shape_cast %27 : vector<48xf32> to vector<48x1xf32>
    %29 = tpu.reciprocal %28 {approx = true} : vector<48x1xf32> -> vector<48x1xf32>
    %cst_14 = arith.constant 0.333333343 : f32
    %30 = vector.broadcast %cst_14 : f32 to vector<48x1xf32>
    %31 = arith.mulf %29, %30 : vector<48x1xf32>
    %32 = vector.broadcast %31 : vector<48x1xf32> to vector<48x16xf32>
    %33 = arith.mulf %26, %32 : vector<48x16xf32>
    %cst_15 = arith.constant dense<0.000000e+00> : vector<48x384xf32>
    %34 = tpu.matmul %33, %7, %cst_15 {dimension_numbers = #tpu.dot_dimension_numbers<[1], [0], [0], [1], [0, 0, 1, 1], [], []>} : vector<48x16xf32>, vector<16x384xf32>, vector<48x384xf32> -> vector<48x384xf32>
    %35 = vector.extract_strided_slice %34 {offsets = [0, 0], sizes = [16, 32], strides = [1, 1]} : vector<48x384xf32> to vector<16x32xf32>
    %36 = vector.extract_strided_slice %34 {offsets = [16, 128], sizes = [16, 32], strides = [1, 1]} : vector<48x384xf32> to vector<16x32xf32>
    %37 = arith.addf %35, %36 : vector<16x32xf32>
    %38 = vector.extract_strided_slice %34 {offsets = [32, 256], sizes = [16, 32], strides = [1, 1]} : vector<48x384xf32> to vector<16x32xf32>
    %39 = arith.addf %37, %38 : vector<16x32xf32>
    %40 = vector.broadcast %2 : vector<1x32xf32> to vector<16x32xf32>
    %41 = arith.addf %39, %40 : vector<16x32xf32>
    %42 = vector.extract_strided_slice %0 {offsets = [16, 0], sizes = [16, 32], strides = [1, 1]} : vector<64x32xf32> to vector<16x32xf32>
    %43 = vector.extract_strided_slice %5 {offsets = [16, 0], sizes = [16, 384], strides = [1, 1]} : vector<64x384xf32> to vector<16x384xf32>
    %cst_16 = arith.constant dense<0.000000e+00> : vector<48x16xf32>
    %44 = tpu.matmul %3, %42, %cst_16 {dimension_numbers = #tpu.dot_dimension_numbers<[1], [1], [0], [0], [0, 0, 1, 0], [], []>} : vector<48x32xf32>, vector<16x32xf32>, vector<48x16xf32> -> vector<48x16xf32>
    %45 = tpu.concatenate %42, %42, %42 in 0 : vector<16x32xf32>, vector<16x32xf32>, vector<16x32xf32> -> vector<48x32xf32>
    %46 = arith.mulf %45, %4 : vector<48x32xf32>
    %cst_17 = arith.constant dense<0.000000e+00> : vector<48xf32>
    %47 = vector.multi_reduction <add>, %46, %cst_17 [1] : vector<48x32xf32> to vector<48xf32>
    %48 = vector.shape_cast %47 : vector<48xf32> to vector<48x1xf32>
    %49 = vector.broadcast %48 : vector<48x1xf32> to vector<48x16xf32>
    %50 = arith.addf %49, %44 : vector<48x16xf32>
    %cst_18 = arith.constant 0.000000e+00 : f32
    %51 = vector.broadcast %cst_18 : f32 to vector<48x16xf32>
    %52 = arith.cmpf ogt, %50, %51 : vector<48x16xf32>
    %cst_19 = arith.constant 2.000000e-01 : f32
    %53 = vector.broadcast %cst_19 : f32 to vector<48x16xf32>
    %54 = arith.mulf %53, %50 : vector<48x16xf32>
    %55 = arith.select %52, %50, %54 : vector<48x16xi1>, vector<48x16xf32>
    %c48 = arith.constant 48 : index
    %c0_20 = arith.constant 0 : index
    %56 = vector.load %arg2[%c48, %c0_20] : memref<192x16xf32, #tpu.memory_space<vmem>>, vector<48x16xf32>
    %57 = arith.addf %55, %56 : vector<48x16xf32>
    %cst_21 = arith.constant dense<0xFF800000> : vector<48xf32>
    %58 = vector.multi_reduction <maximumf>, %57, %cst_21 [1] : vector<48x16xf32> to vector<48xf32>
    %59 = vector.shape_cast %58 : vector<48xf32> to vector<48x1xf32>
    %60 = vector.broadcast %59 : vector<48x1xf32> to vector<48x16xf32>
    %61 = arith.subf %57, %60 : vector<48x16xf32>
    %62 = math.exp %61 : vector<48x16xf32>
    %cst_22 = arith.constant dense<0.000000e+00> : vector<48xf32>
    %63 = vector.multi_reduction <add>, %62, %cst_22 [1] : vector<48x16xf32> to vector<48xf32>
    %64 = vector.shape_cast %63 : vector<48xf32> to vector<48x1xf32>
    %65 = tpu.reciprocal %64 {approx = true} : vector<48x1xf32> -> vector<48x1xf32>
    %cst_23 = arith.constant 0.333333343 : f32
    %66 = vector.broadcast %cst_23 : f32 to vector<48x1xf32>
    %67 = arith.mulf %65, %66 : vector<48x1xf32>
    %68 = vector.broadcast %67 : vector<48x1xf32> to vector<48x16xf32>
    %69 = arith.mulf %62, %68 : vector<48x16xf32>
    %cst_24 = arith.constant dense<0.000000e+00> : vector<48x384xf32>
    %70 = tpu.matmul %69, %43, %cst_24 {dimension_numbers = #tpu.dot_dimension_numbers<[1], [0], [0], [1], [0, 0, 1, 1], [], []>} : vector<48x16xf32>, vector<16x384xf32>, vector<48x384xf32> -> vector<48x384xf32>
    %71 = vector.extract_strided_slice %70 {offsets = [0, 0], sizes = [16, 32], strides = [1, 1]} : vector<48x384xf32> to vector<16x32xf32>
    %72 = vector.extract_strided_slice %70 {offsets = [16, 128], sizes = [16, 32], strides = [1, 1]} : vector<48x384xf32> to vector<16x32xf32>
    %73 = arith.addf %71, %72 : vector<16x32xf32>
    %74 = vector.extract_strided_slice %70 {offsets = [32, 256], sizes = [16, 32], strides = [1, 1]} : vector<48x384xf32> to vector<16x32xf32>
    %75 = arith.addf %73, %74 : vector<16x32xf32>
    %76 = vector.broadcast %2 : vector<1x32xf32> to vector<16x32xf32>
    %77 = arith.addf %75, %76 : vector<16x32xf32>
    %78 = vector.extract_strided_slice %0 {offsets = [32, 0], sizes = [16, 32], strides = [1, 1]} : vector<64x32xf32> to vector<16x32xf32>
    %79 = vector.extract_strided_slice %5 {offsets = [32, 0], sizes = [16, 384], strides = [1, 1]} : vector<64x384xf32> to vector<16x384xf32>
    %cst_25 = arith.constant dense<0.000000e+00> : vector<48x16xf32>
    %80 = tpu.matmul %3, %78, %cst_25 {dimension_numbers = #tpu.dot_dimension_numbers<[1], [1], [0], [0], [0, 0, 1, 0], [], []>} : vector<48x32xf32>, vector<16x32xf32>, vector<48x16xf32> -> vector<48x16xf32>
    %81 = tpu.concatenate %78, %78, %78 in 0 : vector<16x32xf32>, vector<16x32xf32>, vector<16x32xf32> -> vector<48x32xf32>
    %82 = arith.mulf %81, %4 : vector<48x32xf32>
    %cst_26 = arith.constant dense<0.000000e+00> : vector<48xf32>
    %83 = vector.multi_reduction <add>, %82, %cst_26 [1] : vector<48x32xf32> to vector<48xf32>
    %84 = vector.shape_cast %83 : vector<48xf32> to vector<48x1xf32>
    %85 = vector.broadcast %84 : vector<48x1xf32> to vector<48x16xf32>
    %86 = arith.addf %85, %80 : vector<48x16xf32>
    %cst_27 = arith.constant 0.000000e+00 : f32
    %87 = vector.broadcast %cst_27 : f32 to vector<48x16xf32>
    %88 = arith.cmpf ogt, %86, %87 : vector<48x16xf32>
    %cst_28 = arith.constant 2.000000e-01 : f32
    %89 = vector.broadcast %cst_28 : f32 to vector<48x16xf32>
    %90 = arith.mulf %89, %86 : vector<48x16xf32>
    %91 = arith.select %88, %86, %90 : vector<48x16xi1>, vector<48x16xf32>
    %c96 = arith.constant 96 : index
    %c0_29 = arith.constant 0 : index
    %92 = vector.load %arg2[%c96, %c0_29] : memref<192x16xf32, #tpu.memory_space<vmem>>, vector<48x16xf32>
    %93 = arith.addf %91, %92 : vector<48x16xf32>
    %cst_30 = arith.constant dense<0xFF800000> : vector<48xf32>
    %94 = vector.multi_reduction <maximumf>, %93, %cst_30 [1] : vector<48x16xf32> to vector<48xf32>
    %95 = vector.shape_cast %94 : vector<48xf32> to vector<48x1xf32>
    %96 = vector.broadcast %95 : vector<48x1xf32> to vector<48x16xf32>
    %97 = arith.subf %93, %96 : vector<48x16xf32>
    %98 = math.exp %97 : vector<48x16xf32>
    %cst_31 = arith.constant dense<0.000000e+00> : vector<48xf32>
    %99 = vector.multi_reduction <add>, %98, %cst_31 [1] : vector<48x16xf32> to vector<48xf32>
    %100 = vector.shape_cast %99 : vector<48xf32> to vector<48x1xf32>
    %101 = tpu.reciprocal %100 {approx = true} : vector<48x1xf32> -> vector<48x1xf32>
    %cst_32 = arith.constant 0.333333343 : f32
    %102 = vector.broadcast %cst_32 : f32 to vector<48x1xf32>
    %103 = arith.mulf %101, %102 : vector<48x1xf32>
    %104 = vector.broadcast %103 : vector<48x1xf32> to vector<48x16xf32>
    %105 = arith.mulf %98, %104 : vector<48x16xf32>
    %cst_33 = arith.constant dense<0.000000e+00> : vector<48x384xf32>
    %106 = tpu.matmul %105, %79, %cst_33 {dimension_numbers = #tpu.dot_dimension_numbers<[1], [0], [0], [1], [0, 0, 1, 1], [], []>} : vector<48x16xf32>, vector<16x384xf32>, vector<48x384xf32> -> vector<48x384xf32>
    %107 = vector.extract_strided_slice %106 {offsets = [0, 0], sizes = [16, 32], strides = [1, 1]} : vector<48x384xf32> to vector<16x32xf32>
    %108 = vector.extract_strided_slice %106 {offsets = [16, 128], sizes = [16, 32], strides = [1, 1]} : vector<48x384xf32> to vector<16x32xf32>
    %109 = arith.addf %107, %108 : vector<16x32xf32>
    %110 = vector.extract_strided_slice %106 {offsets = [32, 256], sizes = [16, 32], strides = [1, 1]} : vector<48x384xf32> to vector<16x32xf32>
    %111 = arith.addf %109, %110 : vector<16x32xf32>
    %112 = vector.broadcast %2 : vector<1x32xf32> to vector<16x32xf32>
    %113 = arith.addf %111, %112 : vector<16x32xf32>
    %114 = vector.extract_strided_slice %0 {offsets = [48, 0], sizes = [16, 32], strides = [1, 1]} : vector<64x32xf32> to vector<16x32xf32>
    %115 = vector.extract_strided_slice %5 {offsets = [48, 0], sizes = [16, 384], strides = [1, 1]} : vector<64x384xf32> to vector<16x384xf32>
    %cst_34 = arith.constant dense<0.000000e+00> : vector<48x16xf32>
    %116 = tpu.matmul %3, %114, %cst_34 {dimension_numbers = #tpu.dot_dimension_numbers<[1], [1], [0], [0], [0, 0, 1, 0], [], []>} : vector<48x32xf32>, vector<16x32xf32>, vector<48x16xf32> -> vector<48x16xf32>
    %117 = tpu.concatenate %114, %114, %114 in 0 : vector<16x32xf32>, vector<16x32xf32>, vector<16x32xf32> -> vector<48x32xf32>
    %118 = arith.mulf %117, %4 : vector<48x32xf32>
    %cst_35 = arith.constant dense<0.000000e+00> : vector<48xf32>
    %119 = vector.multi_reduction <add>, %118, %cst_35 [1] : vector<48x32xf32> to vector<48xf32>
    %120 = vector.shape_cast %119 : vector<48xf32> to vector<48x1xf32>
    %121 = vector.broadcast %120 : vector<48x1xf32> to vector<48x16xf32>
    %122 = arith.addf %121, %116 : vector<48x16xf32>
    %cst_36 = arith.constant 0.000000e+00 : f32
    %123 = vector.broadcast %cst_36 : f32 to vector<48x16xf32>
    %124 = arith.cmpf ogt, %122, %123 : vector<48x16xf32>
    %cst_37 = arith.constant 2.000000e-01 : f32
    %125 = vector.broadcast %cst_37 : f32 to vector<48x16xf32>
    %126 = arith.mulf %125, %122 : vector<48x16xf32>
    %127 = arith.select %124, %122, %126 : vector<48x16xi1>, vector<48x16xf32>
    %c144 = arith.constant 144 : index
    %c0_38 = arith.constant 0 : index
    %128 = vector.load %arg2[%c144, %c0_38] : memref<192x16xf32, #tpu.memory_space<vmem>>, vector<48x16xf32>
    %129 = arith.addf %127, %128 : vector<48x16xf32>
    %cst_39 = arith.constant dense<0xFF800000> : vector<48xf32>
    %130 = vector.multi_reduction <maximumf>, %129, %cst_39 [1] : vector<48x16xf32> to vector<48xf32>
    %131 = vector.shape_cast %130 : vector<48xf32> to vector<48x1xf32>
    %132 = vector.broadcast %131 : vector<48x1xf32> to vector<48x16xf32>
    %133 = arith.subf %129, %132 : vector<48x16xf32>
    %134 = math.exp %133 : vector<48x16xf32>
    %cst_40 = arith.constant dense<0.000000e+00> : vector<48xf32>
    %135 = vector.multi_reduction <add>, %134, %cst_40 [1] : vector<48x16xf32> to vector<48xf32>
    %136 = vector.shape_cast %135 : vector<48xf32> to vector<48x1xf32>
    %137 = tpu.reciprocal %136 {approx = true} : vector<48x1xf32> -> vector<48x1xf32>
    %cst_41 = arith.constant 0.333333343 : f32
    %138 = vector.broadcast %cst_41 : f32 to vector<48x1xf32>
    %139 = arith.mulf %137, %138 : vector<48x1xf32>
    %140 = vector.broadcast %139 : vector<48x1xf32> to vector<48x16xf32>
    %141 = arith.mulf %134, %140 : vector<48x16xf32>
    %cst_42 = arith.constant dense<0.000000e+00> : vector<48x384xf32>
    %142 = tpu.matmul %141, %115, %cst_42 {dimension_numbers = #tpu.dot_dimension_numbers<[1], [0], [0], [1], [0, 0, 1, 1], [], []>} : vector<48x16xf32>, vector<16x384xf32>, vector<48x384xf32> -> vector<48x384xf32>
    %143 = vector.extract_strided_slice %142 {offsets = [0, 0], sizes = [16, 32], strides = [1, 1]} : vector<48x384xf32> to vector<16x32xf32>
    %144 = vector.extract_strided_slice %142 {offsets = [16, 128], sizes = [16, 32], strides = [1, 1]} : vector<48x384xf32> to vector<16x32xf32>
    %145 = arith.addf %143, %144 : vector<16x32xf32>
    %146 = vector.extract_strided_slice %142 {offsets = [32, 256], sizes = [16, 32], strides = [1, 1]} : vector<48x384xf32> to vector<16x32xf32>
    %147 = arith.addf %145, %146 : vector<16x32xf32>
    %148 = vector.broadcast %2 : vector<1x32xf32> to vector<16x32xf32>
    %149 = arith.addf %147, %148 : vector<16x32xf32>
    %150 = tpu.concatenate %41, %77, %113, %149 in 0 : vector<16x32xf32>, vector<16x32xf32>, vector<16x32xf32>, vector<16x32xf32> -> vector<64x32xf32>
    %cst_43 = arith.constant 1.000000e-01 : f32
    %151 = vector.broadcast %cst_43 : f32 to vector<64x32xf32>
    %152 = arith.mulf %151, %0 : vector<64x32xf32>
    %cst_44 = arith.constant 0.899999976 : f32
    %153 = vector.broadcast %cst_44 : f32 to vector<64x32xf32>
    %154 = arith.mulf %153, %150 : vector<64x32xf32>
    %155 = arith.addf %152, %154 : vector<64x32xf32>
    %cst_45 = arith.constant 0.000000e+00 : f32
    %156 = vector.broadcast %cst_45 : f32 to vector<64x32xf32>
    %157 = arith.maximumf %155, %156 : vector<64x32xf32>
    %c88 = arith.constant 88 : index
    %c0_46 = arith.constant 0 : index
    %158 = vector.load %arg3[%c88, %c0_46] : memref<176x384xf32, #tpu.memory_space<vmem>>, vector<32x384xf32>
    %c120 = arith.constant 120 : index
    %c0_47 = arith.constant 0 : index
    %159 = vector.load %arg3[%c120, %c0_47] : memref<176x384xf32, #tpu.memory_space<vmem>>, vector<1x32xf32>
    %c128_48 = arith.constant 128 : index
    %c0_49 = arith.constant 0 : index
    %160 = vector.load %arg3[%c128_48, %c0_49] : memref<176x384xf32, #tpu.memory_space<vmem>>, vector<48x32xf32>
    %c128_50 = arith.constant 128 : index
    %c128_51 = arith.constant 128 : index
    %161 = vector.load %arg3[%c128_50, %c128_51] : memref<176x384xf32, #tpu.memory_space<vmem>>, vector<48x32xf32>
    %cst_52 = arith.constant dense<0.000000e+00> : vector<64x384xf32>
    %162 = tpu.matmul %157, %158, %cst_52 {dimension_numbers = #tpu.dot_dimension_numbers<[1], [0], [0], [1], [0, 0, 1, 1], [], []>} : vector<64x32xf32>, vector<32x384xf32>, vector<64x384xf32> -> vector<64x384xf32>
    %163 = vector.extract_strided_slice %157 {offsets = [0, 0], sizes = [16, 32], strides = [1, 1]} : vector<64x32xf32> to vector<16x32xf32>
    %164 = vector.extract_strided_slice %162 {offsets = [0, 0], sizes = [16, 384], strides = [1, 1]} : vector<64x384xf32> to vector<16x384xf32>
    %cst_53 = arith.constant dense<0.000000e+00> : vector<48x16xf32>
    %165 = tpu.matmul %160, %163, %cst_53 {dimension_numbers = #tpu.dot_dimension_numbers<[1], [1], [0], [0], [0, 0, 1, 0], [], []>} : vector<48x32xf32>, vector<16x32xf32>, vector<48x16xf32> -> vector<48x16xf32>
    %166 = tpu.concatenate %163, %163, %163 in 0 : vector<16x32xf32>, vector<16x32xf32>, vector<16x32xf32> -> vector<48x32xf32>
    %167 = arith.mulf %166, %161 : vector<48x32xf32>
    %cst_54 = arith.constant dense<0.000000e+00> : vector<48xf32>
    %168 = vector.multi_reduction <add>, %167, %cst_54 [1] : vector<48x32xf32> to vector<48xf32>
    %169 = vector.shape_cast %168 : vector<48xf32> to vector<48x1xf32>
    %170 = vector.broadcast %169 : vector<48x1xf32> to vector<48x16xf32>
    %171 = arith.addf %170, %165 : vector<48x16xf32>
    %cst_55 = arith.constant 0.000000e+00 : f32
    %172 = vector.broadcast %cst_55 : f32 to vector<48x16xf32>
    %173 = arith.cmpf ogt, %171, %172 : vector<48x16xf32>
    %cst_56 = arith.constant 2.000000e-01 : f32
    %174 = vector.broadcast %cst_56 : f32 to vector<48x16xf32>
    %175 = arith.mulf %174, %171 : vector<48x16xf32>
    %176 = arith.select %173, %171, %175 : vector<48x16xi1>, vector<48x16xf32>
    %c0_57 = arith.constant 0 : index
    %c0_58 = arith.constant 0 : index
    %177 = vector.load %arg2[%c0_57, %c0_58] : memref<192x16xf32, #tpu.memory_space<vmem>>, vector<48x16xf32>
    %178 = arith.addf %176, %177 : vector<48x16xf32>
    %cst_59 = arith.constant dense<0xFF800000> : vector<48xf32>
    %179 = vector.multi_reduction <maximumf>, %178, %cst_59 [1] : vector<48x16xf32> to vector<48xf32>
    %180 = vector.shape_cast %179 : vector<48xf32> to vector<48x1xf32>
    %181 = vector.broadcast %180 : vector<48x1xf32> to vector<48x16xf32>
    %182 = arith.subf %178, %181 : vector<48x16xf32>
    %183 = math.exp %182 : vector<48x16xf32>
    %cst_60 = arith.constant dense<0.000000e+00> : vector<48xf32>
    %184 = vector.multi_reduction <add>, %183, %cst_60 [1] : vector<48x16xf32> to vector<48xf32>
    %185 = vector.shape_cast %184 : vector<48xf32> to vector<48x1xf32>
    %186 = tpu.reciprocal %185 {approx = true} : vector<48x1xf32> -> vector<48x1xf32>
    %cst_61 = arith.constant 0.333333343 : f32
    %187 = vector.broadcast %cst_61 : f32 to vector<48x1xf32>
    %188 = arith.mulf %186, %187 : vector<48x1xf32>
    %189 = vector.broadcast %188 : vector<48x1xf32> to vector<48x16xf32>
    %190 = arith.mulf %183, %189 : vector<48x16xf32>
    %cst_62 = arith.constant dense<0.000000e+00> : vector<48x384xf32>
    %191 = tpu.matmul %190, %164, %cst_62 {dimension_numbers = #tpu.dot_dimension_numbers<[1], [0], [0], [1], [0, 0, 1, 1], [], []>} : vector<48x16xf32>, vector<16x384xf32>, vector<48x384xf32> -> vector<48x384xf32>
    %192 = vector.extract_strided_slice %191 {offsets = [0, 0], sizes = [16, 32], strides = [1, 1]} : vector<48x384xf32> to vector<16x32xf32>
    %193 = vector.extract_strided_slice %191 {offsets = [16, 128], sizes = [16, 32], strides = [1, 1]} : vector<48x384xf32> to vector<16x32xf32>
    %194 = arith.addf %192, %193 : vector<16x32xf32>
    %195 = vector.extract_strided_slice %191 {offsets = [32, 256], sizes = [16, 32], strides = [1, 1]} : vector<48x384xf32> to vector<16x32xf32>
    %196 = arith.addf %194, %195 : vector<16x32xf32>
    %197 = vector.broadcast %159 : vector<1x32xf32> to vector<16x32xf32>
    %198 = arith.addf %196, %197 : vector<16x32xf32>
    %199 = vector.extract_strided_slice %157 {offsets = [16, 0], sizes = [16, 32], strides = [1, 1]} : vector<64x32xf32> to vector<16x32xf32>
    %200 = vector.extract_strided_slice %162 {offsets = [16, 0], sizes = [16, 384], strides = [1, 1]} : vector<64x384xf32> to vector<16x384xf32>
    %cst_63 = arith.constant dense<0.000000e+00> : vector<48x16xf32>
    %201 = tpu.matmul %160, %199, %cst_63 {dimension_numbers = #tpu.dot_dimension_numbers<[1], [1], [0], [0], [0, 0, 1, 0], [], []>} : vector<48x32xf32>, vector<16x32xf32>, vector<48x16xf32> -> vector<48x16xf32>
    %202 = tpu.concatenate %199, %199, %199 in 0 : vector<16x32xf32>, vector<16x32xf32>, vector<16x32xf32> -> vector<48x32xf32>
    %203 = arith.mulf %202, %161 : vector<48x32xf32>
    %cst_64 = arith.constant dense<0.000000e+00> : vector<48xf32>
    %204 = vector.multi_reduction <add>, %203, %cst_64 [1] : vector<48x32xf32> to vector<48xf32>
    %205 = vector.shape_cast %204 : vector<48xf32> to vector<48x1xf32>
    %206 = vector.broadcast %205 : vector<48x1xf32> to vector<48x16xf32>
    %207 = arith.addf %206, %201 : vector<48x16xf32>
    %cst_65 = arith.constant 0.000000e+00 : f32
    %208 = vector.broadcast %cst_65 : f32 to vector<48x16xf32>
    %209 = arith.cmpf ogt, %207, %208 : vector<48x16xf32>
    %cst_66 = arith.constant 2.000000e-01 : f32
    %210 = vector.broadcast %cst_66 : f32 to vector<48x16xf32>
    %211 = arith.mulf %210, %207 : vector<48x16xf32>
    %212 = arith.select %209, %207, %211 : vector<48x16xi1>, vector<48x16xf32>
    %c48_67 = arith.constant 48 : index
    %c0_68 = arith.constant 0 : index
    %213 = vector.load %arg2[%c48_67, %c0_68] : memref<192x16xf32, #tpu.memory_space<vmem>>, vector<48x16xf32>
    %214 = arith.addf %212, %213 : vector<48x16xf32>
    %cst_69 = arith.constant dense<0xFF800000> : vector<48xf32>
    %215 = vector.multi_reduction <maximumf>, %214, %cst_69 [1] : vector<48x16xf32> to vector<48xf32>
    %216 = vector.shape_cast %215 : vector<48xf32> to vector<48x1xf32>
    %217 = vector.broadcast %216 : vector<48x1xf32> to vector<48x16xf32>
    %218 = arith.subf %214, %217 : vector<48x16xf32>
    %219 = math.exp %218 : vector<48x16xf32>
    %cst_70 = arith.constant dense<0.000000e+00> : vector<48xf32>
    %220 = vector.multi_reduction <add>, %219, %cst_70 [1] : vector<48x16xf32> to vector<48xf32>
    %221 = vector.shape_cast %220 : vector<48xf32> to vector<48x1xf32>
    %222 = tpu.reciprocal %221 {approx = true} : vector<48x1xf32> -> vector<48x1xf32>
    %cst_71 = arith.constant 0.333333343 : f32
    %223 = vector.broadcast %cst_71 : f32 to vector<48x1xf32>
    %224 = arith.mulf %222, %223 : vector<48x1xf32>
    %225 = vector.broadcast %224 : vector<48x1xf32> to vector<48x16xf32>
    %226 = arith.mulf %219, %225 : vector<48x16xf32>
    %cst_72 = arith.constant dense<0.000000e+00> : vector<48x384xf32>
    %227 = tpu.matmul %226, %200, %cst_72 {dimension_numbers = #tpu.dot_dimension_numbers<[1], [0], [0], [1], [0, 0, 1, 1], [], []>} : vector<48x16xf32>, vector<16x384xf32>, vector<48x384xf32> -> vector<48x384xf32>
    %228 = vector.extract_strided_slice %227 {offsets = [0, 0], sizes = [16, 32], strides = [1, 1]} : vector<48x384xf32> to vector<16x32xf32>
    %229 = vector.extract_strided_slice %227 {offsets = [16, 128], sizes = [16, 32], strides = [1, 1]} : vector<48x384xf32> to vector<16x32xf32>
    %230 = arith.addf %228, %229 : vector<16x32xf32>
    %231 = vector.extract_strided_slice %227 {offsets = [32, 256], sizes = [16, 32], strides = [1, 1]} : vector<48x384xf32> to vector<16x32xf32>
    %232 = arith.addf %230, %231 : vector<16x32xf32>
    %233 = vector.broadcast %159 : vector<1x32xf32> to vector<16x32xf32>
    %234 = arith.addf %232, %233 : vector<16x32xf32>
    %235 = vector.extract_strided_slice %157 {offsets = [32, 0], sizes = [16, 32], strides = [1, 1]} : vector<64x32xf32> to vector<16x32xf32>
    %236 = vector.extract_strided_slice %162 {offsets = [32, 0], sizes = [16, 384], strides = [1, 1]} : vector<64x384xf32> to vector<16x384xf32>
    %cst_73 = arith.constant dense<0.000000e+00> : vector<48x16xf32>
    %237 = tpu.matmul %160, %235, %cst_73 {dimension_numbers = #tpu.dot_dimension_numbers<[1], [1], [0], [0], [0, 0, 1, 0], [], []>} : vector<48x32xf32>, vector<16x32xf32>, vector<48x16xf32> -> vector<48x16xf32>
    %238 = tpu.concatenate %235, %235, %235 in 0 : vector<16x32xf32>, vector<16x32xf32>, vector<16x32xf32> -> vector<48x32xf32>
    %239 = arith.mulf %238, %161 : vector<48x32xf32>
    %cst_74 = arith.constant dense<0.000000e+00> : vector<48xf32>
    %240 = vector.multi_reduction <add>, %239, %cst_74 [1] : vector<48x32xf32> to vector<48xf32>
    %241 = vector.shape_cast %240 : vector<48xf32> to vector<48x1xf32>
    %242 = vector.broadcast %241 : vector<48x1xf32> to vector<48x16xf32>
    %243 = arith.addf %242, %237 : vector<48x16xf32>
    %cst_75 = arith.constant 0.000000e+00 : f32
    %244 = vector.broadcast %cst_75 : f32 to vector<48x16xf32>
    %245 = arith.cmpf ogt, %243, %244 : vector<48x16xf32>
    %cst_76 = arith.constant 2.000000e-01 : f32
    %246 = vector.broadcast %cst_76 : f32 to vector<48x16xf32>
    %247 = arith.mulf %246, %243 : vector<48x16xf32>
    %248 = arith.select %245, %243, %247 : vector<48x16xi1>, vector<48x16xf32>
    %c96_77 = arith.constant 96 : index
    %c0_78 = arith.constant 0 : index
    %249 = vector.load %arg2[%c96_77, %c0_78] : memref<192x16xf32, #tpu.memory_space<vmem>>, vector<48x16xf32>
    %250 = arith.addf %248, %249 : vector<48x16xf32>
    %cst_79 = arith.constant dense<0xFF800000> : vector<48xf32>
    %251 = vector.multi_reduction <maximumf>, %250, %cst_79 [1] : vector<48x16xf32> to vector<48xf32>
    %252 = vector.shape_cast %251 : vector<48xf32> to vector<48x1xf32>
    %253 = vector.broadcast %252 : vector<48x1xf32> to vector<48x16xf32>
    %254 = arith.subf %250, %253 : vector<48x16xf32>
    %255 = math.exp %254 : vector<48x16xf32>
    %cst_80 = arith.constant dense<0.000000e+00> : vector<48xf32>
    %256 = vector.multi_reduction <add>, %255, %cst_80 [1] : vector<48x16xf32> to vector<48xf32>
    %257 = vector.shape_cast %256 : vector<48xf32> to vector<48x1xf32>
    %258 = tpu.reciprocal %257 {approx = true} : vector<48x1xf32> -> vector<48x1xf32>
    %cst_81 = arith.constant 0.333333343 : f32
    %259 = vector.broadcast %cst_81 : f32 to vector<48x1xf32>
    %260 = arith.mulf %258, %259 : vector<48x1xf32>
    %261 = vector.broadcast %260 : vector<48x1xf32> to vector<48x16xf32>
    %262 = arith.mulf %255, %261 : vector<48x16xf32>
    %cst_82 = arith.constant dense<0.000000e+00> : vector<48x384xf32>
    %263 = tpu.matmul %262, %236, %cst_82 {dimension_numbers = #tpu.dot_dimension_numbers<[1], [0], [0], [1], [0, 0, 1, 1], [], []>} : vector<48x16xf32>, vector<16x384xf32>, vector<48x384xf32> -> vector<48x384xf32>
    %264 = vector.extract_strided_slice %263 {offsets = [0, 0], sizes = [16, 32], strides = [1, 1]} : vector<48x384xf32> to vector<16x32xf32>
    %265 = vector.extract_strided_slice %263 {offsets = [16, 128], sizes = [16, 32], strides = [1, 1]} : vector<48x384xf32> to vector<16x32xf32>
    %266 = arith.addf %264, %265 : vector<16x32xf32>
    %267 = vector.extract_strided_slice %263 {offsets = [32, 256], sizes = [16, 32], strides = [1, 1]} : vector<48x384xf32> to vector<16x32xf32>
    %268 = arith.addf %266, %267 : vector<16x32xf32>
    %269 = vector.broadcast %159 : vector<1x32xf32> to vector<16x32xf32>
    %270 = arith.addf %268, %269 : vector<16x32xf32>
    %271 = vector.extract_strided_slice %157 {offsets = [48, 0], sizes = [16, 32], strides = [1, 1]} : vector<64x32xf32> to vector<16x32xf32>
    %272 = vector.extract_strided_slice %162 {offsets = [48, 0], sizes = [16, 384], strides = [1, 1]} : vector<64x384xf32> to vector<16x384xf32>
    %cst_83 = arith.constant dense<0.000000e+00> : vector<48x16xf32>
    %273 = tpu.matmul %160, %271, %cst_83 {dimension_numbers = #tpu.dot_dimension_numbers<[1], [1], [0], [0], [0, 0, 1, 0], [], []>} : vector<48x32xf32>, vector<16x32xf32>, vector<48x16xf32> -> vector<48x16xf32>
    %274 = tpu.concatenate %271, %271, %271 in 0 : vector<16x32xf32>, vector<16x32xf32>, vector<16x32xf32> -> vector<48x32xf32>
    %275 = arith.mulf %274, %161 : vector<48x32xf32>
    %cst_84 = arith.constant dense<0.000000e+00> : vector<48xf32>
    %276 = vector.multi_reduction <add>, %275, %cst_84 [1] : vector<48x32xf32> to vector<48xf32>
    %277 = vector.shape_cast %276 : vector<48xf32> to vector<48x1xf32>
    %278 = vector.broadcast %277 : vector<48x1xf32> to vector<48x16xf32>
    %279 = arith.addf %278, %273 : vector<48x16xf32>
    %cst_85 = arith.constant 0.000000e+00 : f32
    %280 = vector.broadcast %cst_85 : f32 to vector<48x16xf32>
    %281 = arith.cmpf ogt, %279, %280 : vector<48x16xf32>
    %cst_86 = arith.constant 2.000000e-01 : f32
    %282 = vector.broadcast %cst_86 : f32 to vector<48x16xf32>
    %283 = arith.mulf %282, %279 : vector<48x16xf32>
    %284 = arith.select %281, %279, %283 : vector<48x16xi1>, vector<48x16xf32>
    %c144_87 = arith.constant 144 : index
    %c0_88 = arith.constant 0 : index
    %285 = vector.load %arg2[%c144_87, %c0_88] : memref<192x16xf32, #tpu.memory_space<vmem>>, vector<48x16xf32>
    %286 = arith.addf %284, %285 : vector<48x16xf32>
    %cst_89 = arith.constant dense<0xFF800000> : vector<48xf32>
    %287 = vector.multi_reduction <maximumf>, %286, %cst_89 [1] : vector<48x16xf32> to vector<48xf32>
    %288 = vector.shape_cast %287 : vector<48xf32> to vector<48x1xf32>
    %289 = vector.broadcast %288 : vector<48x1xf32> to vector<48x16xf32>
    %290 = arith.subf %286, %289 : vector<48x16xf32>
    %291 = math.exp %290 : vector<48x16xf32>
    %cst_90 = arith.constant dense<0.000000e+00> : vector<48xf32>
    %292 = vector.multi_reduction <add>, %291, %cst_90 [1] : vector<48x16xf32> to vector<48xf32>
    %293 = vector.shape_cast %292 : vector<48xf32> to vector<48x1xf32>
    %294 = tpu.reciprocal %293 {approx = true} : vector<48x1xf32> -> vector<48x1xf32>
    %cst_91 = arith.constant 0.333333343 : f32
    %295 = vector.broadcast %cst_91 : f32 to vector<48x1xf32>
    %296 = arith.mulf %294, %295 : vector<48x1xf32>
    %297 = vector.broadcast %296 : vector<48x1xf32> to vector<48x16xf32>
    %298 = arith.mulf %291, %297 : vector<48x16xf32>
    %cst_92 = arith.constant dense<0.000000e+00> : vector<48x384xf32>
    %299 = tpu.matmul %298, %272, %cst_92 {dimension_numbers = #tpu.dot_dimension_numbers<[1], [0], [0], [1], [0, 0, 1, 1], [], []>} : vector<48x16xf32>, vector<16x384xf32>, vector<48x384xf32> -> vector<48x384xf32>
    %300 = vector.extract_strided_slice %299 {offsets = [0, 0], sizes = [16, 32], strides = [1, 1]} : vector<48x384xf32> to vector<16x32xf32>
    %301 = vector.extract_strided_slice %299 {offsets = [16, 128], sizes = [16, 32], strides = [1, 1]} : vector<48x384xf32> to vector<16x32xf32>
    %302 = arith.addf %300, %301 : vector<16x32xf32>
    %303 = vector.extract_strided_slice %299 {offsets = [32, 256], sizes = [16, 32], strides = [1, 1]} : vector<48x384xf32> to vector<16x32xf32>
    %304 = arith.addf %302, %303 : vector<16x32xf32>
    %305 = vector.broadcast %159 : vector<1x32xf32> to vector<16x32xf32>
    %306 = arith.addf %304, %305 : vector<16x32xf32>
    %307 = tpu.concatenate %198, %234, %270, %306 in 0 : vector<16x32xf32>, vector<16x32xf32>, vector<16x32xf32>, vector<16x32xf32> -> vector<64x32xf32>
    %308 = vector.extract_strided_slice %307 {offsets = [0, 0], sizes = [16, 32], strides = [1, 1]} : vector<64x32xf32> to vector<16x32xf32>
    %309 = vector.extract_strided_slice %307 {offsets = [16, 0], sizes = [16, 32], strides = [1, 1]} : vector<64x32xf32> to vector<16x32xf32>
    %310 = vector.extract_strided_slice %307 {offsets = [32, 0], sizes = [16, 32], strides = [1, 1]} : vector<64x32xf32> to vector<16x32xf32>
    %311 = vector.extract_strided_slice %307 {offsets = [48, 0], sizes = [16, 32], strides = [1, 1]} : vector<64x32xf32> to vector<16x32xf32>
    %312 = tpu.concatenate %308, %309, %310, %311 in 1 : vector<16x32xf32>, vector<16x32xf32>, vector<16x32xf32>, vector<16x32xf32> -> vector<16x128xf32>
    %c0_93 = arith.constant 0 : index
    %c0_94 = arith.constant 0 : index
    %313 = vector.load %arg4[%c0_93, %c0_94] : memref<16x128xf32, #tpu.memory_space<vmem>>, vector<16x128xf32>
    tpu.vector_store %arg4[%c0_93, %c0_94], %312 {strides = array<i32>} : memref<16x128xf32, #tpu.memory_space<vmem>>, vector<16x128xf32>,
    return
  }
  func.func @transform_0(%arg0: i32) -> (i32, i32) {
    %c0_i32 = arith.constant 0 : i32
    %c0_i32_0 = arith.constant 0 : i32
    return %arg0, %c0_i32 : i32, i32
  }
  func.func @transform_1(%arg0: i32) -> (i32, i32) {
    %c0_i32 = arith.constant 0 : i32
    %c0_i32_0 = arith.constant 0 : i32
    return %arg0, %c0_i32 : i32, i32
  }
  func.func @transform_2(%arg0: i32) -> (i32, i32) {
    %c0_i32 = arith.constant 0 : i32
    %c0_i32_0 = arith.constant 0 : i32
    %c0_i32_1 = arith.constant 0 : i32
    return %c0_i32, %c0_i32_0 : i32, i32
  }
  func.func @transform_3(%arg0: i32) -> (i32, i32) {
    %c0_i32 = arith.constant 0 : i32
    %c0_i32_0 = arith.constant 0 : i32
    return %c0_i32, %arg0 : i32, i32
  }
}

</mosaic_0001>

<llo_original>
// kernel: tpu_custom_call.1
$region0: #{tpu_custom_call.1}
  #allocation0 [shape = 'u32[]', space=smem, size = 0x4, offset = 0x4, fixed_abs, tag = 'smem constant byte address 0x4 - core index']
  #allocation1 [shape = 'u32[144,128]{1,0:T(1,128)}', space=vmem, size = 0x12000, scoped, tag = 'internal scratch']
  %s0 = inlined_call_operand.vmem [shape: f32[128,32], index: 0, kind: input, shape index: {}]
  %s1 = inlined_call_operand.vmem [shape: f32[384,16], index: 1, kind: input, shape index: {}]
  %s2 = inlined_call_operand.vmem [shape: f32[176,384], index: 2, kind: input, shape index: {}]
  %s3 = inlined_call_operand.hbm [shape: f32[16,256], index: 3, kind: output, shape index: {}]
  %s4 = sld [smem:[#allocation0]]
  $region45: #{tpu_custom_call.1} parent=0
    _
  %s6 = ssub.s32 1, %s4
  %s7 = scalar_select 0, %s6, %s4
  $region1: #{tpu_custom_call.1} parent=0
    #allocation2 [shape = 'u8[16384]{0}', space=vmem, size = 0x4000, scoped, tag = 'output window, operand 0']
    #allocation3 [shape = 's32[2]{0}', space=sflag, size = 0x8, scoped, tag = 'scoped memory for tpu_custom_call.1']
    %8 = vsyncpa [#allocation3], 0
    %s9 = scalar_lea.sflag [#allocation3], 1
    %10 = vsyncpa %s9, 0
    loop: start=0, step=1, limit=4
    $region2: #{tpu_custom_call.1} parent=1 // loop_pre_header
      _
    $region3: #{tpu_custom_call.1} parent=1 // loop_header
      %s12 = sphi 0, %s16
      %p13 = scmp.ge.s32.totalorder %s12, 4
      %s22 = sphi 0, %s24
      %s25 = sphi 0, %s22
      %s26 = sphi 0, %s25
      %s42 = sphi 0, %s26
      %s48 = sphi 0, %s50
      %s51 = sphi 0, %s48
      %s52 = sphi 0, %s51
      %s68 = sphi 0, %s52
      %s72 = sphi 0, %s72
      %s74 = sphi 0, %s72
      %s75 = sphi 0, %s74
      %s89 = sphi 0, %s75
      %s95 = sphi 0, %s97
      %s98 = sphi 0, %s95
      %s99 = sphi 0, %s98
      %s115 = sphi 0, %s99
    $region4: #{tpu_custom_call.1} parent=1 // loop_header_branch
      %15 = sbr.rel (%p13) target = $region8
    $region5: #{tpu_custom_call.1} parent=1 // loop_body
      %s17 = ssub.s32 %s12, 1
      %s18 = ssub.s32 %s12, 2
      %s19 = sadd.s32 %s12, 1
      %s20 = ssub.s32 %s12, %s19
      %p21 = scmp.eq.s32.totalorder %s20, 0
      %s23 = sadd.s32 %s22, 1
      %s24 = scalar_select %p21, %s22, %s23
      %p27 = pneg %p21
      %p28 = scmp.eq.s32.totalorder %s12, 1
      %p29 = por %p27, %p28
      %p30 = scmp.ne.s32.totalorder %s22, %s25
      %p31 = scmp.eq.s32.totalorder %s12, 0
      %p32 = por %p30, %p31
      %p33 = scmp.ne.s32.totalorder %s22, %s25
      %p34 = scmp.eq.s32.totalorder %s17, 1
      %p35 = por %p33, %p34
      %p36 = scmp.ne.s32.totalorder %s25, %s26
      %p37 = scmp.eq.s32.totalorder %s17, 0
      %p38 = por %p36, %p37
      %p39 = scmp.ne.s32.totalorder %s25, %s26
      %p40 = scmp.eq.s32.totalorder %s18, 1
      %p41 = por %p39, %p40
      %p43 = scmp.ne.s32.totalorder %s26, %s42
      %p44 = scmp.eq.s32.totalorder %s18, 0
      %p45 = por %p43, %p44
      %s46 = ssub.s32 %s12, %s19
      %p47 = scmp.eq.s32.totalorder %s46, 0
      %s49 = sadd.s32 %s48, 1
      %s50 = scalar_select %p47, %s48, %s49
      %p53 = pneg %p47
      %p54 = scmp.eq.s32.totalorder %s12, 1
      %p55 = por %p53, %p54
      %p56 = scmp.ne.s32.totalorder %s48, %s51
      %p57 = scmp.eq.s32.totalorder %s12, 0
      %p58 = por %p56, %p57
      %p59 = scmp.ne.s32.totalorder %s48, %s51
      %p60 = scmp.eq.s32.totalorder %s17, 1
      %p61 = por %p59, %p60
      %p62 = scmp.ne.s32.totalorder %s51, %s52
      %p63 = scmp.eq.s32.totalorder %s17, 0
      %p64 = por %p62, %p63
      %p65 = scmp.ne.s32.totalorder %s51, %s52
      %p66 = scmp.eq.s32.totalorder %s18, 1
      %p67 = por %p65, %p66
      %p69 = scmp.ne.s32.totalorder %s52, %s68
      %p70 = scmp.eq.s32.totalorder %s18, 0
      %p71 = por %p69, %p70
      %s73 = sadd.s32 %s72, 1
      %p76 = scmp.eq.s32.totalorder %s12, 1
      %p77 = scmp.ne.s32.totalorder %s72, %s74
      %p78 = scmp.eq.s32.totalorder %s12, 0
      %p79 = por %p77, %p78
      %p80 = scmp.ne.s32.totalorder %s72, %s74
      %p81 = scmp.eq.s32.totalorder %s17, 1
      %p82 = por %p80, %p81
      %p83 = scmp.ne.s32.totalorder %s74, %s75
      %p84 = scmp.eq.s32.totalorder %s17, 0
      %p85 = por %p83, %p84
      %p86 = scmp.ne.s32.totalorder %s74, %s75
      %p87 = scmp.eq.s32.totalorder %s18, 1
      %p88 = por %p86, %p87
      %p90 = scmp.ne.s32.totalorder %s75, %s89
      %p91 = scmp.eq.s32.totalorder %s18, 0
      %p92 = por %p90, %p91
      %s93 = ssub.s32 %s12, %s19
      %p94 = scmp.eq.s32.totalorder %s93, 0
      %s96 = sadd.s32 %s95, 1
      %s97 = scalar_select %p94, %s95, %s96
      %p100 = pneg %p94
      %p101 = scmp.eq.s32.totalorder %s12, 1
      %p102 = por %p100, %p101
      %p103 = scmp.ne.s32.totalorder %s95, %s98
      %p104 = scmp.eq.s32.totalorder %s12, 0
      %p105 = por %p103, %p104
      %p106 = scmp.ne.s32.totalorder %s95, %s98
      %p107 = scmp.eq.s32.totalorder %s17, 1
      %p108 = por %p106, %p107
      %p109 = scmp.ne.s32.totalorder %s98, %s99
      %p110 = scmp.eq.s32.totalorder %s17, 0
      %p111 = por %p109, %p110
      %p112 = scmp.ne.s32.totalorder %s98, %s99
      %p113 = scmp.eq.s32.totalorder %s18, 1
      %p114 = por %p112, %p113
      %p116 = scmp.ne.s32.totalorder %s99, %s115
      %p117 = scmp.eq.s32.totalorder %s18, 0
      %p118 = por %p116, %p117
      %p119 = scmp.le.s32.totalorder 1, %s12
      %p120 = scmp.lt.s32.totalorder %s12, 3
      %p121 = pnand %p119, %p120
      %p122 = pneg %p121
      // Predicated region
      $region9: #{tpu_custom_call.1} parent=5 // pred_check
        _
      $region10: #{tpu_custom_call.1} parent=5 // pred_check_branch
        %124 = sbr.rel (%p121) target = $region12
      $region11: #{tpu_custom_call.1} parent=5 // pred_region
        %s125 = ssub.s32 %s12, 1
        // Predicated region
        $region13: #{tpu_custom_call.1} parent=11 // pred_check
          %p126 = pneg %p85
        $region14: #{tpu_custom_call.1} parent=11 // pred_check_branch
          %128 = sbr.rel (%p126) target = $region16
        $region15: #{tpu_custom_call.1} parent=11 // pred_region
          _
        $region16: #{tpu_custom_call.1} parent=11 // pred_fallthru
          _
      $region12: #{tpu_custom_call.1} parent=5 // pred_fallthru
        _
      %p129 = scmp.lt.s32.totalorder %s12, 2
      // Predicated region
      $region17: #{tpu_custom_call.1} parent=5 // pred_check
        %p130 = pneg %p129
      $region18: #{tpu_custom_call.1} parent=5 // pred_check_branch
        %132 = sbr.rel (%p130) target = $region20
      $region19: #{tpu_custom_call.1} parent=5 // pred_region
        // Predicated region
        $region21: #{tpu_custom_call.1} parent=19 // pred_check
          %p133 = pneg %p32
        $region22: #{tpu_custom_call.1} parent=19 // pred_check_branch
          %135 = sbr.rel (%p133) target = $region24
        $region23: #{tpu_custom_call.1} parent=19 // pred_region
          %s136 = smul.u32 8, %s12
          %p137 = scmp.lt.s32.totalorder %s136, 15
          %s138 = scalar_select %p137, %s136, 15
          %s139 = smul.addr %s138, 8
          %s140 = scalar_lea.vmem %s0, %s139
          %s141 = smul.u32 8, %s12
        $region24: #{tpu_custom_call.1} parent=19 // pred_fallthru
          _
        // Predicated region
        $region25: #{tpu_custom_call.1} parent=19 // pred_check
          %p142 = pneg %p58
        $region26: #{tpu_custom_call.1} parent=19 // pred_check_branch
          %144 = sbr.rel (%p142) target = $region28
        $region27: #{tpu_custom_call.1} parent=19 // pred_region
          %s145 = smul.u32 24, %s12
          %p146 = scmp.lt.s32.totalorder %s145, 47
          %s147 = scalar_select %p146, %s145, 47
          %s148 = smul.addr %s147, 8
          %s149 = scalar_lea.vmem %s1, %s148
          %s150 = smul.u32 24, %s12
        $region28: #{tpu_custom_call.1} parent=19 // pred_fallthru
          _
      $region20: #{tpu_custom_call.1} parent=5 // pred_fallthru
        _
      %p151 = scmp.le.s32.totalorder 1, %s12
      %p152 = scmp.lt.s32.totalorder %s12, 3
      %p153 = pnand %p151, %p152
      %p154 = pneg %p153
      // Predicated region
      $region29: #{tpu_custom_call.1} parent=5 // pred_check
        _
      $region30: #{tpu_custom_call.1} parent=5 // pred_check_branch
        %156 = sbr.rel (%p153) target = $region32
      $region31: #{tpu_custom_call.1} parent=5 // pred_region
        %s157 = ssub.s32 %s12, 1
        %s158 = smul.u32 8, %s17
        %p159 = scmp.lt.s32.totalorder %s158, 15
        %s160 = scalar_select %p159, %s158, 15
        %s161 = smul.addr %s160, 8
        %s162 = scalar_lea.vmem %s0, %s161
        %p163 = pneg %p38
        %p164 = pneg %p35
        %s165 = smul.u32 24, %s17
        %p166 = scmp.lt.s32.totalorder %s165, 47
        %s167 = scalar_select %p166, %s165, 47
        %s168 = smul.addr %s167, 8
        %s169 = scalar_lea.vmem %s1, %s168
        %p170 = pneg %p64
        %p171 = pneg %p61
        %p172 = pneg %p85
        %p173 = pneg %p82
        %p174 = pneg %p111
        %p175 = pneg %p108
        %s176 = sand.u32 %s98, 1
        %s177 = scalar_lea.sflag [#allocation3], %s176
        %s178 = sand.u32 %s98, 1
        %s179 = smul.addr %s178, 16
        %s180 = scalar_lea.vmem [#allocation2], %s179
        %s181 = smul.u32 8, %s17
        %p182 = scmp.lt.s32.totalorder %s181, 15
        %s183 = scalar_select %p182, %s181, 15
        %s184 = smul.addr %s183, 8
        %s185 = scalar_lea.vmem %s0, %s184
        %s186 = smul.u32 8, %s17
        %s187 = smul.u32 24, %s17
        %p188 = scmp.lt.s32.totalorder %s187, 47
        %s189 = scalar_select %p188, %s187, 47
        %s190 = smul.addr %s189, 8
        %s191 = scalar_lea.vmem %s1, %s190
        %s192 = smul.u32 24, %s17
        %v193 = vld [vmem:[%s185] sm:$0xff]
        %v194 = vld [vmem:[%s185 + $0x8] sm:$0xff]
        %v195 = vld [vmem:[%s185 + $0x10] sm:$0xff]
        %v196 = vld [vmem:[%s185 + $0x18] sm:$0xff]
        %v197 = vld [vmem:[%s185 + $0x20] sm:$0xff]
        %v198 = vld [vmem:[%s185 + $0x28] sm:$0xff]
        %v199 = vld [vmem:[%s185 + $0x30] sm:$0xff]
        %v200 = vld [vmem:[%s185 + $0x38] sm:$0xff]
        %v201 = vld [vmem:[%s2] sm:$0xff]
        %v202 = vld [vmem:[%s2 + $0x8] sm:$0xff]
        %v203 = vld [vmem:[%s2 + $0x10] sm:$0xff]
        %v204 = vld [vmem:[%s2 + $0x18] sm:$0xff]
        %v205 = vld [vmem:[%s2 + $0x20] sm:$0xff]
        %v206 = vld [vmem:[%s2 + $0x28] sm:$0xff]
        %v207 = vld [vmem:[%s2 + $0x30] sm:$0xff]
        %v208 = vld [vmem:[%s2 + $0x38] sm:$0xff]
        %v209 = vld [vmem:[%s2 + $0x40] sm:$0xff]
        %v210 = vld [vmem:[%s2 + $0x48] sm:$0xff]
        %v211 = vld [vmem:[%s2 + $0x50] sm:$0xff]
        %v212 = vld [vmem:[%s2 + $0x58] sm:$0xff]
        %v213 = vld [vmem:[%s2 + $0x60] ss:$0 sm:$0xff]
        %v214 = vld [vmem:[%s2 + $0x78] sm:$0xff]
        %v215 = vld [vmem:[%s2 + $0x90] sm:$0xff]
        %v216 = vld [vmem:[%s2 + $0xa8] sm:$0xff]
        %v217 = vld [vmem:[%s2 + $0xc0] sm:$0xff]
        %v218 = vld [vmem:[%s2 + $0xd8] sm:$0xff]
        %v219 = vld [vmem:[%s2 + $0xf0] sm:$0xff]
        %v220 = vld [vmem:[%s2 + $0x80] sm:$0xff]
        %v221 = vld [vmem:[%s2 + $0x98] sm:$0xff]
        %v222 = vld [vmem:[%s2 + $0xb0] sm:$0xff]
        %v223 = vld [vmem:[%s2 + $0xc8] sm:$0xff]
        %v224 = vld [vmem:[%s2 + $0xe0] sm:$0xff]
        %v225 = vld [vmem:[%s2 + $0xf8] sm:$0xff]
        %vm226 = vcmask 261120
        %v228 = vsel %vm226, %v193, 0
        %v231 = vsel %vm226, %v194, 0
        %v234 = vsel %vm226, %v195, 0
        %v237 = vsel %vm226, %v196, 0
        %v240 = vsel %vm226, %v197, 0
        %v243 = vsel %vm226, %v198, 0
        %v246 = vsel %vm226, %v199, 0
        %v249 = vsel %vm226, %v200, 0
        %251 = vmatprep.subr.mxu0 %v202
        %252 = vmatpush1.msra.mxu0 %v201
        %253 = vmatprep.subr.mxu0 %v205
        %254 = vmatpush1.msra.mxu0 %v204
        %255 = vmatprep.subr.mxu0 %v208
        %256 = vmatpush1.msra.mxu0 %v207
        %257 = vmatprep.subr.mxu0 %v211
        %258 = vmatpush1.msra.mxu0 %v210
        %259 = vmatprep.subr.mxu0 0.0
        %260 = vmatpush1.msra.mxu0 0.0
        %261 = vmatprep.subr.mxu0 0.0
        %262 = vmatpush1.msra.mxu0 0.0
        %263 = vmatprep.subr.mxu0 0.0
        %264 = vmatpush1.msra.mxu0 0.0
        %265 = vmatprep.subr.mxu0 0.0
        %266 = vmatpush1.msra.mxu0 0.0
        %267 = vmatprep.subr.mxu0 0.0
        %268 = vmatpush1.msra.mxu0 0.0
        %269 = vmatprep.subr.mxu0 0.0
        %270 = vmatpush1.msra.mxu0 0.0
        %271 = vmatprep.subr.mxu0 0.0
        %272 = vmatpush1.msra.mxu0 0.0
        %273 = vmatprep.subr.mxu0 0.0
        %274 = vmatpush1.msra.mxu0 0.0
        %275 = vmatprep.subr.mxu0 0.0
        %276 = vmatpush1.msra.mxu0 0.0
        %277 = vmatprep.subr.mxu0 0.0
        %278 = vmatpush1.msra.mxu0 0.0
        %279 = vmatprep.subr.mxu0 0.0
        %280 = vmatpush1.msra.mxu0 0.0
        %281 = vmatprep.subr.mxu0 0.0
        %282 = vmatpush1.msra.mxu0 0.0
        %283 = vmatprep.subr.mxu0 0.0
        %284 = vmatpush1.msra.mxu0 0.0
        %285 = vmatprep.subr.mxu0 0.0
        %286 = vmatpush1.msra.mxu0 0.0
        %287 = vmatprep.subr.mxu0 0.0
        %288 = vmatpush1.msra.mxu0 0.0
        %289 = vmatprep.subr.mxu0 0.0
        %290 = vmatpush1.msra.mxu0 0.0
        %291 = vmatprep.subr.mxu0 0.0
        %292 = vmatpush1.msra.mxu0 0.0
        %293 = vmatprep.subr.mxu0 0.0
        %294 = vmatpush1.msra.mxu0 0.0
        %295 = vmatprep.subr.mxu0 0.0
        %296 = vmatpush1.msra.mxu0 0.0
        %297 = vmatprep.subr.mxu0 0.0
        %298 = vmatpush1.msra.mxu0 0.0
        %299 = vmatprep.subr.mxu0 0.0
        %300 = vmatpush1.msra.mxu0 0.0
        %301 = vmatprep.subr.mxu0 0.0
        %302 = vmatpush1.msra.mxu0 0.0
        %303 = vmatprep.subr.mxu0 0.0
        %304 = vmatpush1.msra.mxu0 0.0
        %305 = vmatprep.subr.mxu0 0.0
        %306 = vmatpush1.msra.mxu0 0.0
        %307 = vmatprep.subr.mxu0 0.0
        %308 = vmatpush1.msra.mxu0 0.0
        %309 = vmatprep.subr.mxu0 0.0
        %310 = vmatpush1.msra.mxu0 0.0
        %311 = vmatprep.subr.mxu0 0.0
        %312 = vmatpush1.msra.mxu0 0.0
        %313 = vmatprep.subr.mxu0 0.0
        %314 = vmatpush1.msra.mxu0 0.0
        %315 = vmatprep.mubr.f32.mxu0 0.0
        %316 = vmatmul.mubr.f32.gmra.mrb[0].mxu0 %v228
        %v317 = vpop.f32.mrb[0].mxu0
        %v318 = vadd.f32 0.0, %v317
        %v319 = vpop.f32.mrb[0].mxu0
        %v320 = vadd.f32 0.0, %v319
        %321 = vmatprep.mubr.f32.mxu0 0.0
        %322 = vmatmul.mubr.f32.gmra.mrb[0].mxu0 %v231
        %v323 = vpop.f32.mrb[0].mxu0
        %v324 = vadd.f32 0.0, %v323
        %v325 = vpop.f32.mrb[0].mxu0
        %v326 = vadd.f32 0.0, %v325
        %327 = vmatprep.mubr.f32.mxu0 0.0
        %328 = vmatmul.mubr.f32.gmra.mrb[0].mxu0 %v234
        %v329 = vpop.f32.mrb[0].mxu0
        %v330 = vadd.f32 0.0, %v329
        %v331 = vpop.f32.mrb[0].mxu0
        %v332 = vadd.f32 0.0, %v331
        %333 = vmatprep.mubr.f32.mxu0 0.0
        %334 = vmatmul.mubr.f32.gmra.mrb[0].mxu0 %v237
        %v335 = vpop.f32.mrb[0].mxu0
        %v336 = vadd.f32 0.0, %v335
        %v337 = vpop.f32.mrb[0].mxu0
        %v338 = vadd.f32 0.0, %v337
        %339 = vmatprep.mubr.f32.mxu0 0.0
        %340 = vmatmul.mubr.f32.gmra.mrb[0].mxu0 %v240
        %v341 = vpop.f32.mrb[0].mxu0
        %v342 = vadd.f32 0.0, %v341
        %v343 = vpop.f32.mrb[0].mxu0
        %v344 = vadd.f32 0.0, %v343
        %345 = vmatprep.mubr.f32.mxu0 0.0
        %346 = vmatmul.mubr.f32.gmra.mrb[0].mxu0 %v243
        %v347 = vpop.f32.mrb[0].mxu0
        %v348 = vadd.f32 0.0, %v347
        %v349 = vpop.f32.mrb[0].mxu0
        %v350 = vadd.f32 0.0, %v349
        %351 = vmatprep.mubr.f32.mxu0 0.0
        %352 = vmatmul.mubr.f32.gmra.mrb[0].mxu0 %v246
        %v353 = vpop.f32.mrb[0].mxu0
        %v354 = vadd.f32 0.0, %v353
        %v355 = vpop.f32.mrb[0].mxu0
        %v356 = vadd.f32 0.0, %v355
        %357 = vmatprep.mubr.f32.mxu0 0.0
        %358 = vmatmul.mubr.f32.gmra.mrb[0].mxu0 %v249
        %v359 = vpop.f32.mrb[0].mxu0
        %v360 = vadd.f32 0.0, %v359
        %v361 = vpop.f32.mrb[0].mxu0
        %v362 = vadd.f32 0.0, %v361
        %363 = vdwg.mxu0
        %364 = vmatprep.subr.mxu0 0.0
        %365 = vmatpush1.msra.mxu0 %v203
        %366 = vmatprep.subr.mxu0 0.0
        %367 = vmatpush1.msra.mxu0 %v206
        %368 = vmatprep.subr.mxu0 0.0
        %369 = vmatpush1.msra.mxu0 %v209
        %370 = vmatprep.subr.mxu0 0.0
        %371 = vmatpush1.msra.mxu0 %v212
        %372 = vmatprep.subr.mxu0 0.0
        %373 = vmatpush1.msra.mxu0 0.0
        %374 = vmatprep.subr.mxu0 0.0
        %375 = vmatpush1.msra.mxu0 0.0
        %376 = vmatprep.subr.mxu0 0.0
        %377 = vmatpush1.msra.mxu0 0.0
        %378 = vmatprep.subr.mxu0 0.0
        %379 = vmatpush1.msra.mxu0 0.0
        %380 = vmatprep.subr.mxu0 0.0
        %381 = vmatpush1.msra.mxu0 0.0
        %382 = vmatprep.subr.mxu0 0.0
        %383 = vmatpush1.msra.mxu0 0.0
        %384 = vmatprep.subr.mxu0 0.0
        %385 = vmatpush1.msra.mxu0 0.0
        %386 = vmatprep.subr.mxu0 0.0
        %387 = vmatpush1.msra.mxu0 0.0
        %388 = vmatprep.subr.mxu0 0.0
        %389 = vmatpush1.msra.mxu0 0.0
        %390 = vmatprep.subr.mxu0 0.0
        %391 = vmatpush1.msra.mxu0 0.0
        %392 = vmatprep.subr.mxu0 0.0
        %393 = vmatpush1.msra.mxu0 0.0
        %394 = vmatprep.subr.mxu0 0.0
        %395 = vmatpush1.msra.mxu0 0.0
        %396 = vmatprep.subr.mxu0 0.0
        %397 = vmatpush1.msra.mxu0 0.0
        %398 = vmatprep.subr.mxu0 0.0
        %399 = vmatpush1.msra.mxu0 0.0
        %400 = vmatprep.subr.mxu0 0.0
        %401 = vmatpush1.msra.mxu0 0.0
        %402 = vmatprep.subr.mxu0 0.0
        %403 = vmatpush1.msra.mxu0 0.0
        %404 = vmatprep.subr.mxu0 0.0
        %405 = vmatpush1.msra.mxu0 0.0
        %406 = vmatprep.subr.mxu0 0.0
        %407 = vmatpush1.msra.mxu0 0.0
        %408 = vmatprep.subr.mxu0 0.0
        %409 = vmatpush1.msra.mxu0 0.0
        %410 = vmatprep.subr.mxu0 0.0
        %411 = vmatpush1.msra.mxu0 0.0
        %412 = vmatprep.subr.mxu0 0.0
        %413 = vmatpush1.msra.mxu0 0.0
        %414 = vmatprep.subr.mxu0 0.0
        %415 = vmatpush1.msra.mxu0 0.0
        %416 = vmatprep.subr.mxu0 0.0
        %417 = vmatpush1.msra.mxu0 0.0
        %418 = vmatprep.subr.mxu0 0.0
        %419 = vmatpush1.msra.mxu0 0.0
        %420 = vmatprep.subr.mxu0 0.0
        %421 = vmatpush1.msra.mxu0 0.0
        %422 = vmatprep.subr.mxu0 0.0
        %423 = vmatpush1.msra.mxu0 0.0
        %424 = vmatprep.subr.mxu0 0.0
        %425 = vmatpush1.msra.mxu0 0.0
        %426 = vmatprep.subr.mxu0 0.0
        %427 = vmatpush1.msra.mxu0 0.0
        %428 = vmatprep.mubr.f32.mxu0 0.0
        %429 = vmatmul.mubr.f32.gmra.mrb[0].mxu0 %v228
        %v430 = vpop.f32.mrb[0].mxu0
        %v431 = vadd.f32 0.0, %v430
        %v432 = vpop.f32.mrb[0].mxu0
        %433 = vmatprep.mubr.f32.mxu0 0.0
        %434 = vmatmul.mubr.f32.gmra.mrb[0].mxu0 %v231
        %v435 = vpop.f32.mrb[0].mxu0
        %v436 = vadd.f32 0.0, %v435
        %v437 = vpop.f32.mrb[0].mxu0
        %438 = vmatprep.mubr.f32.mxu0 0.0
        %439 = vmatmul.mubr.f32.gmra.mrb[0].mxu0 %v234
        %v440 = vpop.f32.mrb[0].mxu0
        %v441 = vadd.f32 0.0, %v440
        %v442 = vpop.f32.mrb[0].mxu0
        %443 = vmatprep.mubr.f32.mxu0 0.0
        %444 = vmatmul.mubr.f32.gmra.mrb[0].mxu0 %v237
        %v445 = vpop.f32.mrb[0].mxu0
        %v446 = vadd.f32 0.0, %v445
        %v447 = vpop.f32.mrb[0].mxu0
        %448 = vmatprep.mubr.f32.mxu0 0.0
        %449 = vmatmul.mubr.f32.gmra.mrb[0].mxu0 %v240
        %v450 = vpop.f32.mrb[0].mxu0
        %v451 = vadd.f32 0.0, %v450
        %v452 = vpop.f32.mrb[0].mxu0
        %453 = vmatprep.mubr.f32.mxu0 0.0
        %454 = vmatmul.mubr.f32.gmra.mrb[0].mxu0 %v243
        %v455 = vpop.f32.mrb[0].mxu0
        %v456 = vadd.f32 0.0, %v455
        %v457 = vpop.f32.mrb[0].mxu0
        %458 = vmatprep.mubr.f32.mxu0 0.0
        %459 = vmatmul.mubr.f32.gmra.mrb[0].mxu0 %v246
        %v460 = vpop.f32.mrb[0].mxu0
        %v461 = vadd.f32 0.0, %v460
        %v462 = vpop.f32.mrb[0].mxu0
        %463 = vmatprep.mubr.f32.mxu0 0.0
        %464 = vmatmul.mubr.f32.gmra.mrb[0].mxu0 %v249
        %v465 = vpop.f32.mrb[0].mxu0
        %v466 = vadd.f32 0.0, %v465
        %v467 = vpop.f32.mrb[0].mxu0
        %468 = vdwg.mxu0
        %v470 = vsel %vm226, %v214, 0
        %v473 = vsel %vm226, %v215, 0
        %v476 = vsel %vm226, %v216, 0
        %v479 = vsel %vm226, %v217, 0
        %v482 = vsel %vm226, %v218, 0
        %v485 = vsel %vm226, %v219, 0
        %487 = vmatprep.subr.mxu0 0.0
        %488 = vmatpush1.xpose.msra.mxu0 %v228
        %489 = vmatprep.subr.mxu0 0.0
        %490 = vmatpush1.xpose.msra.mxu0 %v231
        %491 = vmatprep.subr.mxu0 0.0
        %492 = vmatpush1.xpose.msra.mxu0 0.0
        %493 = vmatprep.subr.mxu0 0.0
        %494 = vmatpush1.xpose.msra.mxu0 0.0
        %495 = vmatprep.subr.mxu0 0.0
        %496 = vmatpush1.xpose.msra.mxu0 0.0
        %497 = vmatprep.subr.mxu0 0.0
        %498 = vmatpush1.xpose.msra.mxu0 0.0
        %499 = vmatprep.subr.mxu0 0.0
        %500 = vmatpush1.xpose.msra.mxu0 0.0
        %501 = vmatprep.subr.mxu0 0.0
        %502 = vmatpush1.xpose.msra.mxu0 0.0
        %503 = vmatprep.subr.mxu0 0.0
        %504 = vmatpush1.xpose.msra.mxu0 0.0
        %505 = vmatprep.subr.mxu0 0.0
        %506 = vmatpush1.xpose.msra.mxu0 0.0
        %507 = vmatprep.subr.mxu0 0.0
        %508 = vmatpush1.xpose.msra.mxu0 0.0
        %509 = vmatprep.subr.mxu0 0.0
        %510 = vmatpush1.xpose.msra.mxu0 0.0
        %511 = vmatprep.subr.mxu0 0.0
        %512 = vmatpush1.xpose.msra.mxu0 0.0
        %513 = vmatprep.subr.mxu0 0.0
        %514 = vmatpush1.xpose.msra.mxu0 0.0
        %515 = vmatprep.subr.mxu0 0.0
        %516 = vmatpush1.xpose.msra.mxu0 0.0
        %517 = vmatprep.subr.mxu0 0.0
        %518 = vmatpush1.xpose.msra.mxu0 0.0
        %519 = vmatprep.subr.mxu0 0.0
        %520 = vmatpush1.xpose.msra.mxu0 0.0
        %521 = vmatprep.subr.mxu0 0.0
        %522 = vmatpush1.xpose.msra.mxu0 0.0
        %523 = vmatprep.subr.mxu0 0.0
        %524 = vmatpush1.xpose.msra.mxu0 0.0
        %525 = vmatprep.subr.mxu0 0.0
        %526 = vmatpush1.xpose.msra.mxu0 0.0
        %527 = vmatprep.subr.mxu0 0.0
        %528 = vmatpush1.xpose.msra.mxu0 0.0
        %529 = vmatprep.subr.mxu0 0.0
        %530 = vmatpush1.xpose.msra.mxu0 0.0
        %531 = vmatprep.subr.mxu0 0.0
        %532 = vmatpush1.xpose.msra.mxu0 0.0
        %533 = vmatprep.subr.mxu0 0.0
        %534 = vmatpush1.xpose.msra.mxu0 0.0
        %535 = vmatprep.subr.mxu0 0.0
        %536 = vmatpush1.xpose.msra.mxu0 0.0
        %537 = vmatprep.subr.mxu0 0.0
        %538 = vmatpush1.xpose.msra.mxu0 0.0
        %539 = vmatprep.subr.mxu0 0.0
        %540 = vmatpush1.xpose.msra.mxu0 0.0
        %541 = vmatprep.subr.mxu0 0.0
        %542 = vmatpush1.xpose.msra.mxu0 0.0
        %543 = vmatprep.subr.mxu0 0.0
        %544 = vmatpush1.xpose.msra.mxu0 0.0
        %545 = vmatprep.subr.mxu0 0.0
        %546 = vmatpush1.xpose.msra.mxu0 0.0
        %547 = vmatprep.subr.mxu0 0.0
        %548 = vmatpush1.xpose.msra.mxu0 0.0
        %549 = vmatprep.subr.mxu0 0.0
        %550 = vmatpush1.xpose.msra.mxu0 0.0
        %551 = vmatprep.mubr.f32.mxu0 0.0
        %552 = vmatmul.mubr.f32.gmra.mrb[0].mxu0 %v470
        %v553 = vpop.f32.mrb[0].mxu0
        %v554 = vadd.f32 0.0, %v553
        %v555 = vpop.f32.mrb[0].mxu0
        %556 = vmatprep.mubr.f32.mxu0 0.0
        %557 = vmatmul.mubr.f32.gmra.mrb[0].mxu0 %v473
        %v558 = vpop.f32.mrb[0].mxu0
        %v559 = vadd.f32 0.0, %v558
        %v560 = vpop.f32.mrb[0].mxu0
        %561 = vmatprep.mubr.f32.mxu0 0.0
        %562 = vmatmul.mubr.f32.gmra.mrb[0].mxu0 %v476
        %v563 = vpop.f32.mrb[0].mxu0
        %v564 = vadd.f32 0.0, %v563
        %v565 = vpop.f32.mrb[0].mxu0
        %566 = vmatprep.mubr.f32.mxu0 0.0
        %567 = vmatmul.mubr.f32.gmra.mrb[0].mxu0 %v479
        %v568 = vpop.f32.mrb[0].mxu0
        %v569 = vadd.f32 0.0, %v568
        %v570 = vpop.f32.mrb[0].mxu0
        %571 = vmatprep.mubr.f32.mxu0 0.0
        %572 = vmatmul.mubr.f32.gmra.mrb[0].mxu0 %v482
        %v573 = vpop.f32.mrb[0].mxu0
        %v574 = vadd.f32 0.0, %v573
        %v575 = vpop.f32.mrb[0].mxu0
        %576 = vmatprep.mubr.f32.mxu0 0.0
        %577 = vmatmul.mubr.f32.gmra.mrb[0].mxu0 %v485
        %v578 = vpop.f32.mrb[0].mxu0
        %v579 = vadd.f32 0.0, %v578
        %v580 = vpop.f32.mrb[0].mxu0
        %581 = vdwg.mxu0
        %v582 = vmul.f32 %v193, %v220
        %v583 = vmul.f32 %v194, %v221
        %v584 = vmul.f32 %v193, %v222
        %v585 = vmul.f32 %v194, %v223
        %v586 = vmul.f32 %v193, %v224
        %v587 = vmul.f32 %v194, %v225
        %v588 = vsel %vm226, %v582, 0.0
        %589 = vadd.xlane.f32.xlu0 %v588
        %v590 = vpop.xlane.xlu0 %589
        %v591 = vsel %vm226, %v583, 0.0
        %592 = vadd.xlane.f32.xlu0 %v591
        %v593 = vpop.xlane.xlu0 %592
        %v594 = vsel %vm226, %v584, 0.0
        %595 = vadd.xlane.f32.xlu0 %v594
        %v596 = vpop.xlane.xlu0 %595
        %v597 = vsel %vm226, %v585, 0.0
        %598 = vadd.xlane.f32.xlu0 %v597
        %v599 = vpop.xlane.xlu0 %598
        %v600 = vsel %vm226, %v586, 0.0
        %601 = vadd.xlane.f32.xlu0 %v600
        %v602 = vpop.xlane.xlu0 %601
        %v603 = vsel %vm226, %v587, 0.0
        %604 = vadd.xlane.f32.xlu0 %v603
        %v605 = vpop.xlane.xlu0 %604
        %v606 = vadd.f32 %v590, %v554
        %v607 = vadd.f32 %v593, %v559
        %v608 = vadd.f32 %v596, %v564
        %v609 = vadd.f32 %v599, %v569
        %v610 = vadd.f32 %v602, %v574
        %v611 = vadd.f32 %v605, %v579
        %vm612 = vcmp.gt.f32.partialorder %v606, 0.0
        %vm613 = vcmp.gt.f32.partialorder %v607, 0.0
        %vm614 = vcmp.gt.f32.partialorder %v608, 0.0
        %vm615 = vcmp.gt.f32.partialorder %v609, 0.0
        %vm616 = vcmp.gt.f32.partialorder %v610, 0.0
        %vm617 = vcmp.gt.f32.partialorder %v611, 0.0
        %v618 = vmul.f32 %v606, 0.2
        %v619 = vmul.f32 %v607, 0.2
        %v620 = vmul.f32 %v608, 0.2
        %v621 = vmul.f32 %v609, 0.2
        %v622 = vmul.f32 %v610, 0.2
        %v623 = vmul.f32 %v611, 0.2
        %v624 = vsel %vm612, %v606, %v618
        %v625 = vsel %vm613, %v607, %v619
        %v626 = vsel %vm614, %v608, %v620
        %v627 = vsel %vm615, %v609, %v621
        %v628 = vsel %vm616, %v610, %v622
        %v629 = vsel %vm617, %v611, %v623
        %v630 = vld [vmem:[%s191] sm:$0xff]
        %v631 = vld [vmem:[%s191 + $0x8] sm:$0xff]
        %v632 = vld [vmem:[%s191 + $0x10] sm:$0xff]
        %v633 = vld [vmem:[%s191 + $0x18] sm:$0xff]
        %v634 = vld [vmem:[%s191 + $0x20] sm:$0xff]
        %v635 = vld [vmem:[%s191 + $0x28] sm:$0xff]
        %v636 = vadd.f32 %v624, %v630
        %v637 = vadd.f32 %v625, %v631
        %v638 = vadd.f32 %v626, %v632
        %v639 = vadd.f32 %v627, %v633
        %v640 = vadd.f32 %v628, %v634
        %v641 = vadd.f32 %v629, %v635
        %vm642 = vcmask 130048
        %v643 = vsel %vm642, %v636, -inf
        %644 = vmax.xlane.f32.xlu0 %v643
        %v645 = vpop.xlane.xlu0 %644
        %v646 = vsel %vm642, %v637, -inf
        %647 = vmax.xlane.f32.xlu0 %v646
        %v648 = vpop.xlane.xlu0 %647
        %v649 = vsel %vm642, %v638, -inf
        %650 = vmax.xlane.f32.xlu0 %v649
        %v651 = vpop.xlane.xlu0 %650
        %v652 = vsel %vm642, %v639, -inf
        %653 = vmax.xlane.f32.xlu0 %v652
        %v654 = vpop.xlane.xlu0 %653
        %v655 = vsel %vm642, %v640, -inf
        %656 = vmax.xlane.f32.xlu0 %v655
        %v657 = vpop.xlane.xlu0 %656
        %v658 = vsel %vm642, %v641, -inf
        %659 = vmax.xlane.f32.xlu0 %v658
        %v660 = vpop.xlane.xlu0 %659
        %v661 = vsub.f32 %v636, %v645
        %v662 = vsub.f32 %v637, %v648
        %v663 = vsub.f32 %v638, %v651
        %v664 = vsub.f32 %v639, %v654
        %v665 = vsub.f32 %v640, %v657
        %v666 = vsub.f32 %v641, %v660
        %v667 = vmul.f32 %v661, 1.442695
        %v668 = vpow.pop %v667
        %v669 = vmul.f32 %v662, 1.442695
        %v670 = vpow.pop %v669
        %v671 = vmul.f32 %v663, 1.442695
        %v672 = vpow.pop %v671
        %v673 = vmul.f32 %v664, 1.442695
        %v674 = vpow.pop %v673
        %v675 = vmul.f32 %v665, 1.442695
        %v676 = vpow.pop %v675
        %v677 = vmul.f32 %v666, 1.442695
        %v678 = vpow.pop %v677
        %v679 = vsel %vm642, %v668, 0.0
        %680 = vadd.xlane.f32.xlu0 %v679
        %v681 = vpop.xlane.xlu0 %680
        %v682 = vsel %vm642, %v670, 0.0
        %683 = vadd.xlane.f32.xlu0 %v682
        %v684 = vpop.xlane.xlu0 %683
        %v685 = vsel %vm642, %v672, 0.0
        %686 = vadd.xlane.f32.xlu0 %v685
        %v687 = vpop.xlane.xlu0 %686
        %v688 = vsel %vm642, %v674, 0.0
        %689 = vadd.xlane.f32.xlu0 %v688
        %v690 = vpop.xlane.xlu0 %689
        %v691 = vsel %vm642, %v676, 0.0
        %692 = vadd.xlane.f32.xlu0 %v691
        %v693 = vpop.xlane.xlu0 %692
        %v694 = vsel %vm642, %v678, 0.0
        %695 = vadd.xlane.f32.xlu0 %v694
        %v696 = vpop.xlane.xlu0 %695
        %v697 = vrcp.pop %v681
        %v698 = vrcp.pop %v684
        %v699 = vrcp.pop %v687
        %v700 = vrcp.pop %v690
        %v701 = vrcp.pop %v693
        %v702 = vrcp.pop %v696
        %v703 = vmul.f32 %v697, 0.33333334
        %v704 = vmul.f32 %v698, 0.33333334
        %v705 = vmul.f32 %v699, 0.33333334
        %v706 = vmul.f32 %v700, 0.33333334
        %v707 = vmul.f32 %v701, 0.33333334
        %v708 = vmul.f32 %v702, 0.33333334
        %v709 = vmul.f32 %v668, %v703
        %v710 = vmul.f32 %v670, %v704
        %v711 = vmul.f32 %v672, %v705
        %v712 = vmul.f32 %v674, %v706
        %v713 = vmul.f32 %v676, %v707
        %v714 = vmul.f32 %v678, %v708
        %v716 = vsel %vm642, %v709, 0
        %v719 = vsel %vm642, %v710, 0
        %v722 = vsel %vm642, %v711, 0
        %v725 = vsel %vm642, %v712, 0
        %v728 = vsel %vm642, %v713, 0
        %v731 = vsel %vm642, %v714, 0
        %733 = vmatprep.subr.mxu0 %v320
        %734 = vmatpush1.msra.mxu0 %v318
        %735 = vmatprep.subr.mxu0 %v326
        %736 = vmatpush1.msra.mxu0 %v324
        %737 = vmatprep.subr.mxu0 0.0
        %738 = vmatpush1.msra.mxu0 0.0
        %739 = vmatprep.subr.mxu0 0.0
        %740 = vmatpush1.msra.mxu0 0.0
        %741 = vmatprep.subr.mxu0 0.0
        %742 = vmatpush1.msra.mxu0 0.0
        %743 = vmatprep.subr.mxu0 0.0
        %744 = vmatpush1.msra.mxu0 0.0
        %745 = vmatprep.subr.mxu0 0.0
        %746 = vmatpush1.msra.mxu0 0.0
        %747 = vmatprep.subr.mxu0 0.0
        %748 = vmatpush1.msra.mxu0 0.0
        %749 = vmatprep.subr.mxu0 0.0
        %750 = vmatpush1.msra.mxu0 0.0
        %751 = vmatprep.subr.mxu0 0.0
        %752 = vmatpush1.msra.mxu0 0.0
        %753 = vmatprep.subr.mxu0 0.0
        %754 = vmatpush1.msra.mxu0 0.0
        %755 = vmatprep.subr.mxu0 0.0
        %756 = vmatpush1.msra.mxu0 0.0
        %757 = vmatprep.subr.mxu0 0.0
        %758 = vmatpush1.msra.mxu0 0.0
        %759 = vmatprep.subr.mxu0 0.0
        %760 = vmatpush1.msra.mxu0 0.0
        %761 = vmatprep.subr.mxu0 0.0
        %762 = vmatpush1.msra.mxu0 0.0
        %763 = vmatprep.subr.mxu0 0.0
        %764 = vmatpush1.msra.mxu0 0.0
        %765 = vmatprep.subr.mxu0 0.0
        %766 = vmatpush1.msra.mxu0 0.0
        %767 = vmatprep.subr.mxu0 0.0
        %768 = vmatpush1.msra.mxu0 0.0
        %769 = vmatprep.subr.mxu0 0.0
        %770 = vmatpush1.msra.mxu0 0.0
        %771 = vmatprep.subr.mxu0 0.0
        %772 = vmatpush1.msra.mxu0 0.0
        %773 = vmatprep.subr.mxu0 0.0
        %774 = vmatpush1.msra.mxu0 0.0
        %775 = vmatprep.subr.mxu0 0.0
        %776 = vmatpush1.msra.mxu0 0.0
        %777 = vmatprep.subr.mxu0 0.0
        %778 = vmatpush1.msra.mxu0 0.0
        %779 = vmatprep.subr.mxu0 0.0
        %780 = vmatpush1.msra.mxu0 0.0
        %781 = vmatprep.subr.mxu0 0.0
        %782 = vmatpush1.msra.mxu0 0.0
        %783 = vmatprep.subr.mxu0 0.0
        %784 = vmatpush1.msra.mxu0 0.0
        %785 = vmatprep.subr.mxu0 0.0
        %786 = vmatpush1.msra.mxu0 0.0
        %787 = vmatprep.subr.mxu0 0.0
        %788 = vmatpush1.msra.mxu0 0.0
        %789 = vmatprep.subr.mxu0 0.0
        %790 = vmatpush1.msra.mxu0 0.0
        %791 = vmatprep.subr.mxu0 0.0
        %792 = vmatpush1.msra.mxu0 0.0
        %793 = vmatprep.subr.mxu0 0.0
        %794 = vmatpush1.msra.mxu0 0.0
        %795 = vmatprep.subr.mxu0 0.0
        %796 = vmatpush1.msra.mxu0 0.0
        %797 = vmatprep.mubr.f32.mxu0 0.0
        %798 = vmatmul.mubr.f32.gmra.mrb[0].mxu0 %v716
        %v799 = vpop.f32.mrb[0].mxu0
        %v800 = vadd.f32 0.0, %v799
        %v801 = vpop.f32.mrb[0].mxu0
        %802 = vmatprep.mubr.f32.mxu0 0.0
        %803 = vmatmul.mubr.f32.gmra.mrb[0].mxu0 %v719
        %v804 = vpop.f32.mrb[0].mxu0
        %v805 = vadd.f32 0.0, %v804
        %v806 = vpop.f32.mrb[0].mxu0
        %807 = vmatprep.mubr.f32.mxu0 0.0
        %808 = vmatmul.mubr.f32.gmra.mrb[0].mxu0 %v722
        %v809 = vpop.f32.mrb[0].mxu0
        %v810 = vpop.f32.mrb[0].mxu0
        %v811 = vadd.f32 0.0, %v810
        %812 = vmatprep.mubr.f32.mxu0 0.0
        %813 = vmatmul.mubr.f32.gmra.mrb[0].mxu0 %v725
        %v814 = vpop.f32.mrb[0].mxu0
        %v815 = vpop.f32.mrb[0].mxu0
        %v816 = vadd.f32 0.0, %v815
        %817 = vmatprep.mubr.f32.mxu0 0.0
        %818 = vmatmul.mubr.f32.gmra.mrb[0].mxu0 %v728
        %v819 = vpop.f32.mrb[0].mxu0
        %v820 = vpop.f32.mrb[0].mxu0
        %821 = vmatprep.mubr.f32.mxu0 0.0
        %822 = vmatmul.mubr.f32.gmra.mrb[0].mxu0 %v731
        %v823 = vpop.f32.mrb[0].mxu0
        %v824 = vpop.f32.mrb[0].mxu0
        %825 = vdwg.mxu0
        %826 = vmatprep.subr.mxu0 0.0
        %827 = vmatpush1.msra.mxu0 %v431
        %828 = vmatprep.subr.mxu0 0.0
        %829 = vmatpush1.msra.mxu0 %v436
        %830 = vmatprep.subr.mxu0 0.0
        %831 = vmatpush1.msra.mxu0 0.0
        %832 = vmatprep.subr.mxu0 0.0
        %833 = vmatpush1.msra.mxu0 0.0
        %834 = vmatprep.subr.mxu0 0.0
        %835 = vmatpush1.msra.mxu0 0.0
        %836 = vmatprep.subr.mxu0 0.0
        %837 = vmatpush1.msra.mxu0 0.0
        %838 = vmatprep.subr.mxu0 0.0
        %839 = vmatpush1.msra.mxu0 0.0
        %840 = vmatprep.subr.mxu0 0.0
        %841 = vmatpush1.msra.mxu0 0.0
        %842 = vmatprep.subr.mxu0 0.0
        %843 = vmatpush1.msra.mxu0 0.0
        %844 = vmatprep.subr.mxu0 0.0
        %845 = vmatpush1.msra.mxu0 0.0
        %846 = vmatprep.subr.mxu0 0.0
        %847 = vmatpush1.msra.mxu0 0.0
        %848 = vmatprep.subr.mxu0 0.0
        %849 = vmatpush1.msra.mxu0 0.0
        %850 = vmatprep.subr.mxu0 0.0
        %851 = vmatpush1.msra.mxu0 0.0
        %852 = vmatprep.subr.mxu0 0.0
        %853 = vmatpush1.msra.mxu0 0.0
        %854 = vmatprep.subr.mxu0 0.0
        %855 = vmatpush1.msra.mxu0 0.0
        %856 = vmatprep.subr.mxu0 0.0
        %857 = vmatpush1.msra.mxu0 0.0
        %858 = vmatprep.subr.mxu0 0.0
        %859 = vmatpush1.msra.mxu0 0.0
        %860 = vmatprep.subr.mxu0 0.0
        %861 = vmatpush1.msra.mxu0 0.0
        %862 = vmatprep.subr.mxu0 0.0
        %863 = vmatpush1.msra.mxu0 0.0
        %864 = vmatprep.subr.mxu0 0.0
        %865 = vmatpush1.msra.mxu0 0.0
        %866 = vmatprep.subr.mxu0 0.0
        %867 = vmatpush1.msra.mxu0 0.0
        %868 = vmatprep.subr.mxu0 0.0
        %869 = vmatpush1.msra.mxu0 0.0
        %870 = vmatprep.subr.mxu0 0.0
        %871 = vmatpush1.msra.mxu0 0.0
        %872 = vmatprep.subr.mxu0 0.0
        %873 = vmatpush1.msra.mxu0 0.0
        %874 = vmatprep.subr.mxu0 0.0
        %875 = vmatpush1.msra.mxu0 0.0
        %876 = vmatprep.subr.mxu0 0.0
        %877 = vmatpush1.msra.mxu0 0.0
        %878 = vmatprep.subr.mxu0 0.0
        %879 = vmatpush1.msra.mxu0 0.0
        %880 = vmatprep.subr.mxu0 0.0
        %881 = vmatpush1.msra.mxu0 0.0
        %882 = vmatprep.subr.mxu0 0.0
        %883 = vmatpush1.msra.mxu0 0.0
        %884 = vmatprep.subr.mxu0 0.0
        %885 = vmatpush1.msra.mxu0 0.0
        %886 = vmatprep.subr.mxu0 0.0
        %887 = vmatpush1.msra.mxu0 0.0
        %888 = vmatprep.subr.mxu0 0.0
        %889 = vmatpush1.msra.mxu0 0.0
        %890 = vmatprep.mubr.f32.mxu0 0.0
        %891 = vmatmul.mubr.f32.gmra.mrb[0].mxu0 %v716
        %v892 = vpop.f32.mrb[0].mxu0
        %v893 = vpop.f32.mrb[0].mxu0
        %894 = vmatprep.mubr.f32.mxu0 0.0
        %895 = vmatmul.mubr.f32.gmra.mrb[0].mxu0 %v719
        %v896 = vpop.f32.mrb[0].mxu0
        %v897 = vpop.f32.mrb[0].mxu0
        %898 = vmatprep.mubr.f32.mxu0 0.0
        %899 = vmatmul.mubr.f32.gmra.mrb[0].mxu0 %v722
        %v900 = vpop.f32.mrb[0].mxu0
        %v901 = vpop.f32.mrb[0].mxu0
        %902 = vmatprep.mubr.f32.mxu0 0.0
        %903 = vmatmul.mubr.f32.gmra.mrb[0].mxu0 %v725
        %v904 = vpop.f32.mrb[0].mxu0
        %v905 = vpop.f32.mrb[0].mxu0
        %906 = vmatprep.mubr.f32.mxu0 0.0
        %907 = vmatmul.mubr.f32.gmra.mrb[0].mxu0 %v728
        %v908 = vpop.f32.mrb[0].mxu0
        %v909 = vadd.f32 0.0, %v908
        %v910 = vpop.f32.mrb[0].mxu0
        %911 = vmatprep.mubr.f32.mxu0 0.0
        %912 = vmatmul.mubr.f32.gmra.mrb[0].mxu0 %v731
        %v913 = vpop.f32.mrb[0].mxu0
        %v914 = vadd.f32 0.0, %v913
        %v915 = vpop.f32.mrb[0].mxu0
        %916 = vdwg.mxu0
        %v917 = vadd.f32 %v800, %v811
        %v918 = vadd.f32 %v805, %v816
        %v919 = vadd.f32 %v917, %v909
        %v920 = vadd.f32 %v918, %v914
        %v921 = vadd.f32 %v919, %v213
        %v922 = vadd.f32 %v920, %v213
        %923 = vmatprep.subr.mxu0 0.0
        %924 = vmatpush1.xpose.msra.mxu0 %v234
        %925 = vmatprep.subr.mxu0 0.0
        %926 = vmatpush1.xpose.msra.mxu0 %v237
        %927 = vmatprep.subr.mxu0 0.0
        %928 = vmatpush1.xpose.msra.mxu0 0.0
        %929 = vmatprep.subr.mxu0 0.0
        %930 = vmatpush1.xpose.msra.mxu0 0.0
        %931 = vmatprep.subr.mxu0 0.0
        %932 = vmatpush1.xpose.msra.mxu0 0.0
        %933 = vmatprep.subr.mxu0 0.0
        %934 = vmatpush1.xpose.msra.mxu0 0.0
        %935 = vmatprep.subr.mxu0 0.0
        %936 = vmatpush1.xpose.msra.mxu0 0.0
        %937 = vmatprep.subr.mxu0 0.0
        %938 = vmatpush1.xpose.msra.mxu0 0.0
        %939 = vmatprep.subr.mxu0 0.0
        %940 = vmatpush1.xpose.msra.mxu0 0.0
        %941 = vmatprep.subr.mxu0 0.0
        %942 = vmatpush1.xpose.msra.mxu0 0.0
        %943 = vmatprep.subr.mxu0 0.0
        %944 = vmatpush1.xpose.msra.mxu0 0.0
        %945 = vmatprep.subr.mxu0 0.0
        %946 = vmatpush1.xpose.msra.mxu0 0.0
        %947 = vmatprep.subr.mxu0 0.0
        %948 = vmatpush1.xpose.msra.mxu0 0.0
        %949 = vmatprep.subr.mxu0 0.0
        %950 = vmatpush1.xpose.msra.mxu0 0.0
        %951 = vmatprep.subr.mxu0 0.0
        %952 = vmatpush1.xpose.msra.mxu0 0.0
        %953 = vmatprep.subr.mxu0 0.0
        %954 = vmatpush1.xpose.msra.mxu0 0.0
        %955 = vmatprep.subr.mxu0 0.0
        %956 = vmatpush1.xpose.msra.mxu0 0.0
        %957 = vmatprep.subr.mxu0 0.0
        %958 = vmatpush1.xpose.msra.mxu0 0.0
        %959 = vmatprep.subr.mxu0 0.0
        %960 = vmatpush1.xpose.msra.mxu0 0.0
        %961 = vmatprep.subr.mxu0 0.0
        %962 = vmatpush1.xpose.msra.mxu0 0.0
        %963 = vmatprep.subr.mxu0 0.0
        %964 = vmatpush1.xpose.msra.mxu0 0.0
        %965 = vmatprep.subr.mxu0 0.0
        %966 = vmatpush1.xpose.msra.mxu0 0.0
        %967 = vmatprep.subr.mxu0 0.0
        %968 = vmatpush1.xpose.msra.mxu0 0.0
        %969 = vmatprep.subr.mxu0 0.0
        %970 = vmatpush1.xpose.msra.mxu0 0.0
        %971 = vmatprep.subr.mxu0 0.0
        %972 = vmatpush1.xpose.msra.mxu0 0.0
        %973 = vmatprep.subr.mxu0 0.0
        %974 = vmatpush1.xpose.msra.mxu0 0.0
        %975 = vmatprep.subr.mxu0 0.0
        %976 = vmatpush1.xpose.msra.mxu0 0.0
        %977 = vmatprep.subr.mxu0 0.0
        %978 = vmatpush1.xpose.msra.mxu0 0.0
        %979 = vmatprep.subr.mxu0 0.0
        %980 = vmatpush1.xpose.msra.mxu0 0.0
        %981 = vmatprep.subr.mxu0 0.0
        %982 = vmatpush1.xpose.msra.mxu0 0.0
        %983 = vmatprep.subr.mxu0 0.0
        %984 = vmatpush1.xpose.msra.mxu0 0.0
        %985 = vmatprep.subr.mxu0 0.0
        %986 = vmatpush1.xpose.msra.mxu0 0.0
        %987 = vmatprep.mubr.f32.mxu0 0.0
        %988 = vmatmul.mubr.f32.gmra.mrb[0].mxu0 %v470
        %v989 = vpop.f32.mrb[0].mxu0
        %v990 = vadd.f32 0.0, %v989
        %v991 = vpop.f32.mrb[0].mxu0
        %992 = vmatprep.mubr.f32.mxu0 0.0
        %993 = vmatmul.mubr.f32.gmra.mrb[0].mxu0 %v473
        %v994 = vpop.f32.mrb[0].mxu0
        %v995 = vadd.f32 0.0, %v994
        %v996 = vpop.f32.mrb[0].mxu0
        %997 = vmatprep.mubr.f32.mxu0 0.0
        %998 = vmatmul.mubr.f32.gmra.mrb[0].mxu0 %v476
        %v999 = vpop.f32.mrb[0].mxu0
        %v1000 = vadd.f32 0.0, %v999
        %v1001 = vpop.f32.mrb[0].mxu0
        %1002 = vmatprep.mubr.f32.mxu0 0.0
        %1003 = vmatmul.mubr.f32.gmra.mrb[0].mxu0 %v479
        %v1004 = vpop.f32.mrb[0].mxu0
        %v1005 = vadd.f32 0.0, %v1004
        %v1006 = vpop.f32.mrb[0].mxu0
        %1007 = vmatprep.mubr.f32.mxu0 0.0
        %1008 = vmatmul.mubr.f32.gmra.mrb[0].mxu0 %v482
        %v1009 = vpop.f32.mrb[0].mxu0
        %v1010 = vadd.f32 0.0, %v1009
        %v1011 = vpop.f32.mrb[0].mxu0
        %1012 = vmatprep.mubr.f32.mxu0 0.0
        %1013 = vmatmul.mubr.f32.gmra.mrb[0].mxu0 %v485
        %v1014 = vpop.f32.mrb[0].mxu0
        %v1015 = vadd.f32 0.0, %v1014
        %v1016 = vpop.f32.mrb[0].mxu0
        %1017 = vdwg.mxu0
        %v1018 = vmul.f32 %v195, %v220
        %v1019 = vmul.f32 %v196, %v221
        %v1020 = vmul.f32 %v195, %v222
        %v1021 = vmul.f32 %v196, %v223
        %v1022 = vmul.f32 %v195, %v224
        %v1023 = vmul.f32 %v196, %v225
        %v1024 = vsel %vm226, %v1018, 0.0
        %1025 = vadd.xlane.f32.xlu0 %v1024
        %v1026 = vpop.xlane.xlu0 %1025
        %v1027 = vsel %vm226, %v1019, 0.0
        %1028 = vadd.xlane.f32.xlu0 %v1027
        %v1029 = vpop.xlane.xlu0 %1028
        %v1030 = vsel %vm226, %v1020, 0.0
        %1031 = vadd.xlane.f32.xlu0 %v1030
        %v1032 = vpop.xlane.xlu0 %1031
        %v1033 = vsel %vm226, %v1021, 0.0
        %1034 = vadd.xlane.f32.xlu0 %v1033
        %v1035 = vpop.xlane.xlu0 %1034
        %v1036 = vsel %vm226, %v1022, 0.0
        %1037 = vadd.xlane.f32.xlu0 %v1036
        %v1038 = vpop.xlane.xlu0 %1037
        %v1039 = vsel %vm226, %v1023, 0.0
        %1040 = vadd.xlane.f32.xlu0 %v1039
        %v1041 = vpop.xlane.xlu0 %1040
        %v1042 = vadd.f32 %v1026, %v990
        %v1043 = vadd.f32 %v1029, %v995
        %v1044 = vadd.f32 %v1032, %v1000
        %v1045 = vadd.f32 %v1035, %v1005
        %v1046 = vadd.f32 %v1038, %v1010
        %v1047 = vadd.f32 %v1041, %v1015
        %vm1048 = vcmp.gt.f32.partialorder %v1042, 0.0
        %vm1049 = vcmp.gt.f32.partialorder %v1043, 0.0
        %vm1050 = vcmp.gt.f32.partialorder %v1044, 0.0
        %vm1051 = vcmp.gt.f32.partialorder %v1045, 0.0
        %vm1052 = vcmp.gt.f32.partialorder %v1046, 0.0
        %vm1053 = vcmp.gt.f32.partialorder %v1047, 0.0
        %v1054 = vmul.f32 %v1042, 0.2
        %v1055 = vmul.f32 %v1043, 0.2
        %v1056 = vmul.f32 %v1044, 0.2
        %v1057 = vmul.f32 %v1045, 0.2
        %v1058 = vmul.f32 %v1046, 0.2
        %v1059 = vmul.f32 %v1047, 0.2
        %v1060 = vsel %vm1048, %v1042, %v1054
        %v1061 = vsel %vm1049, %v1043, %v1055
        %v1062 = vsel %vm1050, %v1044, %v1056
        %v1063 = vsel %vm1051, %v1045, %v1057
        %v1064 = vsel %vm1052, %v1046, %v1058
        %v1065 = vsel %vm1053, %v1047, %v1059
        %v1066 = vld [vmem:[%s191 + $0x30] sm:$0xff]
        %v1067 = vld [vmem:[%s191 + $0x38] sm:$0xff]
        %v1068 = vld [vmem:[%s191 + $0x40] sm:$0xff]
        %v1069 = vld [vmem:[%s191 + $0x48] sm:$0xff]
        %v1070 = vld [vmem:[%s191 + $0x50] sm:$0xff]
        %v1071 = vld [vmem:[%s191 + $0x58] sm:$0xff]
        %v1072 = vadd.f32 %v1060, %v1066
        %v1073 = vadd.f32 %v1061, %v1067
        %v1074 = vadd.f32 %v1062, %v1068
        %v1075 = vadd.f32 %v1063, %v1069
        %v1076 = vadd.f32 %v1064, %v1070
        %v1077 = vadd.f32 %v1065, %v1071
        %v1078 = vsel %vm642, %v1072, -inf
        %1079 = vmax.xlane.f32.xlu0 %v1078
        %v1080 = vpop.xlane.xlu0 %1079
        %v1081 = vsel %vm642, %v1073, -inf
        %1082 = vmax.xlane.f32.xlu0 %v1081
        %v1083 = vpop.xlane.xlu0 %1082
        %v1084 = vsel %vm642, %v1074, -inf
        %1085 = vmax.xlane.f32.xlu0 %v1084
        %v1086 = vpop.xlane.xlu0 %1085
        %v1087 = vsel %vm642, %v1075, -inf
        %1088 = vmax.xlane.f32.xlu0 %v1087
        %v1089 = vpop.xlane.xlu0 %1088
        %v1090 = vsel %vm642, %v1076, -inf
        %1091 = vmax.xlane.f32.xlu0 %v1090
        %v1092 = vpop.xlane.xlu0 %1091
        %v1093 = vsel %vm642, %v1077, -inf
        %1094 = vmax.xlane.f32.xlu0 %v1093
        %v1095 = vpop.xlane.xlu0 %1094
        %v1096 = vsub.f32 %v1072, %v1080
        %v1097 = vsub.f32 %v1073, %v1083
        %v1098 = vsub.f32 %v1074, %v1086
        %v1099 = vsub.f32 %v1075, %v1089
        %v1100 = vsub.f32 %v1076, %v1092
        %v1101 = vsub.f32 %v1077, %v1095
        %v1102 = vmul.f32 %v1096, 1.442695
        %v1103 = vpow.pop %v1102
        %v1104 = vmul.f32 %v1097, 1.442695
        %v1105 = vpow.pop %v1104
        %v1106 = vmul.f32 %v1098, 1.442695
        %v1107 = vpow.pop %v1106
        %v1108 = vmul.f32 %v1099, 1.442695
        %v1109 = vpow.pop %v1108
        %v1110 = vmul.f32 %v1100, 1.442695
        %v1111 = vpow.pop %v1110
        %v1112 = vmul.f32 %v1101, 1.442695
        %v1113 = vpow.pop %v1112
        %v1114 = vsel %vm642, %v1103, 0.0
        %1115 = vadd.xlane.f32.xlu0 %v1114
        %v1116 = vpop.xlane.xlu0 %1115
        %v1117 = vsel %vm642, %v1105, 0.0
        %1118 = vadd.xlane.f32.xlu0 %v1117
        %v1119 = vpop.xlane.xlu0 %1118
        %v1120 = vsel %vm642, %v1107, 0.0
        %1121 = vadd.xlane.f32.xlu0 %v1120
        %v1122 = vpop.xlane.xlu0 %1121
        %v1123 = vsel %vm642, %v1109, 0.0
        %1124 = vadd.xlane.f32.xlu0 %v1123
        %v1125 = vpop.xlane.xlu0 %1124
        %v1126 = vsel %vm642, %v1111, 0.0
        %1127 = vadd.xlane.f32.xlu0 %v1126
        %v1128 = vpop.xlane.xlu0 %1127
        %v1129 = vsel %vm642, %v1113, 0.0
        %1130 = vadd.xlane.f32.xlu0 %v1129
        %v1131 = vpop.xlane.xlu0 %1130
        %v1132 = vrcp.pop %v1116
        %v1133 = vrcp.pop %v1119
        %v1134 = vrcp.pop %v1122
        %v1135 = vrcp.pop %v1125
        %v1136 = vrcp.pop %v1128
        %v1137 = vrcp.pop %v1131
        %v1138 = vmul.f32 %v1132, 0.33333334
        %v1139 = vmul.f32 %v1133, 0.33333334
        %v1140 = vmul.f32 %v1134, 0.33333334
        %v1141 = vmul.f32 %v1135, 0.33333334
        %v1142 = vmul.f32 %v1136, 0.33333334
        %v1143 = vmul.f32 %v1137, 0.33333334
        %v1144 = vmul.f32 %v1103, %v1138
        %v1145 = vmul.f32 %v1105, %v1139
        %v1146 = vmul.f32 %v1107, %v1140
        %v1147 = vmul.f32 %v1109, %v1141
        %v1148 = vmul.f32 %v1111, %v1142
        %v1149 = vmul.f32 %v1113, %v1143
        %v1151 = vsel %vm642, %v1144, 0
        %v1154 = vsel %vm642, %v1145, 0
        %v1157 = vsel %vm642, %v1146, 0
        %v1160 = vsel %vm642, %v1147, 0
        %v1163 = vsel %vm642, %v1148, 0
        %v1166 = vsel %vm642, %v1149, 0
        %1168 = vmatprep.subr.mxu0 %v332
        %1169 = vmatpush1.msra.mxu0 %v330
        %1170 = vmatprep.subr.mxu0 %v338
        %1171 = vmatpush1.msra.mxu0 %v336
        %1172 = vmatprep.subr.mxu0 0.0
        %1173 = vmatpush1.msra.mxu0 0.0
        %1174 = vmatprep.subr.mxu0 0.0
        %1175 = vmatpush1.msra.mxu0 0.0
        %1176 = vmatprep.subr.mxu0 0.0
        %1177 = vmatpush1.msra.mxu0 0.0
        %1178 = vmatprep.subr.mxu0 0.0
        %1179 = vmatpush1.msra.mxu0 0.0
        %1180 = vmatprep.subr.mxu0 0.0
        %1181 = vmatpush1.msra.mxu0 0.0
        %1182 = vmatprep.subr.mxu0 0.0
        %1183 = vmatpush1.msra.mxu0 0.0
        %1184 = vmatprep.subr.mxu0 0.0
        %1185 = vmatpush1.msra.mxu0 0.0
        %1186 = vmatprep.subr.mxu0 0.0
        %1187 = vmatpush1.msra.mxu0 0.0
        %1188 = vmatprep.subr.mxu0 0.0
        %1189 = vmatpush1.msra.mxu0 0.0
        %1190 = vmatprep.subr.mxu0 0.0
        %1191 = vmatpush1.msra.mxu0 0.0
        %1192 = vmatprep.subr.mxu0 0.0
        %1193 = vmatpush1.msra.mxu0 0.0
        %1194 = vmatprep.subr.mxu0 0.0
        %1195 = vmatpush1.msra.mxu0 0.0
        %1196 = vmatprep.subr.mxu0 0.0
        %1197 = vmatpush1.msra.mxu0 0.0
        %1198 = vmatprep.subr.mxu0 0.0
        %1199 = vmatpush1.msra.mxu0 0.0
        %1200 = vmatprep.subr.mxu0 0.0
        %1201 = vmatpush1.msra.mxu0 0.0
        %1202 = vmatprep.subr.mxu0 0.0
        %1203 = vmatpush1.msra.mxu0 0.0
        %1204 = vmatprep.subr.mxu0 0.0
        %1205 = vmatpush1.msra.mxu0 0.0
        %1206 = vmatprep.subr.mxu0 0.0
        %1207 = vmatpush1.msra.mxu0 0.0
        %1208 = vmatprep.subr.mxu0 0.0
        %1209 = vmatpush1.msra.mxu0 0.0
        %1210 = vmatprep.subr.mxu0 0.0
        %1211 = vmatpush1.msra.mxu0 0.0
        %1212 = vmatprep.subr.mxu0 0.0
        %1213 = vmatpush1.msra.mxu0 0.0
        %1214 = vmatprep.subr.mxu0 0.0
        %1215 = vmatpush1.msra.mxu0 0.0
        %1216 = vmatprep.subr.mxu0 0.0
        %1217 = vmatpush1.msra.mxu0 0.0
        %1218 = vmatprep.subr.mxu0 0.0
        %1219 = vmatpush1.msra.mxu0 0.0
        %1220 = vmatprep.subr.mxu0 0.0
        %1221 = vmatpush1.msra.mxu0 0.0
        %1222 = vmatprep.subr.mxu0 0.0
        %1223 = vmatpush1.msra.mxu0 0.0
        %1224 = vmatprep.subr.mxu0 0.0
        %1225 = vmatpush1.msra.mxu0 0.0
        %1226 = vmatprep.subr.mxu0 0.0
        %1227 = vmatpush1.msra.mxu0 0.0
        %1228 = vmatprep.subr.mxu0 0.0
        %1229 = vmatpush1.msra.mxu0 0.0
        %1230 = vmatprep.subr.mxu0 0.0
        %1231 = vmatpush1.msra.mxu0 0.0
        %1232 = vmatprep.mubr.f32.mxu0 0.0
        %1233 = vmatmul.mubr.f32.gmra.mrb[0].mxu0 %v1151
        %v1234 = vpop.f32.mrb[0].mxu0
        %v1235 = vadd.f32 0.0, %v1234
        %v1236 = vpop.f32.mrb[0].mxu0
        %1237 = vmatprep.mubr.f32.mxu0 0.0
        %1238 = vmatmul.mubr.f32.gmra.mrb[0].mxu0 %v1154
        %v1239 = vpop.f32.mrb[0].mxu0
        %v1240 = vadd.f32 0.0, %v1239
        %v1241 = vpop.f32.mrb[0].mxu0
        %1242 = vmatprep.mubr.f32.mxu0 0.0
        %1243 = vmatmul.mubr.f32.gmra.mrb[0].mxu0 %v1157
        %v1244 = vpop.f32.mrb[0].mxu0
        %v1245 = vpop.f32.mrb[0].mxu0
        %v1246 = vadd.f32 0.0, %v1245
        %1247 = vmatprep.mubr.f32.mxu0 0.0
        %1248 = vmatmul.mubr.f32.gmra.mrb[0].mxu0 %v1160
        %v1249 = vpop.f32.mrb[0].mxu0
        %v1250 = vpop.f32.mrb[0].mxu0
        %v1251 = vadd.f32 0.0, %v1250
        %1252 = vmatprep.mubr.f32.mxu0 0.0
        %1253 = vmatmul.mubr.f32.gmra.mrb[0].mxu0 %v1163
        %v1254 = vpop.f32.mrb[0].mxu0
        %v1255 = vpop.f32.mrb[0].mxu0
        %1256 = vmatprep.mubr.f32.mxu0 0.0
        %1257 = vmatmul.mubr.f32.gmra.mrb[0].mxu0 %v1166
        %v1258 = vpop.f32.mrb[0].mxu0
        %v1259 = vpop.f32.mrb[0].mxu0
        %1260 = vdwg.mxu0
        %1261 = vmatprep.subr.mxu0 0.0
        %1262 = vmatpush1.msra.mxu0 %v441
        %1263 = vmatprep.subr.mxu0 0.0
        %1264 = vmatpush1.msra.mxu0 %v446
        %1265 = vmatprep.subr.mxu0 0.0
        %1266 = vmatpush1.msra.mxu0 0.0
        %1267 = vmatprep.subr.mxu0 0.0
        %1268 = vmatpush1.msra.mxu0 0.0
        %1269 = vmatprep.subr.mxu0 0.0
        %1270 = vmatpush1.msra.mxu0 0.0
        %1271 = vmatprep.subr.mxu0 0.0
        %1272 = vmatpush1.msra.mxu0 0.0
        %1273 = vmatprep.subr.mxu0 0.0
        %1274 = vmatpush1.msra.mxu0 0.0
        %1275 = vmatprep.subr.mxu0 0.0
        %1276 = vmatpush1.msra.mxu0 0.0
        %1277 = vmatprep.subr.mxu0 0.0
        %1278 = vmatpush1.msra.mxu0 0.0
        %1279 = vmatprep.subr.mxu0 0.0
        %1280 = vmatpush1.msra.mxu0 0.0
        %1281 = vmatprep.subr.mxu0 0.0
        %1282 = vmatpush1.msra.mxu0 0.0
        %1283 = vmatprep.subr.mxu0 0.0
        %1284 = vmatpush1.msra.mxu0 0.0
        %1285 = vmatprep.subr.mxu0 0.0
        %1286 = vmatpush1.msra.mxu0 0.0
        %1287 = vmatprep.subr.mxu0 0.0
        %1288 = vmatpush1.msra.mxu0 0.0
        %1289 = vmatprep.subr.mxu0 0.0
        %1290 = vmatpush1.msra.mxu0 0.0
        %1291 = vmatprep.subr.mxu0 0.0
        %1292 = vmatpush1.msra.mxu0 0.0
        %1293 = vmatprep.subr.mxu0 0.0
        %1294 = vmatpush1.msra.mxu0 0.0
        %1295 = vmatprep.subr.mxu0 0.0
        %1296 = vmatpush1.msra.mxu0 0.0
        %1297 = vmatprep.subr.mxu0 0.0
        %1298 = vmatpush1.msra.mxu0 0.0
        %1299 = vmatprep.subr.mxu0 0.0
        %1300 = vmatpush1.msra.mxu0 0.0
        %1301 = vmatprep.subr.mxu0 0.0
        %1302 = vmatpush1.msra.mxu0 0.0
        %1303 = vmatprep.subr.mxu0 0.0
        %1304 = vmatpush1.msra.mxu0 0.0
        %1305 = vmatprep.subr.mxu0 0.0
        %1306 = vmatpush1.msra.mxu0 0.0
        %1307 = vmatprep.subr.mxu0 0.0
        %1308 = vmatpush1.msra.mxu0 0.0
        %1309 = vmatprep.subr.mxu0 0.0
        %1310 = vmatpush1.msra.mxu0 0.0
        %1311 = vmatprep.subr.mxu0 0.0
        %1312 = vmatpush1.msra.mxu0 0.0
        %1313 = vmatprep.subr.mxu0 0.0
        %1314 = vmatpush1.msra.mxu0 0.0
        %1315 = vmatprep.subr.mxu0 0.0
        %1316 = vmatpush1.msra.mxu0 0.0
        %1317 = vmatprep.subr.mxu0 0.0
        %1318 = vmatpush1.msra.mxu0 0.0
        %1319 = vmatprep.subr.mxu0 0.0
        %1320 = vmatpush1.msra.mxu0 0.0
        %1321 = vmatprep.subr.mxu0 0.0
        %1322 = vmatpush1.msra.mxu0 0.0
        %1323 = vmatprep.subr.mxu0 0.0
        %1324 = vmatpush1.msra.mxu0 0.0
        %1325 = vmatprep.mubr.f32.mxu0 0.0
        %1326 = vmatmul.mubr.f32.gmra.mrb[0].mxu0 %v1151
        %v1327 = vpop.f32.mrb[0].mxu0
        %v1328 = vpop.f32.mrb[0].mxu0
        %1329 = vmatprep.mubr.f32.mxu0 0.0
        %1330 = vmatmul.mubr.f32.gmra.mrb[0].mxu0 %v1154
        %v1331 = vpop.f32.mrb[0].mxu0
        %v1332 = vpop.f32.mrb[0].mxu0
        %1333 = vmatprep.mubr.f32.mxu0 0.0
        %1334 = vmatmul.mubr.f32.gmra.mrb[0].mxu0 %v1157
        %v1335 = vpop.f32.mrb[0].mxu0
        %v1336 = vpop.f32.mrb[0].mxu0
        %1337 = vmatprep.mubr.f32.mxu0 0.0
        %1338 = vmatmul.mubr.f32.gmra.mrb[0].mxu0 %v1160
        %v1339 = vpop.f32.mrb[0].mxu0
        %v1340 = vpop.f32.mrb[0].mxu0
        %1341 = vmatprep.mubr.f32.mxu0 0.0
        %1342 = vmatmul.mubr.f32.gmra.mrb[0].mxu0 %v1163
        %v1343 = vpop.f32.mrb[0].mxu0
        %v1344 = vadd.f32 0.0, %v1343
        %v1345 = vpop.f32.mrb[0].mxu0
        %1346 = vmatprep.mubr.f32.mxu0 0.0
        %1347 = vmatmul.mubr.f32.gmra.mrb[0].mxu0 %v1166
        %v1348 = vpop.f32.mrb[0].mxu0
        %v1349 = vadd.f32 0.0, %v1348
        %v1350 = vpop.f32.mrb[0].mxu0
        %1351 = vdwg.mxu0
        %v1352 = vadd.f32 %v1235, %v1246
        %v1353 = vadd.f32 %v1240, %v1251
        %v1354 = vadd.f32 %v1352, %v1344
        %v1355 = vadd.f32 %v1353, %v1349
        %v1356 = vadd.f32 %v1354, %v213
        %v1357 = vadd.f32 %v1355, %v213
        %1358 = vmatprep.subr.mxu0 0.0
        %1359 = vmatpush1.xpose.msra.mxu0 %v240
        %1360 = vmatprep.subr.mxu0 0.0
        %1361 = vmatpush1.xpose.msra.mxu0 %v243
        %1362 = vmatprep.subr.mxu0 0.0
        %1363 = vmatpush1.xpose.msra.mxu0 0.0
        %1364 = vmatprep.subr.mxu0 0.0
        %1365 = vmatpush1.xpose.msra.mxu0 0.0
        %1366 = vmatprep.subr.mxu0 0.0
        %1367 = vmatpush1.xpose.msra.mxu0 0.0
        %1368 = vmatprep.subr.mxu0 0.0
        %1369 = vmatpush1.xpose.msra.mxu0 0.0
        %1370 = vmatprep.subr.mxu0 0.0
        %1371 = vmatpush1.xpose.msra.mxu0 0.0
        %1372 = vmatprep.subr.mxu0 0.0
        %1373 = vmatpush1.xpose.msra.mxu0 0.0
        %1374 = vmatprep.subr.mxu0 0.0
        %1375 = vmatpush1.xpose.msra.mxu0 0.0
        %1376 = vmatprep.subr.mxu0 0.0
        %1377 = vmatpush1.xpose.msra.mxu0 0.0
        %1378 = vmatprep.subr.mxu0 0.0
        %1379 = vmatpush1.xpose.msra.mxu0 0.0
        %1380 = vmatprep.subr.mxu0 0.0
        %1381 = vmatpush1.xpose.msra.mxu0 0.0
        %1382 = vmatprep.subr.mxu0 0.0
        %1383 = vmatpush1.xpose.msra.mxu0 0.0
        %1384 = vmatprep.subr.mxu0 0.0
        %1385 = vmatpush1.xpose.msra.mxu0 0.0
        %1386 = vmatprep.subr.mxu0 0.0
        %1387 = vmatpush1.xpose.msra.mxu0 0.0
        %1388 = vmatprep.subr.mxu0 0.0
        %1389 = vmatpush1.xpose.msra.mxu0 0.0
        %1390 = vmatprep.subr.mxu0 0.0
        %1391 = vmatpush1.xpose.msra.mxu0 0.0
        %1392 = vmatprep.subr.mxu0 0.0
        %1393 = vmatpush1.xpose.msra.mxu0 0.0
        %1394 = vmatprep.subr.mxu0 0.0
        %1395 = vmatpush1.xpose.msra.mxu0 0.0
        %1396 = vmatprep.subr.mxu0 0.0
        %1397 = vmatpush1.xpose.msra.mxu0 0.0
        %1398 = vmatprep.subr.mxu0 0.0
        %1399 = vmatpush1.xpose.msra.mxu0 0.0
        %1400 = vmatprep.subr.mxu0 0.0
        %1401 = vmatpush1.xpose.msra.mxu0 0.0
        %1402 = vmatprep.subr.mxu0 0.0
        %1403 = vmatpush1.xpose.msra.mxu0 0.0
        %1404 = vmatprep.subr.mxu0 0.0
        %1405 = vmatpush1.xpose.msra.mxu0 0.0
        %1406 = vmatprep.subr.mxu0 0.0
        %1407 = vmatpush1.xpose.msra.mxu0 0.0
        %1408 = vmatprep.subr.mxu0 0.0
        %1409 = vmatpush1.xpose.msra.mxu0 0.0
        %1410 = vmatprep.subr.mxu0 0.0
        %1411 = vmatpush1.xpose.msra.mxu0 0.0
        %1412 = vmatprep.subr.mxu0 0.0
        %1413 = vmatpush1.xpose.msra.mxu0 0.0
        %1414 = vmatprep.subr.mxu0 0.0
        %1415 = vmatpush1.xpose.msra.mxu0 0.0
        %1416 = vmatprep.subr.mxu0 0.0
        %1417 = vmatpush1.xpose.msra.mxu0 0.0
        %1418 = vmatprep.subr.mxu0 0.0
        %1419 = vmatpush1.xpose.msra.mxu0 0.0
        %1420 = vmatprep.subr.mxu0 0.0
        %1421 = vmatpush1.xpose.msra.mxu0 0.0
        %1422 = vmatprep.mubr.f32.mxu0 0.0
        %1423 = vmatmul.mubr.f32.gmra.mrb[0].mxu0 %v470
        %v1424 = vpop.f32.mrb[0].mxu0
        %v1425 = vadd.f32 0.0, %v1424
        %v1426 = vpop.f32.mrb[0].mxu0
        %1427 = vmatprep.mubr.f32.mxu0 0.0
        %1428 = vmatmul.mubr.f32.gmra.mrb[0].mxu0 %v473
        %v1429 = vpop.f32.mrb[0].mxu0
        %v1430 = vadd.f32 0.0, %v1429
        %v1431 = vpop.f32.mrb[0].mxu0
        %1432 = vmatprep.mubr.f32.mxu0 0.0
        %1433 = vmatmul.mubr.f32.gmra.mrb[0].mxu0 %v476
        %v1434 = vpop.f32.mrb[0].mxu0
        %v1435 = vadd.f32 0.0, %v1434
        %v1436 = vpop.f32.mrb[0].mxu0
        %1437 = vmatprep.mubr.f32.mxu0 0.0
        %1438 = vmatmul.mubr.f32.gmra.mrb[0].mxu0 %v479
        %v1439 = vpop.f32.mrb[0].mxu0
        %v1440 = vadd.f32 0.0, %v1439
        %v1441 = vpop.f32.mrb[0].mxu0
        %1442 = vmatprep.mubr.f32.mxu0 0.0
        %1443 = vmatmul.mubr.f32.gmra.mrb[0].mxu0 %v482
        %v1444 = vpop.f32.mrb[0].mxu0
        %v1445 = vadd.f32 0.0, %v1444
        %v1446 = vpop.f32.mrb[0].mxu0
        %1447 = vmatprep.mubr.f32.mxu0 0.0
        %1448 = vmatmul.mubr.f32.gmra.mrb[0].mxu0 %v485
        %v1449 = vpop.f32.mrb[0].mxu0
        %v1450 = vadd.f32 0.0, %v1449
        %v1451 = vpop.f32.mrb[0].mxu0
        %1452 = vdwg.mxu0
        %v1453 = vmul.f32 %v197, %v220
        %v1454 = vmul.f32 %v198, %v221
        %v1455 = vmul.f32 %v197, %v222
        %v1456 = vmul.f32 %v198, %v223
        %v1457 = vmul.f32 %v197, %v224
        %v1458 = vmul.f32 %v198, %v225
        %v1459 = vsel %vm226, %v1453, 0.0
        %1460 = vadd.xlane.f32.xlu0 %v1459
        %v1461 = vpop.xlane.xlu0 %1460
        %v1462 = vsel %vm226, %v1454, 0.0
        %1463 = vadd.xlane.f32.xlu0 %v1462
        %v1464 = vpop.xlane.xlu0 %1463
        %v1465 = vsel %vm226, %v1455, 0.0
        %1466 = vadd.xlane.f32.xlu0 %v1465
        %v1467 = vpop.xlane.xlu0 %1466
        %v1468 = vsel %vm226, %v1456, 0.0
        %1469 = vadd.xlane.f32.xlu0 %v1468
        %v1470 = vpop.xlane.xlu0 %1469
        %v1471 = vsel %vm226, %v1457, 0.0
        %1472 = vadd.xlane.f32.xlu0 %v1471
        %v1473 = vpop.xlane.xlu0 %1472
        %v1474 = vsel %vm226, %v1458, 0.0
        %1475 = vadd.xlane.f32.xlu0 %v1474
        %v1476 = vpop.xlane.xlu0 %1475
        %v1477 = vadd.f32 %v1461, %v1425
        %v1478 = vadd.f32 %v1464, %v1430
        %v1479 = vadd.f32 %v1467, %v1435
        %v1480 = vadd.f32 %v1470, %v1440
        %v1481 = vadd.f32 %v1473, %v1445
        %v1482 = vadd.f32 %v1476, %v1450
        %vm1483 = vcmp.gt.f32.partialorder %v1477, 0.0
        %vm1484 = vcmp.gt.f32.partialorder %v1478, 0.0
        %vm1485 = vcmp.gt.f32.partialorder %v1479, 0.0
        %vm1486 = vcmp.gt.f32.partialorder %v1480, 0.0
        %vm1487 = vcmp.gt.f32.partialorder %v1481, 0.0
        %vm1488 = vcmp.gt.f32.partialorder %v1482, 0.0
        %v1489 = vmul.f32 %v1477, 0.2
        %v1490 = vmul.f32 %v1478, 0.2
        %v1491 = vmul.f32 %v1479, 0.2
        %v1492 = vmul.f32 %v1480, 0.2
        %v1493 = vmul.f32 %v1481, 0.2
        %v1494 = vmul.f32 %v1482, 0.2
        %v1495 = vsel %vm1483, %v1477, %v1489
        %v1496 = vsel %vm1484, %v1478, %v1490
        %v1497 = vsel %vm1485, %v1479, %v1491
        %v1498 = vsel %vm1486, %v1480, %v1492
        %v1499 = vsel %vm1487, %v1481, %v1493
        %v1500 = vsel %vm1488, %v1482, %v1494
        %v1501 = vld [vmem:[%s191 + $0x60] sm:$0xff]
        %v1502 = vld [vmem:[%s191 + $0x68] sm:$0xff]
        %v1503 = vld [vmem:[%s191 + $0x70] sm:$0xff]
        %v1504 = vld [vmem:[%s191 + $0x78] sm:$0xff]
        %v1505 = vld [vmem:[%s191 + $0x80] sm:$0xff]
        %v1506 = vld [vmem:[%s191 + $0x88] sm:$0xff]
        %v1507 = vadd.f32 %v1495, %v1501
        %v1508 = vadd.f32 %v1496, %v1502
        %v1509 = vadd.f32 %v1497, %v1503
        %v1510 = vadd.f32 %v1498, %v1504
        %v1511 = vadd.f32 %v1499, %v1505
        %v1512 = vadd.f32 %v1500, %v1506
        %v1513 = vsel %vm642, %v1507, -inf
        %1514 = vmax.xlane.f32.xlu0 %v1513
        %v1515 = vpop.xlane.xlu0 %1514
        %v1516 = vsel %vm642, %v1508, -inf
        %1517 = vmax.xlane.f32.xlu0 %v1516
        %v1518 = vpop.xlane.xlu0 %1517
        %v1519 = vsel %vm642, %v1509, -inf
        %1520 = vmax.xlane.f32.xlu0 %v1519
        %v1521 = vpop.xlane.xlu0 %1520
        %v1522 = vsel %vm642, %v1510, -inf
        %1523 = vmax.xlane.f32.xlu0 %v1522
        %v1524 = vpop.xlane.xlu0 %1523
        %v1525 = vsel %vm642, %v1511, -inf
        %1526 = vmax.xlane.f32.xlu0 %v1525
        %v1527 = vpop.xlane.xlu0 %1526
        %v1528 = vsel %vm642, %v1512, -inf
        %1529 = vmax.xlane.f32.xlu0 %v1528
        %v1530 = vpop.xlane.xlu0 %1529
        %v1531 = vsub.f32 %v1507, %v1515
        %v1532 = vsub.f32 %v1508, %v1518
        %v1533 = vsub.f32 %v1509, %v1521
        %v1534 = vsub.f32 %v1510, %v1524
        %v1535 = vsub.f32 %v1511, %v1527
        %v1536 = vsub.f32 %v1512, %v1530
        %v1537 = vmul.f32 %v1531, 1.442695
        %v1538 = vpow.pop %v1537
        %v1539 = vmul.f32 %v1532, 1.442695
        %v1540 = vpow.pop %v1539
        %v1541 = vmul.f32 %v1533, 1.442695
        %v1542 = vpow.pop %v1541
        %v1543 = vmul.f32 %v1534, 1.442695
        %v1544 = vpow.pop %v1543
        %v1545 = vmul.f32 %v1535, 1.442695
        %v1546 = vpow.pop %v1545
        %v1547 = vmul.f32 %v1536, 1.442695
        %v1548 = vpow.pop %v1547
        %v1549 = vsel %vm642, %v1538, 0.0
        %1550 = vadd.xlane.f32.xlu0 %v1549
        %v1551 = vpop.xlane.xlu0 %1550
        %v1552 = vsel %vm642, %v1540, 0.0
        %1553 = vadd.xlane.f32.xlu0 %v1552
        %v1554 = vpop.xlane.xlu0 %1553
        %v1555 = vsel %vm642, %v1542, 0.0
        %1556 = vadd.xlane.f32.xlu0 %v1555
        %v1557 = vpop.xlane.xlu0 %1556
        %v1558 = vsel %vm642, %v1544, 0.0
        %1559 = vadd.xlane.f32.xlu0 %v1558
        %v1560 = vpop.xlane.xlu0 %1559
        %v1561 = vsel %vm642, %v1546, 0.0
        %1562 = vadd.xlane.f32.xlu0 %v1561
        %v1563 = vpop.xlane.xlu0 %1562
        %v1564 = vsel %vm642, %v1548, 0.0
        %1565 = vadd.xlane.f32.xlu0 %v1564
        %v1566 = vpop.xlane.xlu0 %1565
        %v1567 = vrcp.pop %v1551
        %v1568 = vrcp.pop %v1554
        %v1569 = vrcp.pop %v1557
        %v1570 = vrcp.pop %v1560
        %v1571 = vrcp.pop %v1563
        %v1572 = vrcp.pop %v1566
        %v1573 = vmul.f32 %v1567, 0.33333334
        %v1574 = vmul.f32 %v1568, 0.33333334
        %v1575 = vmul.f32 %v1569, 0.33333334
        %v1576 = vmul.f32 %v1570, 0.33333334
        %v1577 = vmul.f32 %v1571, 0.33333334
        %v1578 = vmul.f32 %v1572, 0.33333334
        %v1579 = vmul.f32 %v1538, %v1573
        %v1580 = vmul.f32 %v1540, %v1574
        %v1581 = vmul.f32 %v1542, %v1575
        %v1582 = vmul.f32 %v1544, %v1576
        %v1583 = vmul.f32 %v1546, %v1577
        %v1584 = vmul.f32 %v1548, %v1578
        %v1586 = vsel %vm642, %v1579, 0
        %v1589 = vsel %vm642, %v1580, 0
        %v1592 = vsel %vm642, %v1581, 0
        %v1595 = vsel %vm642, %v1582, 0
        %v1598 = vsel %vm642, %v1583, 0
        %v1601 = vsel %vm642, %v1584, 0
        %1603 = vmatprep.subr.mxu0 %v344
        %1604 = vmatpush1.msra.mxu0 %v342
        %1605 = vmatprep.subr.mxu0 %v350
        %1606 = vmatpush1.msra.mxu0 %v348
        %1607 = vmatprep.subr.mxu0 0.0
        %1608 = vmatpush1.msra.mxu0 0.0
        %1609 = vmatprep.subr.mxu0 0.0
        %1610 = vmatpush1.msra.mxu0 0.0
        %1611 = vmatprep.subr.mxu0 0.0
        %1612 = vmatpush1.msra.mxu0 0.0
        %1613 = vmatprep.subr.mxu0 0.0
        %1614 = vmatpush1.msra.mxu0 0.0
        %1615 = vmatprep.subr.mxu0 0.0
        %1616 = vmatpush1.msra.mxu0 0.0
        %1617 = vmatprep.subr.mxu0 0.0
        %1618 = vmatpush1.msra.mxu0 0.0
        %1619 = vmatprep.subr.mxu0 0.0
        %1620 = vmatpush1.msra.mxu0 0.0
        %1621 = vmatprep.subr.mxu0 0.0
        %1622 = vmatpush1.msra.mxu0 0.0
        %1623 = vmatprep.subr.mxu0 0.0
        %1624 = vmatpush1.msra.mxu0 0.0
        %1625 = vmatprep.subr.mxu0 0.0
        %1626 = vmatpush1.msra.mxu0 0.0
        %1627 = vmatprep.subr.mxu0 0.0
        %1628 = vmatpush1.msra.mxu0 0.0
        %1629 = vmatprep.subr.mxu0 0.0
        %1630 = vmatpush1.msra.mxu0 0.0
        %1631 = vmatprep.subr.mxu0 0.0
        %1632 = vmatpush1.msra.mxu0 0.0
        %1633 = vmatprep.subr.mxu0 0.0
        %1634 = vmatpush1.msra.mxu0 0.0
        %1635 = vmatprep.subr.mxu0 0.0
        %1636 = vmatpush1.msra.mxu0 0.0
        %1637 = vmatprep.subr.mxu0 0.0
        %1638 = vmatpush1.msra.mxu0 0.0
        %1639 = vmatprep.subr.mxu0 0.0
        %1640 = vmatpush1.msra.mxu0 0.0
        %1641 = vmatprep.subr.mxu0 0.0
        %1642 = vmatpush1.msra.mxu0 0.0
        %1643 = vmatprep.subr.mxu0 0.0
        %1644 = vmatpush1.msra.mxu0 0.0
        %1645 = vmatprep.subr.mxu0 0.0
        %1646 = vmatpush1.msra.mxu0 0.0
        %1647 = vmatprep.subr.mxu0 0.0
        %1648 = vmatpush1.msra.mxu0 0.0
        %1649 = vmatprep.subr.mxu0 0.0
        %1650 = vmatpush1.msra.mxu0 0.0
        %1651 = vmatprep.subr.mxu0 0.0
        %1652 = vmatpush1.msra.mxu0 0.0
        %1653 = vmatprep.subr.mxu0 0.0
        %1654 = vmatpush1.msra.mxu0 0.0
        %1655 = vmatprep.subr.mxu0 0.0
        %1656 = vmatpush1.msra.mxu0 0.0
        %1657 = vmatprep.subr.mxu0 0.0
        %1658 = vmatpush1.msra.mxu0 0.0
        %1659 = vmatprep.subr.mxu0 0.0
        %1660 = vmatpush1.msra.mxu0 0.0
        %1661 = vmatprep.subr.mxu0 0.0
        %1662 = vmatpush1.msra.mxu0 0.0
        %1663 = vmatprep.subr.mxu0 0.0
        %1664 = vmatpush1.msra.mxu0 0.0
        %1665 = vmatprep.subr.mxu0 0.0
        %1666 = vmatpush1.msra.mxu0 0.0
        %1667 = vmatprep.mubr.f32.mxu0 0.0
        %1668 = vmatmul.mubr.f32.gmra.mrb[0].mxu0 %v1586
        %v1669 = vpop.f32.mrb[0].mxu0
        %v1670 = vadd.f32 0.0, %v1669
        %v1671 = vpop.f32.mrb[0].mxu0
        %1672 = vmatprep.mubr.f32.mxu0 0.0
        %1673 = vmatmul.mubr.f32.gmra.mrb[0].mxu0 %v1589
        %v1674 = vpop.f32.mrb[0].mxu0
        %v1675 = vadd.f32 0.0, %v1674
        %v1676 = vpop.f32.mrb[0].mxu0
        %1677 = vmatprep.mubr.f32.mxu0 0.0
        %1678 = vmatmul.mubr.f32.gmra.mrb[0].mxu0 %v1592
        %v1679 = vpop.f32.mrb[0].mxu0
        %v1680 = vpop.f32.mrb[0].mxu0
        %v1681 = vadd.f32 0.0, %v1680
        %1682 = vmatprep.mubr.f32.mxu0 0.0
        %1683 = vmatmul.mubr.f32.gmra.mrb[0].mxu0 %v1595
        %v1684 = vpop.f32.mrb[0].mxu0
        %v1685 = vpop.f32.mrb[0].mxu0
        %v1686 = vadd.f32 0.0, %v1685
        %1687 = vmatprep.mubr.f32.mxu0 0.0
        %1688 = vmatmul.mubr.f32.gmra.mrb[0].mxu0 %v1598
        %v1689 = vpop.f32.mrb[0].mxu0
        %v1690 = vpop.f32.mrb[0].mxu0
        %1691 = vmatprep.mubr.f32.mxu0 0.0
        %1692 = vmatmul.mubr.f32.gmra.mrb[0].mxu0 %v1601
        %v1693 = vpop.f32.mrb[0].mxu0
        %v1694 = vpop.f32.mrb[0].mxu0
        %1695 = vdwg.mxu0
        %1696 = vmatprep.subr.mxu0 0.0
        %1697 = vmatpush1.msra.mxu0 %v451
        %1698 = vmatprep.subr.mxu0 0.0
        %1699 = vmatpush1.msra.mxu0 %v456
        %1700 = vmatprep.subr.mxu0 0.0
        %1701 = vmatpush1.msra.mxu0 0.0
        %1702 = vmatprep.subr.mxu0 0.0
        %1703 = vmatpush1.msra.mxu0 0.0
        %1704 = vmatprep.subr.mxu0 0.0
        %1705 = vmatpush1.msra.mxu0 0.0
        %1706 = vmatprep.subr.mxu0 0.0
        %1707 = vmatpush1.msra.mxu0 0.0
        %1708 = vmatprep.subr.mxu0 0.0
        %1709 = vmatpush1.msra.mxu0 0.0
        %1710 = vmatprep.subr.mxu0 0.0
        %1711 = vmatpush1.msra.mxu0 0.0
        %1712 = vmatprep.subr.mxu0 0.0
        %1713 = vmatpush1.msra.mxu0 0.0
        %1714 = vmatprep.subr.mxu0 0.0
        %1715 = vmatpush1.msra.mxu0 0.0
        %1716 = vmatprep.subr.mxu0 0.0
        %1717 = vmatpush1.msra.mxu0 0.0
        %1718 = vmatprep.subr.mxu0 0.0
        %1719 = vmatpush1.msra.mxu0 0.0
        %1720 = vmatprep.subr.mxu0 0.0
        %1721 = vmatpush1.msra.mxu0 0.0
        %1722 = vmatprep.subr.mxu0 0.0
        %1723 = vmatpush1.msra.mxu0 0.0
        %1724 = vmatprep.subr.mxu0 0.0
        %1725 = vmatpush1.msra.mxu0 0.0
        %1726 = vmatprep.subr.mxu0 0.0
        %1727 = vmatpush1.msra.mxu0 0.0
        %1728 = vmatprep.subr.mxu0 0.0
        %1729 = vmatpush1.msra.mxu0 0.0
        %1730 = vmatprep.subr.mxu0 0.0
        %1731 = vmatpush1.msra.mxu0 0.0
        %1732 = vmatprep.subr.mxu0 0.0
        %1733 = vmatpush1.msra.mxu0 0.0
        %1734 = vmatprep.subr.mxu0 0.0
        %1735 = vmatpush1.msra.mxu0 0.0
        %1736 = vmatprep.subr.mxu0 0.0
        %1737 = vmatpush1.msra.mxu0 0.0
        %1738 = vmatprep.subr.mxu0 0.0
        %1739 = vmatpush1.msra.mxu0 0.0
        %1740 = vmatprep.subr.mxu0 0.0
        %1741 = vmatpush1.msra.mxu0 0.0
        %1742 = vmatprep.subr.mxu0 0.0
        %1743 = vmatpush1.msra.mxu0 0.0
        %1744 = vmatprep.subr.mxu0 0.0
        %1745 = vmatpush1.msra.mxu0 0.0
        %1746 = vmatprep.subr.mxu0 0.0
        %1747 = vmatpush1.msra.mxu0 0.0
        %1748 = vmatprep.subr.mxu0 0.0
        %1749 = vmatpush1.msra.mxu0 0.0
        %1750 = vmatprep.subr.mxu0 0.0
        %1751 = vmatpush1.msra.mxu0 0.0
        %1752 = vmatprep.subr.mxu0 0.0
        %1753 = vmatpush1.msra.mxu0 0.0
        %1754 = vmatprep.subr.mxu0 0.0
        %1755 = vmatpush1.msra.mxu0 0.0
        %1756 = vmatprep.subr.mxu0 0.0
        %1757 = vmatpush1.msra.mxu0 0.0
        %1758 = vmatprep.subr.mxu0 0.0
        %1759 = vmatpush1.msra.mxu0 0.0
        %1760 = vmatprep.mubr.f32.mxu0 0.0
        %1761 = vmatmul.mubr.f32.gmra.mrb[0].mxu0 %v1586
        %v1762 = vpop.f32.mrb[0].mxu0
        %v1763 = vpop.f32.mrb[0].mxu0
        %1764 = vmatprep.mubr.f32.mxu0 0.0
        %1765 = vmatmul.mubr.f32.gmra.mrb[0].mxu0 %v1589
        %v1766 = vpop.f32.mrb[0].mxu0
        %v1767 = vpop.f32.mrb[0].mxu0
        %1768 = vmatprep.mubr.f32.mxu0 0.0
        %1769 = vmatmul.mubr.f32.gmra.mrb[0].mxu0 %v1592
        %v1770 = vpop.f32.mrb[0].mxu0
        %v1771 = vpop.f32.mrb[0].mxu0
        %1772 = vmatprep.mubr.f32.mxu0 0.0
        %1773 = vmatmul.mubr.f32.gmra.mrb[0].mxu0 %v1595
        %v1774 = vpop.f32.mrb[0].mxu0
        %v1775 = vpop.f32.mrb[0].mxu0
        %1776 = vmatprep.mubr.f32.mxu0 0.0
        %1777 = vmatmul.mubr.f32.gmra.mrb[0].mxu0 %v1598
        %v1778 = vpop.f32.mrb[0].mxu0
        %v1779 = vadd.f32 0.0, %v1778
        %v1780 = vpop.f32.mrb[0].mxu0
        %1781 = vmatprep.mubr.f32.mxu0 0.0
        %1782 = vmatmul.mubr.f32.gmra.mrb[0].mxu0 %v1601
        %v1783 = vpop.f32.mrb[0].mxu0
        %v1784 = vadd.f32 0.0, %v1783
        %v1785 = vpop.f32.mrb[0].mxu0
        %1786 = vdwg.mxu0
        %v1787 = vadd.f32 %v1670, %v1681
        %v1788 = vadd.f32 %v1675, %v1686
        %v1789 = vadd.f32 %v1787, %v1779
        %v1790 = vadd.f32 %v1788, %v1784
        %v1791 = vadd.f32 %v1789, %v213
        %v1792 = vadd.f32 %v1790, %v213
        %1793 = vmatprep.subr.mxu0 0.0
        %1794 = vmatpush1.xpose.msra.mxu0 %v246
        %1795 = vmatprep.subr.mxu0 0.0
        %1796 = vmatpush1.xpose.msra.mxu0 %v249
        %1797 = vmatprep.subr.mxu0 0.0
        %1798 = vmatpush1.xpose.msra.mxu0 0.0
        %1799 = vmatprep.subr.mxu0 0.0
        %1800 = vmatpush1.xpose.msra.mxu0 0.0
        %1801 = vmatprep.subr.mxu0 0.0
        %1802 = vmatpush1.xpose.msra.mxu0 0.0
        %1803 = vmatprep.subr.mxu0 0.0
        %1804 = vmatpush1.xpose.msra.mxu0 0.0
        %1805 = vmatprep.subr.mxu0 0.0
        %1806 = vmatpush1.xpose.msra.mxu0 0.0
        %1807 = vmatprep.subr.mxu0 0.0
        %1808 = vmatpush1.xpose.msra.mxu0 0.0
        %1809 = vmatprep.subr.mxu0 0.0
        %1810 = vmatpush1.xpose.msra.mxu0 0.0
        %1811 = vmatprep.subr.mxu0 0.0
        %1812 = vmatpush1.xpose.msra.mxu0 0.0
        %1813 = vmatprep.subr.mxu0 0.0
        %1814 = vmatpush1.xpose.msra.mxu0 0.0
        %1815 = vmatprep.subr.mxu0 0.0
        %1816 = vmatpush1.xpose.msra.mxu0 0.0
        %1817 = vmatprep.subr.mxu0 0.0
        %1818 = vmatpush1.xpose.msra.mxu0 0.0
        %1819 = vmatprep.subr.mxu0 0.0
        %1820 = vmatpush1.xpose.msra.mxu0 0.0
        %1821 = vmatprep.subr.mxu0 0.0
        %1822 = vmatpush1.xpose.msra.mxu0 0.0
        %1823 = vmatprep.subr.mxu0 0.0
        %1824 = vmatpush1.xpose.msra.mxu0 0.0
        %1825 = vmatprep.subr.mxu0 0.0
        %1826 = vmatpush1.xpose.msra.mxu0 0.0
        %1827 = vmatprep.subr.mxu0 0.0
        %1828 = vmatpush1.xpose.msra.mxu0 0.0
        %1829 = vmatprep.subr.mxu0 0.0
        %1830 = vmatpush1.xpose.msra.mxu0 0.0
        %1831 = vmatprep.subr.mxu0 0.0
        %1832 = vmatpush1.xpose.msra.mxu0 0.0
        %1833 = vmatprep.subr.mxu0 0.0
        %1834 = vmatpush1.xpose.msra.mxu0 0.0
        %1835 = vmatprep.subr.mxu0 0.0
        %1836 = vmatpush1.xpose.msra.mxu0 0.0
        %1837 = vmatprep.subr.mxu0 0.0
        %1838 = vmatpush1.xpose.msra.mxu0 0.0
        %1839 = vmatprep.subr.mxu0 0.0
        %1840 = vmatpush1.xpose.msra.mxu0 0.0
        %1841 = vmatprep.subr.mxu0 0.0
        %1842 = vmatpush1.xpose.msra.mxu0 0.0
        %1843 = vmatprep.subr.mxu0 0.0
        %1844 = vmatpush1.xpose.msra.mxu0 0.0
        %1845 = vmatprep.subr.mxu0 0.0
        %1846 = vmatpush1.xpose.msra.mxu0 0.0
        %1847 = vmatprep.subr.mxu0 0.0
        %1848 = vmatpush1.xpose.msra.mxu0 0.0
        %1849 = vmatprep.subr.mxu0 0.0
        %1850 = vmatpush1.xpose.msra.mxu0 0.0
        %1851 = vmatprep.subr.mxu0 0.0
        %1852 = vmatpush1.xpose.msra.mxu0 0.0
        %1853 = vmatprep.subr.mxu0 0.0
        %1854 = vmatpush1.xpose.msra.mxu0 0.0
        %1855 = vmatprep.subr.mxu0 0.0
        %1856 = vmatpush1.xpose.msra.mxu0 0.0
        %1857 = vmatprep.mubr.f32.mxu0 0.0
        %1858 = vmatmul.mubr.f32.gmra.mrb[0].mxu0 %v470
        %v1859 = vpop.f32.mrb[0].mxu0
        %v1860 = vadd.f32 0.0, %v1859
        %v1861 = vpop.f32.mrb[0].mxu0
        %1862 = vmatprep.mubr.f32.mxu0 0.0
        %1863 = vmatmul.mubr.f32.gmra.mrb[0].mxu0 %v473
        %v1864 = vpop.f32.mrb[0].mxu0
        %v1865 = vadd.f32 0.0, %v1864
        %v1866 = vpop.f32.mrb[0].mxu0
        %1867 = vmatprep.mubr.f32.mxu0 0.0
        %1868 = vmatmul.mubr.f32.gmra.mrb[0].mxu0 %v476
        %v1869 = vpop.f32.mrb[0].mxu0
        %v1870 = vadd.f32 0.0, %v1869
        %v1871 = vpop.f32.mrb[0].mxu0
        %1872 = vmatprep.mubr.f32.mxu0 0.0
        %1873 = vmatmul.mubr.f32.gmra.mrb[0].mxu0 %v479
        %v1874 = vpop.f32.mrb[0].mxu0
        %v1875 = vadd.f32 0.0, %v1874
        %v1876 = vpop.f32.mrb[0].mxu0
        %1877 = vmatprep.mubr.f32.mxu0 0.0
        %1878 = vmatmul.mubr.f32.gmra.mrb[0].mxu0 %v482
        %v1879 = vpop.f32.mrb[0].mxu0
        %v1880 = vadd.f32 0.0, %v1879
        %v1881 = vpop.f32.mrb[0].mxu0
        %1882 = vmatprep.mubr.f32.mxu0 0.0
        %1883 = vmatmul.mubr.f32.gmra.mrb[0].mxu0 %v485
        %v1884 = vpop.f32.mrb[0].mxu0
        %v1885 = vadd.f32 0.0, %v1884
        %v1886 = vpop.f32.mrb[0].mxu0
        %1887 = vdwg.mxu0
        %v1888 = vmul.f32 %v199, %v220
        %v1889 = vmul.f32 %v200, %v221
        %v1890 = vmul.f32 %v199, %v222
        %v1891 = vmul.f32 %v200, %v223
        %v1892 = vmul.f32 %v199, %v224
        %v1893 = vmul.f32 %v200, %v225
        %v1894 = vsel %vm226, %v1888, 0.0
        %1895 = vadd.xlane.f32.xlu0 %v1894
        %v1896 = vpop.xlane.xlu0 %1895
        %v1897 = vsel %vm226, %v1889, 0.0
        %1898 = vadd.xlane.f32.xlu0 %v1897
        %v1899 = vpop.xlane.xlu0 %1898
        %v1900 = vsel %vm226, %v1890, 0.0
        %1901 = vadd.xlane.f32.xlu0 %v1900
        %v1902 = vpop.xlane.xlu0 %1901
        %v1903 = vsel %vm226, %v1891, 0.0
        %1904 = vadd.xlane.f32.xlu0 %v1903
        %v1905 = vpop.xlane.xlu0 %1904
        %v1906 = vsel %vm226, %v1892, 0.0
        %1907 = vadd.xlane.f32.xlu0 %v1906
        %v1908 = vpop.xlane.xlu0 %1907
        %v1909 = vsel %vm226, %v1893, 0.0
        %1910 = vadd.xlane.f32.xlu0 %v1909
        %v1911 = vpop.xlane.xlu0 %1910
        %v1912 = vadd.f32 %v1896, %v1860
        %v1913 = vadd.f32 %v1899, %v1865
        %v1914 = vadd.f32 %v1902, %v1870
        %v1915 = vadd.f32 %v1905, %v1875
        %v1916 = vadd.f32 %v1908, %v1880
        %v1917 = vadd.f32 %v1911, %v1885
        %vm1918 = vcmp.gt.f32.partialorder %v1912, 0.0
        %vm1919 = vcmp.gt.f32.partialorder %v1913, 0.0
        %vm1920 = vcmp.gt.f32.partialorder %v1914, 0.0
        %vm1921 = vcmp.gt.f32.partialorder %v1915, 0.0
        %vm1922 = vcmp.gt.f32.partialorder %v1916, 0.0
        %vm1923 = vcmp.gt.f32.partialorder %v1917, 0.0
        %v1924 = vmul.f32 %v1912, 0.2
        %v1925 = vmul.f32 %v1913, 0.2
        %v1926 = vmul.f32 %v1914, 0.2
        %v1927 = vmul.f32 %v1915, 0.2
        %v1928 = vmul.f32 %v1916, 0.2
        %v1929 = vmul.f32 %v1917, 0.2
        %v1930 = vsel %vm1918, %v1912, %v1924
        %v1931 = vsel %vm1919, %v1913, %v1925
        %v1932 = vsel %vm1920, %v1914, %v1926
        %v1933 = vsel %vm1921, %v1915, %v1927
        %v1934 = vsel %vm1922, %v1916, %v1928
        %v1935 = vsel %vm1923, %v1917, %v1929
        %v1936 = vld [vmem:[%s191 + $0x90] sm:$0xff]
        %v1937 = vld [vmem:[%s191 + $0x98] sm:$0xff]
        %v1938 = vld [vmem:[%s191 + $0xa0] sm:$0xff]
        %v1939 = vld [vmem:[%s191 + $0xa8] sm:$0xff]
        %v1940 = vld [vmem:[%s191 + $0xb0] sm:$0xff]
        %v1941 = vld [vmem:[%s191 + $0xb8] sm:$0xff]
        %v1942 = vadd.f32 %v1930, %v1936
        %v1943 = vadd.f32 %v1931, %v1937
        %v1944 = vadd.f32 %v1932, %v1938
        %v1945 = vadd.f32 %v1933, %v1939
        %v1946 = vadd.f32 %v1934, %v1940
        %v1947 = vadd.f32 %v1935, %v1941
        %v1948 = vsel %vm642, %v1942, -inf
        %1949 = vmax.xlane.f32.xlu0 %v1948
        %v1950 = vpop.xlane.xlu0 %1949
        %v1951 = vsel %vm642, %v1943, -inf
        %1952 = vmax.xlane.f32.xlu0 %v1951
        %v1953 = vpop.xlane.xlu0 %1952
        %v1954 = vsel %vm642, %v1944, -inf
        %1955 = vmax.xlane.f32.xlu0 %v1954
        %v1956 = vpop.xlane.xlu0 %1955
        %v1957 = vsel %vm642, %v1945, -inf
        %1958 = vmax.xlane.f32.xlu0 %v1957
        %v1959 = vpop.xlane.xlu0 %1958
        %v1960 = vsel %vm642, %v1946, -inf
        %1961 = vmax.xlane.f32.xlu0 %v1960
        %v1962 = vpop.xlane.xlu0 %1961
        %v1963 = vsel %vm642, %v1947, -inf
        %1964 = vmax.xlane.f32.xlu0 %v1963
        %v1965 = vpop.xlane.xlu0 %1964
        %v1966 = vsub.f32 %v1942, %v1950
        %v1967 = vsub.f32 %v1943, %v1953
        %v1968 = vsub.f32 %v1944, %v1956
        %v1969 = vsub.f32 %v1945, %v1959
        %v1970 = vsub.f32 %v1946, %v1962
        %v1971 = vsub.f32 %v1947, %v1965
        %v1972 = vmul.f32 %v1966, 1.442695
        %v1973 = vpow.pop %v1972
        %v1974 = vmul.f32 %v1967, 1.442695
        %v1975 = vpow.pop %v1974
        %v1976 = vmul.f32 %v1968, 1.442695
        %v1977 = vpow.pop %v1976
        %v1978 = vmul.f32 %v1969, 1.442695
        %v1979 = vpow.pop %v1978
        %v1980 = vmul.f32 %v1970, 1.442695
        %v1981 = vpow.pop %v1980
        %v1982 = vmul.f32 %v1971, 1.442695
        %v1983 = vpow.pop %v1982
        %v1984 = vsel %vm642, %v1973, 0.0
        %1985 = vadd.xlane.f32.xlu0 %v1984
        %v1986 = vpop.xlane.xlu0 %1985
        %v1987 = vsel %vm642, %v1975, 0.0
        %1988 = vadd.xlane.f32.xlu0 %v1987
        %v1989 = vpop.xlane.xlu0 %1988
        %v1990 = vsel %vm642, %v1977, 0.0
        %1991 = vadd.xlane.f32.xlu0 %v1990
        %v1992 = vpop.xlane.xlu0 %1991
        %v1993 = vsel %vm642, %v1979, 0.0
        %1994 = vadd.xlane.f32.xlu0 %v1993
        %v1995 = vpop.xlane.xlu0 %1994
        %v1996 = vsel %vm642, %v1981, 0.0
        %1997 = vadd.xlane.f32.xlu0 %v1996
        %v1998 = vpop.xlane.xlu0 %1997
        %v1999 = vsel %vm642, %v1983, 0.0
        %2000 = vadd.xlane.f32.xlu0 %v1999
        %v2001 = vpop.xlane.xlu0 %2000
        %v2002 = vrcp.pop %v1986
        %v2003 = vrcp.pop %v1989
        %v2004 = vrcp.pop %v1992
        %v2005 = vrcp.pop %v1995
        %v2006 = vrcp.pop %v1998
        %v2007 = vrcp.pop %v2001
        %v2008 = vmul.f32 %v2002, 0.33333334
        %v2009 = vmul.f32 %v2003, 0.33333334
        %v2010 = vmul.f32 %v2004, 0.33333334
        %v2011 = vmul.f32 %v2005, 0.33333334
        %v2012 = vmul.f32 %v2006, 0.33333334
        %v2013 = vmul.f32 %v2007, 0.33333334
        %v2014 = vmul.f32 %v1973, %v2008
        %v2015 = vmul.f32 %v1975, %v2009
        %v2016 = vmul.f32 %v1977, %v2010
        %v2017 = vmul.f32 %v1979, %v2011
        %v2018 = vmul.f32 %v1981, %v2012
        %v2019 = vmul.f32 %v1983, %v2013
        %v2021 = vsel %vm642, %v2014, 0
        %v2024 = vsel %vm642, %v2015, 0
        %v2027 = vsel %vm642, %v2016, 0
        %v2030 = vsel %vm642, %v2017, 0
        %v2033 = vsel %vm642, %v2018, 0
        %v2036 = vsel %vm642, %v2019, 0
        %2038 = vmatprep.subr.mxu0 %v356
        %2039 = vmatpush1.msra.mxu0 %v354
        %2040 = vmatprep.subr.mxu0 %v362
        %2041 = vmatpush1.msra.mxu0 %v360
        %2042 = vmatprep.subr.mxu0 0.0
        %2043 = vmatpush1.msra.mxu0 0.0
        %2044 = vmatprep.subr.mxu0 0.0
        %2045 = vmatpush1.msra.mxu0 0.0
        %2046 = vmatprep.subr.mxu0 0.0
        %2047 = vmatpush1.msra.mxu0 0.0
        %2048 = vmatprep.subr.mxu0 0.0
        %2049 = vmatpush1.msra.mxu0 0.0
        %2050 = vmatprep.subr.mxu0 0.0
        %2051 = vmatpush1.msra.mxu0 0.0
        %2052 = vmatprep.subr.mxu0 0.0
        %2053 = vmatpush1.msra.mxu0 0.0
        %2054 = vmatprep.subr.mxu0 0.0
        %2055 = vmatpush1.msra.mxu0 0.0
        %2056 = vmatprep.subr.mxu0 0.0
        %2057 = vmatpush1.msra.mxu0 0.0
        %2058 = vmatprep.subr.mxu0 0.0
        %2059 = vmatpush1.msra.mxu0 0.0
        %2060 = vmatprep.subr.mxu0 0.0
        %2061 = vmatpush1.msra.mxu0 0.0
        %2062 = vmatprep.subr.mxu0 0.0
        %2063 = vmatpush1.msra.mxu0 0.0
        %2064 = vmatprep.subr.mxu0 0.0
        %2065 = vmatpush1.msra.mxu0 0.0
        %2066 = vmatprep.subr.mxu0 0.0
        %2067 = vmatpush1.msra.mxu0 0.0
        %2068 = vmatprep.subr.mxu0 0.0
        %2069 = vmatpush1.msra.mxu0 0.0
        %2070 = vmatprep.subr.mxu0 0.0
        %2071 = vmatpush1.msra.mxu0 0.0
        %2072 = vmatprep.subr.mxu0 0.0
        %2073 = vmatpush1.msra.mxu0 0.0
        %2074 = vmatprep.subr.mxu0 0.0
        %2075 = vmatpush1.msra.mxu0 0.0
        %2076 = vmatprep.subr.mxu0 0.0
        %2077 = vmatpush1.msra.mxu0 0.0
        %2078 = vmatprep.subr.mxu0 0.0
        %2079 = vmatpush1.msra.mxu0 0.0
        %2080 = vmatprep.subr.mxu0 0.0
        %2081 = vmatpush1.msra.mxu0 0.0
        %2082 = vmatprep.subr.mxu0 0.0
        %2083 = vmatpush1.msra.mxu0 0.0
        %2084 = vmatprep.subr.mxu0 0.0
        %2085 = vmatpush1.msra.mxu0 0.0
        %2086 = vmatprep.subr.mxu0 0.0
        %2087 = vmatpush1.msra.mxu0 0.0
        %2088 = vmatprep.subr.mxu0 0.0
        %2089 = vmatpush1.msra.mxu0 0.0
        %2090 = vmatprep.subr.mxu0 0.0
        %2091 = vmatpush1.msra.mxu0 0.0
        %2092 = vmatprep.subr.mxu0 0.0
        %2093 = vmatpush1.msra.mxu0 0.0
        %2094 = vmatprep.subr.mxu0 0.0
        %2095 = vmatpush1.msra.mxu0 0.0
        %2096 = vmatprep.subr.mxu0 0.0
        %2097 = vmatpush1.msra.mxu0 0.0
        %2098 = vmatprep.subr.mxu0 0.0
        %2099 = vmatpush1.msra.mxu0 0.0
        %2100 = vmatprep.subr.mxu0 0.0
        %2101 = vmatpush1.msra.mxu0 0.0
        %2102 = vmatprep.mubr.f32.mxu0 0.0
        %2103 = vmatmul.mubr.f32.gmra.mrb[0].mxu0 %v2021
        %v2104 = vpop.f32.mrb[0].mxu0
        %v2105 = vadd.f32 0.0, %v2104
        %v2106 = vpop.f32.mrb[0].mxu0
        %2107 = vmatprep.mubr.f32.mxu0 0.0
        %2108 = vmatmul.mubr.f32.gmra.mrb[0].mxu0 %v2024
        %v2109 = vpop.f32.mrb[0].mxu0
        %v2110 = vadd.f32 0.0, %v2109
        %v2111 = vpop.f32.mrb[0].mxu0
        %2112 = vmatprep.mubr.f32.mxu0 0.0
        %2113 = vmatmul.mubr.f32.gmra.mrb[0].mxu0 %v2027
        %v2114 = vpop.f32.mrb[0].mxu0
        %v2115 = vpop.f32.mrb[0].mxu0
        %v2116 = vadd.f32 0.0, %v2115
        %2117 = vmatprep.mubr.f32.mxu0 0.0
        %2118 = vmatmul.mubr.f32.gmra.mrb[0].mxu0 %v2030
        %v2119 = vpop.f32.mrb[0].mxu0
        %v2120 = vpop.f32.mrb[0].mxu0
        %v2121 = vadd.f32 0.0, %v2120
        %2122 = vmatprep.mubr.f32.mxu0 0.0
        %2123 = vmatmul.mubr.f32.gmra.mrb[0].mxu0 %v2033
        %v2124 = vpop.f32.mrb[0].mxu0
        %v2125 = vpop.f32.mrb[0].mxu0
        %2126 = vmatprep.mubr.f32.mxu0 0.0
        %2127 = vmatmul.mubr.f32.gmra.mrb[0].mxu0 %v2036
        %v2128 = vpop.f32.mrb[0].mxu0
        %v2129 = vpop.f32.mrb[0].mxu0
        %2130 = vdwg.mxu0
        %2131 = vmatprep.subr.mxu0 0.0
        %2132 = vmatpush1.msra.mxu0 %v461
        %2133 = vmatprep.subr.mxu0 0.0
        %2134 = vmatpush1.msra.mxu0 %v466
        %2135 = vmatprep.subr.mxu0 0.0
        %2136 = vmatpush1.msra.mxu0 0.0
        %2137 = vmatprep.subr.mxu0 0.0
        %2138 = vmatpush1.msra.mxu0 0.0
        %2139 = vmatprep.subr.mxu0 0.0
        %2140 = vmatpush1.msra.mxu0 0.0
        %2141 = vmatprep.subr.mxu0 0.0
        %2142 = vmatpush1.msra.mxu0 0.0
        %2143 = vmatprep.subr.mxu0 0.0
        %2144 = vmatpush1.msra.mxu0 0.0
        %2145 = vmatprep.subr.mxu0 0.0
        %2146 = vmatpush1.msra.mxu0 0.0
        %2147 = vmatprep.subr.mxu0 0.0
        %2148 = vmatpush1.msra.mxu0 0.0
        %2149 = vmatprep.subr.mxu0 0.0
        %2150 = vmatpush1.msra.mxu0 0.0
        %2151 = vmatprep.subr.mxu0 0.0
        %2152 = vmatpush1.msra.mxu0 0.0
        %2153 = vmatprep.subr.mxu0 0.0
        %2154 = vmatpush1.msra.mxu0 0.0
        %2155 = vmatprep.subr.mxu0 0.0
        %2156 = vmatpush1.msra.mxu0 0.0
        %2157 = vmatprep.subr.mxu0 0.0
        %2158 = vmatpush1.msra.mxu0 0.0
        %2159 = vmatprep.subr.mxu0 0.0
        %2160 = vmatpush1.msra.mxu0 0.0
        %2161 = vmatprep.subr.mxu0 0.0
        %2162 = vmatpush1.msra.mxu0 0.0
        %2163 = vmatprep.subr.mxu0 0.0
        %2164 = vmatpush1.msra.mxu0 0.0
        %2165 = vmatprep.subr.mxu0 0.0
        %2166 = vmatpush1.msra.mxu0 0.0
        %2167 = vmatprep.subr.mxu0 0.0
        %2168 = vmatpush1.msra.mxu0 0.0
        %2169 = vmatprep.subr.mxu0 0.0
        %2170 = vmatpush1.msra.mxu0 0.0
        %2171 = vmatprep.subr.mxu0 0.0
        %2172 = vmatpush1.msra.mxu0 0.0
        %2173 = vmatprep.subr.mxu0 0.0
        %2174 = vmatpush1.msra.mxu0 0.0
        %2175 = vmatprep.subr.mxu0 0.0
        %2176 = vmatpush1.msra.mxu0 0.0
        %2177 = vmatprep.subr.mxu0 0.0
        %2178 = vmatpush1.msra.mxu0 0.0
        %2179 = vmatprep.subr.mxu0 0.0
        %2180 = vmatpush1.msra.mxu0 0.0
        %2181 = vmatprep.subr.mxu0 0.0
        %2182 = vmatpush1.msra.mxu0 0.0
        %2183 = vmatprep.subr.mxu0 0.0
        %2184 = vmatpush1.msra.mxu0 0.0
        %2185 = vmatprep.subr.mxu0 0.0
        %2186 = vmatpush1.msra.mxu0 0.0
        %2187 = vmatprep.subr.mxu0 0.0
        %2188 = vmatpush1.msra.mxu0 0.0
        %2189 = vmatprep.subr.mxu0 0.0
        %2190 = vmatpush1.msra.mxu0 0.0
        %2191 = vmatprep.subr.mxu0 0.0
        %2192 = vmatpush1.msra.mxu0 0.0
        %2193 = vmatprep.subr.mxu0 0.0
        %2194 = vmatpush1.msra.mxu0 0.0
        %2195 = vmatprep.mubr.f32.mxu0 0.0
        %2196 = vmatmul.mubr.f32.gmra.mrb[0].mxu0 %v2021
        %v2197 = vpop.f32.mrb[0].mxu0
        %v2198 = vpop.f32.mrb[0].mxu0
        %2199 = vmatprep.mubr.f32.mxu0 0.0
        %2200 = vmatmul.mubr.f32.gmra.mrb[0].mxu0 %v2024
        %v2201 = vpop.f32.mrb[0].mxu0
        %v2202 = vpop.f32.mrb[0].mxu0
        %2203 = vmatprep.mubr.f32.mxu0 0.0
        %2204 = vmatmul.mubr.f32.gmra.mrb[0].mxu0 %v2027
        %v2205 = vpop.f32.mrb[0].mxu0
        %v2206 = vpop.f32.mrb[0].mxu0
        %2207 = vmatprep.mubr.f32.mxu0 0.0
        %2208 = vmatmul.mubr.f32.gmra.mrb[0].mxu0 %v2030
        %v2209 = vpop.f32.mrb[0].mxu0
        %v2210 = vpop.f32.mrb[0].mxu0
        %2211 = vmatprep.mubr.f32.mxu0 0.0
        %2212 = vmatmul.mubr.f32.gmra.mrb[0].mxu0 %v2033
        %v2213 = vpop.f32.mrb[0].mxu0
        %v2214 = vadd.f32 0.0, %v2213
        %v2215 = vpop.f32.mrb[0].mxu0
        %2216 = vmatprep.mubr.f32.mxu0 0.0
        %2217 = vmatmul.mubr.f32.gmra.mrb[0].mxu0 %v2036
        %v2218 = vpop.f32.mrb[0].mxu0
        %v2219 = vadd.f32 0.0, %v2218
        %v2220 = vpop.f32.mrb[0].mxu0
        %2221 = vdwg.mxu0
        %v2222 = vadd.f32 %v2105, %v2116
        %v2223 = vadd.f32 %v2110, %v2121
        %v2224 = vadd.f32 %v2222, %v2214
        %v2225 = vadd.f32 %v2223, %v2219
        %v2226 = vadd.f32 %v2224, %v213
        %v2227 = vadd.f32 %v2225, %v213
        %v2228 = vmul.f32 %v193, 0.1
        %v2229 = vmul.f32 %v194, 0.1
        %v2230 = vmul.f32 %v195, 0.1
        %v2231 = vmul.f32 %v196, 0.1
        %v2232 = vmul.f32 %v197, 0.1
        %v2233 = vmul.f32 %v198, 0.1
        %v2234 = vmul.f32 %v199, 0.1
        %v2235 = vmul.f32 %v200, 0.1
        %v2236 = vmul.f32 %v921, 0.9
        %v2237 = vmul.f32 %v922, 0.9
        %v2238 = vmul.f32 %v1356, 0.9
        %v2239 = vmul.f32 %v1357, 0.9
        %v2240 = vmul.f32 %v1791, 0.9
        %v2241 = vmul.f32 %v1792, 0.9
        %v2242 = vmul.f32 %v2226, 0.9
        %v2243 = vmul.f32 %v2227, 0.9
        %v2244 = vadd.f32 %v2228, %v2236
        %v2245 = vadd.f32 %v2229, %v2237
        %v2246 = vadd.f32 %v2230, %v2238
        %v2247 = vadd.f32 %v2231, %v2239
        %v2248 = vadd.f32 %v2232, %v2240
        %v2249 = vadd.f32 %v2233, %v2241
        %v2250 = vadd.f32 %v2234, %v2242
        %v2251 = vadd.f32 %v2235, %v2243
        %v2252 = vmax.f32 %v2244, 0.0
        %v2253 = vmax.f32 %v2245, 0.0
        %v2254 = vmax.f32 %v2246, 0.0
        %v2255 = vmax.f32 %v2247, 0.0
        %v2256 = vmax.f32 %v2248, 0.0
        %v2257 = vmax.f32 %v2249, 0.0
        %v2258 = vmax.f32 %v2250, 0.0
        %v2259 = vmax.f32 %v2251, 0.0
        %v2260 = vld [vmem:[%s2 + $0x108] sm:$0xff]
        %v2261 = vld [vmem:[%s2 + $0x110] sm:$0xff]
        %v2262 = vld [vmem:[%s2 + $0x118] sm:$0xff]
        %v2263 = vld [vmem:[%s2 + $0x120] sm:$0xff]
        %v2264 = vld [vmem:[%s2 + $0x128] sm:$0xff]
        %v2265 = vld [vmem:[%s2 + $0x130] sm:$0xff]
        %v2266 = vld [vmem:[%s2 + $0x138] sm:$0xff]
        %v2267 = vld [vmem:[%s2 + $0x140] sm:$0xff]
        %v2268 = vld [vmem:[%s2 + $0x148] sm:$0xff]
        %v2269 = vld [vmem:[%s2 + $0x150] sm:$0xff]
        %v2270 = vld [vmem:[%s2 + $0x158] sm:$0xff]
        %v2271 = vld [vmem:[%s2 + $0x160] sm:$0xff]
        %v2272 = vld [vmem:[%s2 + $0x168] ss:$0 sm:$0xff]
        %v2273 = vld [vmem:[%s2 + $0x180] sm:$0xff]
        %v2274 = vld [vmem:[%s2 + $0x198] sm:$0xff]
        %v2275 = vld [vmem:[%s2 + $0x1b0] sm:$0xff]
        %v2276 = vld [vmem:[%s2 + $0x1c8] sm:$0xff]
        %v2277 = vld [vmem:[%s2 + $0x1e0] sm:$0xff]
        %v2278 = vld [vmem:[%s2 + $0x1f8] sm:$0xff]
        %v2279 = vld [vmem:[%s2 + $0x188] sm:$0xff]
        %v2280 = vld [vmem:[%s2 + $0x1a0] sm:$0xff]
        %v2281 = vld [vmem:[%s2 + $0x1b8] sm:$0xff]
        %v2282 = vld [vmem:[%s2 + $0x1d0] sm:$0xff]
        %v2283 = vld [vmem:[%s2 + $0x1e8] sm:$0xff]
        %v2284 = vld [vmem:[%s2 + $0x200] sm:$0xff]
        %v2286 = vsel %vm226, %v2252, 0
        %v2289 = vsel %vm226, %v2253, 0
        %v2292 = vsel %vm226, %v2254, 0
        %v2295 = vsel %vm226, %v2255, 0
        %v2298 = vsel %vm226, %v2256, 0
        %v2301 = vsel %vm226, %v2257, 0
        %v2304 = vsel %vm226, %v2258, 0
        %v2307 = vsel %vm226, %v2259, 0
        %2309 = vmatprep.subr.mxu0 %v2261
        %2310 = vmatpush1.msra.mxu0 %v2260
        %2311 = vmatprep.subr.mxu0 %v2264
        %2312 = vmatpush1.msra.mxu0 %v2263
        %2313 = vmatprep.subr.mxu0 %v2267
        %2314 = vmatpush1.msra.mxu0 %v2266
        %2315 = vmatprep.subr.mxu0 %v2270
        %2316 = vmatpush1.msra.mxu0 %v2269
        %2317 = vmatprep.subr.mxu0 0.0
        %2318 = vmatpush1.msra.mxu0 0.0
        %2319 = vmatprep.subr.mxu0 0.0
        %2320 = vmatpush1.msra.mxu0 0.0
        %2321 = vmatprep.subr.mxu0 0.0
        %2322 = vmatpush1.msra.mxu0 0.0
        %2323 = vmatprep.subr.mxu0 0.0
        %2324 = vmatpush1.msra.mxu0 0.0
        %2325 = vmatprep.subr.mxu0 0.0
        %2326 = vmatpush1.msra.mxu0 0.0
        %2327 = vmatprep.subr.mxu0 0.0
        %2328 = vmatpush1.msra.mxu0 0.0
        %2329 = vmatprep.subr.mxu0 0.0
        %2330 = vmatpush1.msra.mxu0 0.0
        %2331 = vmatprep.subr.mxu0 0.0
        %2332 = vmatpush1.msra.mxu0 0.0
        %2333 = vmatprep.subr.mxu0 0.0
        %2334 = vmatpush1.msra.mxu0 0.0
        %2335 = vmatprep.subr.mxu0 0.0
        %2336 = vmatpush1.msra.mxu0 0.0
        %2337 = vmatprep.subr.mxu0 0.0
        %2338 = vmatpush1.msra.mxu0 0.0
        %2339 = vmatprep.subr.mxu0 0.0
        %2340 = vmatpush1.msra.mxu0 0.0
        %2341 = vmatprep.subr.mxu0 0.0
        %2342 = vmatpush1.msra.mxu0 0.0
        %2343 = vmatprep.subr.mxu0 0.0
        %2344 = vmatpush1.msra.mxu0 0.0
        %2345 = vmatprep.subr.mxu0 0.0
        %2346 = vmatpush1.msra.mxu0 0.0
        %2347 = vmatprep.subr.mxu0 0.0
        %2348 = vmatpush1.msra.mxu0 0.0
        %2349 = vmatprep.subr.mxu0 0.0
        %2350 = vmatpush1.msra.mxu0 0.0
        %2351 = vmatprep.subr.mxu0 0.0
        %2352 = vmatpush1.msra.mxu0 0.0
        %2353 = vmatprep.subr.mxu0 0.0
        %2354 = vmatpush1.msra.mxu0 0.0
        %2355 = vmatprep.subr.mxu0 0.0
        %2356 = vmatpush1.msra.mxu0 0.0
        %2357 = vmatprep.subr.mxu0 0.0
        %2358 = vmatpush1.msra.mxu0 0.0
        %2359 = vmatprep.subr.mxu0 0.0
        %2360 = vmatpush1.msra.mxu0 0.0
        %2361 = vmatprep.subr.mxu0 0.0
        %2362 = vmatpush1.msra.mxu0 0.0
        %2363 = vmatprep.subr.mxu0 0.0
        %2364 = vmatpush1.msra.mxu0 0.0
        %2365 = vmatprep.subr.mxu0 0.0
        %2366 = vmatpush1.msra.mxu0 0.0
        %2367 = vmatprep.subr.mxu0 0.0
        %2368 = vmatpush1.msra.mxu0 0.0
        %2369 = vmatprep.subr.mxu0 0.0
        %2370 = vmatpush1.msra.mxu0 0.0
        %2371 = vmatprep.subr.mxu0 0.0
        %2372 = vmatpush1.msra.mxu0 0.0
        %2373 = vmatprep.mubr.f32.mxu0 0.0
        %2374 = vmatmul.mubr.f32.gmra.mrb[0].mxu0 %v2286
        %v2375 = vpop.f32.mrb[0].mxu0
        %v2376 = vadd.f32 0.0, %v2375
        %v2377 = vpop.f32.mrb[0].mxu0
        %v2378 = vadd.f32 0.0, %v2377
        %2379 = vmatprep.mubr.f32.mxu0 0.0
        %2380 = vmatmul.mubr.f32.gmra.mrb[0].mxu0 %v2289
        %v2381 = vpop.f32.mrb[0].mxu0
        %v2382 = vadd.f32 0.0, %v2381
        %v2383 = vpop.f32.mrb[0].mxu0
        %v2384 = vadd.f32 0.0, %v2383
        %2385 = vmatprep.mubr.f32.mxu0 0.0
        %2386 = vmatmul.mubr.f32.gmra.mrb[0].mxu0 %v2292
        %v2387 = vpop.f32.mrb[0].mxu0
        %v2388 = vadd.f32 0.0, %v2387
        %v2389 = vpop.f32.mrb[0].mxu0
        %v2390 = vadd.f32 0.0, %v2389
        %2391 = vmatprep.mubr.f32.mxu0 0.0
        %2392 = vmatmul.mubr.f32.gmra.mrb[0].mxu0 %v2295
        %v2393 = vpop.f32.mrb[0].mxu0
        %v2394 = vadd.f32 0.0, %v2393
        %v2395 = vpop.f32.mrb[0].mxu0
        %v2396 = vadd.f32 0.0, %v2395
        %2397 = vmatprep.mubr.f32.mxu0 0.0
        %2398 = vmatmul.mubr.f32.gmra.mrb[0].mxu0 %v2298
        %v2399 = vpop.f32.mrb[0].mxu0
        %v2400 = vadd.f32 0.0, %v2399
        %v2401 = vpop.f32.mrb[0].mxu0
        %v2402 = vadd.f32 0.0, %v2401
        %2403 = vmatprep.mubr.f32.mxu0 0.0
        %2404 = vmatmul.mubr.f32.gmra.mrb[0].mxu0 %v2301
        %v2405 = vpop.f32.mrb[0].mxu0
        %v2406 = vadd.f32 0.0, %v2405
        %v2407 = vpop.f32.mrb[0].mxu0
        %v2408 = vadd.f32 0.0, %v2407
        %2409 = vmatprep.mubr.f32.mxu0 0.0
        %2410 = vmatmul.mubr.f32.gmra.mrb[0].mxu0 %v2304
        %v2411 = vpop.f32.mrb[0].mxu0
        %v2412 = vadd.f32 0.0, %v2411
        %v2413 = vpop.f32.mrb[0].mxu0
        %v2414 = vadd.f32 0.0, %v2413
        %2415 = vmatprep.mubr.f32.mxu0 0.0
        %2416 = vmatmul.mubr.f32.gmra.mrb[0].mxu0 %v2307
        %v2417 = vpop.f32.mrb[0].mxu0
        %v2418 = vadd.f32 0.0, %v2417
        %v2419 = vpop.f32.mrb[0].mxu0
        %v2420 = vadd.f32 0.0, %v2419
        %2421 = vdwg.mxu0
        %2422 = vmatprep.subr.mxu0 0.0
        %2423 = vmatpush1.msra.mxu0 %v2262
        %2424 = vmatprep.subr.mxu0 0.0
        %2425 = vmatpush1.msra.mxu0 %v2265
        %2426 = vmatprep.subr.mxu0 0.0
        %2427 = vmatpush1.msra.mxu0 %v2268
        %2428 = vmatprep.subr.mxu0 0.0
        %2429 = vmatpush1.msra.mxu0 %v2271
        %2430 = vmatprep.subr.mxu0 0.0
        %2431 = vmatpush1.msra.mxu0 0.0
        %2432 = vmatprep.subr.mxu0 0.0
        %2433 = vmatpush1.msra.mxu0 0.0
        %2434 = vmatprep.subr.mxu0 0.0
        %2435 = vmatpush1.msra.mxu0 0.0
        %2436 = vmatprep.subr.mxu0 0.0
        %2437 = vmatpush1.msra.mxu0 0.0
        %2438 = vmatprep.subr.mxu0 0.0
        %2439 = vmatpush1.msra.mxu0 0.0
        %2440 = vmatprep.subr.mxu0 0.0
        %2441 = vmatpush1.msra.mxu0 0.0
        %2442 = vmatprep.subr.mxu0 0.0
        %2443 = vmatpush1.msra.mxu0 0.0
        %2444 = vmatprep.subr.mxu0 0.0
        %2445 = vmatpush1.msra.mxu0 0.0
        %2446 = vmatprep.subr.mxu0 0.0
        %2447 = vmatpush1.msra.mxu0 0.0
        %2448 = vmatprep.subr.mxu0 0.0
        %2449 = vmatpush1.msra.mxu0 0.0
        %2450 = vmatprep.subr.mxu0 0.0
        %2451 = vmatpush1.msra.mxu0 0.0
        %2452 = vmatprep.subr.mxu0 0.0
        %2453 = vmatpush1.msra.mxu0 0.0
        %2454 = vmatprep.subr.mxu0 0.0
        %2455 = vmatpush1.msra.mxu0 0.0
        %2456 = vmatprep.subr.mxu0 0.0
        %2457 = vmatpush1.msra.mxu0 0.0
        %2458 = vmatprep.subr.mxu0 0.0
        %2459 = vmatpush1.msra.mxu0 0.0
        %2460 = vmatprep.subr.mxu0 0.0
        %2461 = vmatpush1.msra.mxu0 0.0
        %2462 = vmatprep.subr.mxu0 0.0
        %2463 = vmatpush1.msra.mxu0 0.0
        %2464 = vmatprep.subr.mxu0 0.0
        %2465 = vmatpush1.msra.mxu0 0.0
        %2466 = vmatprep.subr.mxu0 0.0
        %2467 = vmatpush1.msra.mxu0 0.0
        %2468 = vmatprep.subr.mxu0 0.0
        %2469 = vmatpush1.msra.mxu0 0.0
        %2470 = vmatprep.subr.mxu0 0.0
        %2471 = vmatpush1.msra.mxu0 0.0
        %2472 = vmatprep.subr.mxu0 0.0
        %2473 = vmatpush1.msra.mxu0 0.0
        %2474 = vmatprep.subr.mxu0 0.0
        %2475 = vmatpush1.msra.mxu0 0.0
        %2476 = vmatprep.subr.mxu0 0.0
        %2477 = vmatpush1.msra.mxu0 0.0
        %2478 = vmatprep.subr.mxu0 0.0
        %2479 = vmatpush1.msra.mxu0 0.0
        %2480 = vmatprep.subr.mxu0 0.0
        %2481 = vmatpush1.msra.mxu0 0.0
        %2482 = vmatprep.subr.mxu0 0.0
        %2483 = vmatpush1.msra.mxu0 0.0
        %2484 = vmatprep.subr.mxu0 0.0
        %2485 = vmatpush1.msra.mxu0 0.0
        %2486 = vmatprep.mubr.f32.mxu0 0.0
        %2487 = vmatmul.mubr.f32.gmra.mrb[0].mxu0 %v2286
        %v2488 = vpop.f32.mrb[0].mxu0
        %v2489 = vadd.f32 0.0, %v2488
        %v2490 = vpop.f32.mrb[0].mxu0
        %2491 = vmatprep.mubr.f32.mxu0 0.0
        %2492 = vmatmul.mubr.f32.gmra.mrb[0].mxu0 %v2289
        %v2493 = vpop.f32.mrb[0].mxu0
        %v2494 = vadd.f32 0.0, %v2493
        %v2495 = vpop.f32.mrb[0].mxu0
        %2496 = vmatprep.mubr.f32.mxu0 0.0
        %2497 = vmatmul.mubr.f32.gmra.mrb[0].mxu0 %v2292
        %v2498 = vpop.f32.mrb[0].mxu0
        %v2499 = vadd.f32 0.0, %v2498
        %v2500 = vpop.f32.mrb[0].mxu0
        %2501 = vmatprep.mubr.f32.mxu0 0.0
        %2502 = vmatmul.mubr.f32.gmra.mrb[0].mxu0 %v2295
        %v2503 = vpop.f32.mrb[0].mxu0
        %v2504 = vadd.f32 0.0, %v2503
        %v2505 = vpop.f32.mrb[0].mxu0
        %2506 = vmatprep.mubr.f32.mxu0 0.0
        %2507 = vmatmul.mubr.f32.gmra.mrb[0].mxu0 %v2298
        %v2508 = vpop.f32.mrb[0].mxu0
        %v2509 = vadd.f32 0.0, %v2508
        %v2510 = vpop.f32.mrb[0].mxu0
        %2511 = vmatprep.mubr.f32.mxu0 0.0
        %2512 = vmatmul.mubr.f32.gmra.mrb[0].mxu0 %v2301
        %v2513 = vpop.f32.mrb[0].mxu0
        %v2514 = vadd.f32 0.0, %v2513
        %v2515 = vpop.f32.mrb[0].mxu0
        %2516 = vmatprep.mubr.f32.mxu0 0.0
        %2517 = vmatmul.mubr.f32.gmra.mrb[0].mxu0 %v2304
        %v2518 = vpop.f32.mrb[0].mxu0
        %v2519 = vadd.f32 0.0, %v2518
        %v2520 = vpop.f32.mrb[0].mxu0
        %2521 = vmatprep.mubr.f32.mxu0 0.0
        %2522 = vmatmul.mubr.f32.gmra.mrb[0].mxu0 %v2307
        %v2523 = vpop.f32.mrb[0].mxu0
        %v2524 = vadd.f32 0.0, %v2523
        %v2525 = vpop.f32.mrb[0].mxu0
        %2526 = vdwg.mxu0
        %v2528 = vsel %vm226, %v2273, 0
        %v2531 = vsel %vm226, %v2274, 0
        %v2534 = vsel %vm226, %v2275, 0
        %v2537 = vsel %vm226, %v2276, 0
        %v2540 = vsel %vm226, %v2277, 0
        %v2543 = vsel %vm226, %v2278, 0
        %2545 = vmatprep.subr.mxu0 0.0
        %2546 = vmatpush1.xpose.msra.mxu0 %v2286
        %2547 = vmatprep.subr.mxu0 0.0
        %2548 = vmatpush1.xpose.msra.mxu0 %v2289
        %2549 = vmatprep.subr.mxu0 0.0
        %2550 = vmatpush1.xpose.msra.mxu0 0.0
        %2551 = vmatprep.subr.mxu0 0.0
        %2552 = vmatpush1.xpose.msra.mxu0 0.0
        %2553 = vmatprep.subr.mxu0 0.0
        %2554 = vmatpush1.xpose.msra.mxu0 0.0
        %2555 = vmatprep.subr.mxu0 0.0
        %2556 = vmatpush1.xpose.msra.mxu0 0.0
        %2557 = vmatprep.subr.mxu0 0.0
        %2558 = vmatpush1.xpose.msra.mxu0 0.0
        %2559 = vmatprep.subr.mxu0 0.0
        %2560 = vmatpush1.xpose.msra.mxu0 0.0
        %2561 = vmatprep.subr.mxu0 0.0
        %2562 = vmatpush1.xpose.msra.mxu0 0.0
        %2563 = vmatprep.subr.mxu0 0.0
        %2564 = vmatpush1.xpose.msra.mxu0 0.0
        %2565 = vmatprep.subr.mxu0 0.0
        %2566 = vmatpush1.xpose.msra.mxu0 0.0
        %2567 = vmatprep.subr.mxu0 0.0
        %2568 = vmatpush1.xpose.msra.mxu0 0.0
        %2569 = vmatprep.subr.mxu0 0.0
        %2570 = vmatpush1.xpose.msra.mxu0 0.0
        %2571 = vmatprep.subr.mxu0 0.0
        %2572 = vmatpush1.xpose.msra.mxu0 0.0
        %2573 = vmatprep.subr.mxu0 0.0
        %2574 = vmatpush1.xpose.msra.mxu0 0.0
        %2575 = vmatprep.subr.mxu0 0.0
        %2576 = vmatpush1.xpose.msra.mxu0 0.0
        %2577 = vmatprep.subr.mxu0 0.0
        %2578 = vmatpush1.xpose.msra.mxu0 0.0
        %2579 = vmatprep.subr.mxu0 0.0
        %2580 = vmatpush1.xpose.msra.mxu0 0.0
        %2581 = vmatprep.subr.mxu0 0.0
        %2582 = vmatpush1.xpose.msra.mxu0 0.0
        %2583 = vmatprep.subr.mxu0 0.0
        %2584 = vmatpush1.xpose.msra.mxu0 0.0
        %2585 = vmatprep.subr.mxu0 0.0
        %2586 = vmatpush1.xpose.msra.mxu0 0.0
        %2587 = vmatprep.subr.mxu0 0.0
        %2588 = vmatpush1.xpose.msra.mxu0 0.0
        %2589 = vmatprep.subr.mxu0 0.0
        %2590 = vmatpush1.xpose.msra.mxu0 0.0
        %2591 = vmatprep.subr.mxu0 0.0
        %2592 = vmatpush1.xpose.msra.mxu0 0.0
        %2593 = vmatprep.subr.mxu0 0.0
        %2594 = vmatpush1.xpose.msra.mxu0 0.0
        %2595 = vmatprep.subr.mxu0 0.0
        %2596 = vmatpush1.xpose.msra.mxu0 0.0
        %2597 = vmatprep.subr.mxu0 0.0
        %2598 = vmatpush1.xpose.msra.mxu0 0.0
        %2599 = vmatprep.subr.mxu0 0.0
        %2600 = vmatpush1.xpose.msra.mxu0 0.0
        %2601 = vmatprep.subr.mxu0 0.0
        %2602 = vmatpush1.xpose.msra.mxu0 0.0
        %2603 = vmatprep.subr.mxu0 0.0
        %2604 = vmatpush1.xpose.msra.mxu0 0.0
        %2605 = vmatprep.subr.mxu0 0.0
        %2606 = vmatpush1.xpose.msra.mxu0 0.0
        %2607 = vmatprep.subr.mxu0 0.0
        %2608 = vmatpush1.xpose.msra.mxu0 0.0
        %2609 = vmatprep.mubr.f32.mxu0 0.0
        %2610 = vmatmul.mubr.f32.gmra.mrb[0].mxu0 %v2528
        %v2611 = vpop.f32.mrb[0].mxu0
        %v2612 = vadd.f32 0.0, %v2611
        %v2613 = vpop.f32.mrb[0].mxu0
        %2614 = vmatprep.mubr.f32.mxu0 0.0
        %2615 = vmatmul.mubr.f32.gmra.mrb[0].mxu0 %v2531
        %v2616 = vpop.f32.mrb[0].mxu0
        %v2617 = vadd.f32 0.0, %v2616
        %v2618 = vpop.f32.mrb[0].mxu0
        %2619 = vmatprep.mubr.f32.mxu0 0.0
        %2620 = vmatmul.mubr.f32.gmra.mrb[0].mxu0 %v2534
        %v2621 = vpop.f32.mrb[0].mxu0
        %v2622 = vadd.f32 0.0, %v2621
        %v2623 = vpop.f32.mrb[0].mxu0
        %2624 = vmatprep.mubr.f32.mxu0 0.0
        %2625 = vmatmul.mubr.f32.gmra.mrb[0].mxu0 %v2537
        %v2626 = vpop.f32.mrb[0].mxu0
        %v2627 = vadd.f32 0.0, %v2626
        %v2628 = vpop.f32.mrb[0].mxu0
        %2629 = vmatprep.mubr.f32.mxu0 0.0
        %2630 = vmatmul.mubr.f32.gmra.mrb[0].mxu0 %v2540
        %v2631 = vpop.f32.mrb[0].mxu0
        %v2632 = vadd.f32 0.0, %v2631
        %v2633 = vpop.f32.mrb[0].mxu0
        %2634 = vmatprep.mubr.f32.mxu0 0.0
        %2635 = vmatmul.mubr.f32.gmra.mrb[0].mxu0 %v2543
        %v2636 = vpop.f32.mrb[0].mxu0
        %v2637 = vadd.f32 0.0, %v2636
        %v2638 = vpop.f32.mrb[0].mxu0
        %2639 = vdwg.mxu0
        %v2640 = vmul.f32 %v2252, %v2279
        %v2641 = vmul.f32 %v2253, %v2280
        %v2642 = vmul.f32 %v2252, %v2281
        %v2643 = vmul.f32 %v2253, %v2282
        %v2644 = vmul.f32 %v2252, %v2283
        %v2645 = vmul.f32 %v2253, %v2284
        %v2646 = vsel %vm226, %v2640, 0.0
        %2647 = vadd.xlane.f32.xlu0 %v2646
        %v2648 = vpop.xlane.xlu0 %2647
        %v2649 = vsel %vm226, %v2641, 0.0
        %2650 = vadd.xlane.f32.xlu0 %v2649
        %v2651 = vpop.xlane.xlu0 %2650
        %v2652 = vsel %vm226, %v2642, 0.0
        %2653 = vadd.xlane.f32.xlu0 %v2652
        %v2654 = vpop.xlane.xlu0 %2653
        %v2655 = vsel %vm226, %v2643, 0.0
        %2656 = vadd.xlane.f32.xlu0 %v2655
        %v2657 = vpop.xlane.xlu0 %2656
        %v2658 = vsel %vm226, %v2644, 0.0
        %2659 = vadd.xlane.f32.xlu0 %v2658
        %v2660 = vpop.xlane.xlu0 %2659
        %v2661 = vsel %vm226, %v2645, 0.0
        %2662 = vadd.xlane.f32.xlu0 %v2661
        %v2663 = vpop.xlane.xlu0 %2662
        %v2664 = vadd.f32 %v2648, %v2612
        %v2665 = vadd.f32 %v2651, %v2617
        %v2666 = vadd.f32 %v2654, %v2622
        %v2667 = vadd.f32 %v2657, %v2627
        %v2668 = vadd.f32 %v2660, %v2632
        %v2669 = vadd.f32 %v2663, %v2637
        %vm2670 = vcmp.gt.f32.partialorder %v2664, 0.0
        %vm2671 = vcmp.gt.f32.partialorder %v2665, 0.0
        %vm2672 = vcmp.gt.f32.partialorder %v2666, 0.0
        %vm2673 = vcmp.gt.f32.partialorder %v2667, 0.0
        %vm2674 = vcmp.gt.f32.partialorder %v2668, 0.0
        %vm2675 = vcmp.gt.f32.partialorder %v2669, 0.0
        %v2676 = vmul.f32 %v2664, 0.2
        %v2677 = vmul.f32 %v2665, 0.2
        %v2678 = vmul.f32 %v2666, 0.2
        %v2679 = vmul.f32 %v2667, 0.2
        %v2680 = vmul.f32 %v2668, 0.2
        %v2681 = vmul.f32 %v2669, 0.2
        %v2682 = vsel %vm2670, %v2664, %v2676
        %v2683 = vsel %vm2671, %v2665, %v2677
        %v2684 = vsel %vm2672, %v2666, %v2678
        %v2685 = vsel %vm2673, %v2667, %v2679
        %v2686 = vsel %vm2674, %v2668, %v2680
        %v2687 = vsel %vm2675, %v2669, %v2681
        %v2688 = vadd.f32 %v2682, %v630
        %v2689 = vadd.f32 %v2683, %v631
        %v2690 = vadd.f32 %v2684, %v632
        %v2691 = vadd.f32 %v2685, %v633
        %v2692 = vadd.f32 %v2686, %v634
        %v2693 = vadd.f32 %v2687, %v635
        %v2694 = vsel %vm642, %v2688, -inf
        %2695 = vmax.xlane.f32.xlu0 %v2694
        %v2696 = vpop.xlane.xlu0 %2695
        %v2697 = vsel %vm642, %v2689, -inf
        %2698 = vmax.xlane.f32.xlu0 %v2697
        %v2699 = vpop.xlane.xlu0 %2698
        %v2700 = vsel %vm642, %v2690, -inf
        %2701 = vmax.xlane.f32.xlu0 %v2700
        %v2702 = vpop.xlane.xlu0 %2701
        %v2703 = vsel %vm642, %v2691, -inf
        %2704 = vmax.xlane.f32.xlu0 %v2703
        %v2705 = vpop.xlane.xlu0 %2704
        %v2706 = vsel %vm642, %v2692, -inf
        %2707 = vmax.xlane.f32.xlu0 %v2706
        %v2708 = vpop.xlane.xlu0 %2707
        %v2709 = vsel %vm642, %v2693, -inf
        %2710 = vmax.xlane.f32.xlu0 %v2709
        %v2711 = vpop.xlane.xlu0 %2710
        %v2712 = vsub.f32 %v2688, %v2696
        %v2713 = vsub.f32 %v2689, %v2699
        %v2714 = vsub.f32 %v2690, %v2702
        %v2715 = vsub.f32 %v2691, %v2705
        %v2716 = vsub.f32 %v2692, %v2708
        %v2717 = vsub.f32 %v2693, %v2711
        %v2718 = vmul.f32 %v2712, 1.442695
        %v2719 = vpow.pop %v2718
        %v2720 = vmul.f32 %v2713, 1.442695
        %v2721 = vpow.pop %v2720
        %v2722 = vmul.f32 %v2714, 1.442695
        %v2723 = vpow.pop %v2722
        %v2724 = vmul.f32 %v2715, 1.442695
        %v2725 = vpow.pop %v2724
        %v2726 = vmul.f32 %v2716, 1.442695
        %v2727 = vpow.pop %v2726
        %v2728 = vmul.f32 %v2717, 1.442695
        %v2729 = vpow.pop %v2728
        %v2730 = vsel %vm642, %v2719, 0.0
        %2731 = vadd.xlane.f32.xlu0 %v2730
        %v2732 = vpop.xlane.xlu0 %2731
        %v2733 = vsel %vm642, %v2721, 0.0
        %2734 = vadd.xlane.f32.xlu0 %v2733
        %v2735 = vpop.xlane.xlu0 %2734
        %v2736 = vsel %vm642, %v2723, 0.0
        %2737 = vadd.xlane.f32.xlu0 %v2736
        %v2738 = vpop.xlane.xlu0 %2737
        %v2739 = vsel %vm642, %v2725, 0.0
        %2740 = vadd.xlane.f32.xlu0 %v2739
        %v2741 = vpop.xlane.xlu0 %2740
        %v2742 = vsel %vm642, %v2727, 0.0
        %2743 = vadd.xlane.f32.xlu0 %v2742
        %v2744 = vpop.xlane.xlu0 %2743
        %v2745 = vsel %vm642, %v2729, 0.0
        %2746 = vadd.xlane.f32.xlu0 %v2745
        %v2747 = vpop.xlane.xlu0 %2746
        %v2748 = vrcp.pop %v2732
        %v2749 = vrcp.pop %v2735
        %v2750 = vrcp.pop %v2738
        %v2751 = vrcp.pop %v2741
        %v2752 = vrcp.pop %v2744
        %v2753 = vrcp.pop %v2747
        %v2754 = vmul.f32 %v2748, 0.33333334
        %v2755 = vmul.f32 %v2749, 0.33333334
        %v2756 = vmul.f32 %v2750, 0.33333334
        %v2757 = vmul.f32 %v2751, 0.33333334
        %v2758 = vmul.f32 %v2752, 0.33333334
        %v2759 = vmul.f32 %v2753, 0.33333334
        %v2760 = vmul.f32 %v2719, %v2754
        %v2761 = vmul.f32 %v2721, %v2755
        %v2762 = vmul.f32 %v2723, %v2756
        %v2763 = vmul.f32 %v2725, %v2757
        %v2764 = vmul.f32 %v2727, %v2758
        %v2765 = vmul.f32 %v2729, %v2759
        %v2767 = vsel %vm642, %v2760, 0
        %v2770 = vsel %vm642, %v2761, 0
        %v2773 = vsel %vm642, %v2762, 0
        %v2776 = vsel %vm642, %v2763, 0
        %v2779 = vsel %vm642, %v2764, 0
        %v2782 = vsel %vm642, %v2765, 0
        %2784 = vmatprep.subr.mxu0 %v2378
        %2785 = vmatpush1.msra.mxu0 %v2376
        %2786 = vmatprep.subr.mxu0 %v2384
        %2787 = vmatpush1.msra.mxu0 %v2382
        %2788 = vmatprep.subr.mxu0 0.0
        %2789 = vmatpush1.msra.mxu0 0.0
        %2790 = vmatprep.subr.mxu0 0.0
        %2791 = vmatpush1.msra.mxu0 0.0
        %2792 = vmatprep.subr.mxu0 0.0
        %2793 = vmatpush1.msra.mxu0 0.0
        %2794 = vmatprep.subr.mxu0 0.0
        %2795 = vmatpush1.msra.mxu0 0.0
        %2796 = vmatprep.subr.mxu0 0.0
        %2797 = vmatpush1.msra.mxu0 0.0
        %2798 = vmatprep.subr.mxu0 0.0
        %2799 = vmatpush1.msra.mxu0 0.0
        %2800 = vmatprep.subr.mxu0 0.0
        %2801 = vmatpush1.msra.mxu0 0.0
        %2802 = vmatprep.subr.mxu0 0.0
        %2803 = vmatpush1.msra.mxu0 0.0
        %2804 = vmatprep.subr.mxu0 0.0
        %2805 = vmatpush1.msra.mxu0 0.0
        %2806 = vmatprep.subr.mxu0 0.0
        %2807 = vmatpush1.msra.mxu0 0.0
        %2808 = vmatprep.subr.mxu0 0.0
        %2809 = vmatpush1.msra.mxu0 0.0
        %2810 = vmatprep.subr.mxu0 0.0
        %2811 = vmatpush1.msra.mxu0 0.0
        %2812 = vmatprep.subr.mxu0 0.0
        %2813 = vmatpush1.msra.mxu0 0.0
        %2814 = vmatprep.subr.mxu0 0.0
        %2815 = vmatpush1.msra.mxu0 0.0
        %2816 = vmatprep.subr.mxu0 0.0
        %2817 = vmatpush1.msra.mxu0 0.0
        %2818 = vmatprep.subr.mxu0 0.0
        %2819 = vmatpush1.msra.mxu0 0.0
        %2820 = vmatprep.subr.mxu0 0.0
        %2821 = vmatpush1.msra.mxu0 0.0
        %2822 = vmatprep.subr.mxu0 0.0
        %2823 = vmatpush1.msra.mxu0 0.0
        %2824 = vmatprep.subr.mxu0 0.0
        %2825 = vmatpush1.msra.mxu0 0.0
        %2826 = vmatprep.subr.mxu0 0.0
        %2827 = vmatpush1.msra.mxu0 0.0
        %2828 = vmatprep.subr.mxu0 0.0
        %2829 = vmatpush1.msra.mxu0 0.0
        %2830 = vmatprep.subr.mxu0 0.0
        %2831 = vmatpush1.msra.mxu0 0.0
        %2832 = vmatprep.subr.mxu0 0.0
        %2833 = vmatpush1.msra.mxu0 0.0
        %2834 = vmatprep.subr.mxu0 0.0
        %2835 = vmatpush1.msra.mxu0 0.0
        %2836 = vmatprep.subr.mxu0 0.0
        %2837 = vmatpush1.msra.mxu0 0.0
        %2838 = vmatprep.subr.mxu0 0.0
        %2839 = vmatpush1.msra.mxu0 0.0
        %2840 = vmatprep.subr.mxu0 0.0
        %2841 = vmatpush1.msra.mxu0 0.0
        %2842 = vmatprep.subr.mxu0 0.0
        %2843 = vmatpush1.msra.mxu0 0.0
        %2844 = vmatprep.subr.mxu0 0.0
        %2845 = vmatpush1.msra.mxu0 0.0
        %2846 = vmatprep.subr.mxu0 0.0
        %2847 = vmatpush1.msra.mxu0 0.0
        %2848 = vmatprep.mubr.f32.mxu0 0.0
        %2849 = vmatmul.mubr.f32.gmra.mrb[0].mxu0 %v2767
        %v2850 = vpop.f32.mrb[0].mxu0
        %v2851 = vadd.f32 0.0, %v2850
        %v2852 = vpop.f32.mrb[0].mxu0
        %2853 = vmatprep.mubr.f32.mxu0 0.0
        %2854 = vmatmul.mubr.f32.gmra.mrb[0].mxu0 %v2770
        %v2855 = vpop.f32.mrb[0].mxu0
        %v2856 = vadd.f32 0.0, %v2855
        %v2857 = vpop.f32.mrb[0].mxu0
        %2858 = vmatprep.mubr.f32.mxu0 0.0
        %2859 = vmatmul.mubr.f32.gmra.mrb[0].mxu0 %v2773
        %v2860 = vpop.f32.mrb[0].mxu0
        %v2861 = vpop.f32.mrb[0].mxu0
        %v2862 = vadd.f32 0.0, %v2861
        %2863 = vmatprep.mubr.f32.mxu0 0.0
        %2864 = vmatmul.mubr.f32.gmra.mrb[0].mxu0 %v2776
        %v2865 = vpop.f32.mrb[0].mxu0
        %v2866 = vpop.f32.mrb[0].mxu0
        %v2867 = vadd.f32 0.0, %v2866
        %2868 = vmatprep.mubr.f32.mxu0 0.0
        %2869 = vmatmul.mubr.f32.gmra.mrb[0].mxu0 %v2779
        %v2870 = vpop.f32.mrb[0].mxu0
        %v2871 = vpop.f32.mrb[0].mxu0
        %2872 = vmatprep.mubr.f32.mxu0 0.0
        %2873 = vmatmul.mubr.f32.gmra.mrb[0].mxu0 %v2782
        %v2874 = vpop.f32.mrb[0].mxu0
        %v2875 = vpop.f32.mrb[0].mxu0
        %2876 = vdwg.mxu0
        %2877 = vmatprep.subr.mxu0 0.0
        %2878 = vmatpush1.msra.mxu0 %v2489
        %2879 = vmatprep.subr.mxu0 0.0
        %2880 = vmatpush1.msra.mxu0 %v2494
        %2881 = vmatprep.subr.mxu0 0.0
        %2882 = vmatpush1.msra.mxu0 0.0
        %2883 = vmatprep.subr.mxu0 0.0
        %2884 = vmatpush1.msra.mxu0 0.0
        %2885 = vmatprep.subr.mxu0 0.0
        %2886 = vmatpush1.msra.mxu0 0.0
        %2887 = vmatprep.subr.mxu0 0.0
        %2888 = vmatpush1.msra.mxu0 0.0
        %2889 = vmatprep.subr.mxu0 0.0
        %2890 = vmatpush1.msra.mxu0 0.0
        %2891 = vmatprep.subr.mxu0 0.0
        %2892 = vmatpush1.msra.mxu0 0.0
        %2893 = vmatprep.subr.mxu0 0.0
        %2894 = vmatpush1.msra.mxu0 0.0
        %2895 = vmatprep.subr.mxu0 0.0
        %2896 = vmatpush1.msra.mxu0 0.0
        %2897 = vmatprep.subr.mxu0 0.0
        %2898 = vmatpush1.msra.mxu0 0.0
        %2899 = vmatprep.subr.mxu0 0.0
        %2900 = vmatpush1.msra.mxu0 0.0
        %2901 = vmatprep.subr.mxu0 0.0
        %2902 = vmatpush1.msra.mxu0 0.0
        %2903 = vmatprep.subr.mxu0 0.0
        %2904 = vmatpush1.msra.mxu0 0.0
        %2905 = vmatprep.subr.mxu0 0.0
        %2906 = vmatpush1.msra.mxu0 0.0
        %2907 = vmatprep.subr.mxu0 0.0
        %2908 = vmatpush1.msra.mxu0 0.0
        %2909 = vmatprep.subr.mxu0 0.0
        %2910 = vmatpush1.msra.mxu0 0.0
        %2911 = vmatprep.subr.mxu0 0.0
        %2912 = vmatpush1.msra.mxu0 0.0
        %2913 = vmatprep.subr.mxu0 0.0
        %2914 = vmatpush1.msra.mxu0 0.0
        %2915 = vmatprep.subr.mxu0 0.0
        %2916 = vmatpush1.msra.mxu0 0.0
        %2917 = vmatprep.subr.mxu0 0.0
        %2918 = vmatpush1.msra.mxu0 0.0
        %2919 = vmatprep.subr.mxu0 0.0
        %2920 = vmatpush1.msra.mxu0 0.0
        %2921 = vmatprep.subr.mxu0 0.0
        %2922 = vmatpush1.msra.mxu0 0.0
        %2923 = vmatprep.subr.mxu0 0.0
        %2924 = vmatpush1.msra.mxu0 0.0
        %2925 = vmatprep.subr.mxu0 0.0
        %2926 = vmatpush1.msra.mxu0 0.0
        %2927 = vmatprep.subr.mxu0 0.0
        %2928 = vmatpush1.msra.mxu0 0.0
        %2929 = vmatprep.subr.mxu0 0.0
        %2930 = vmatpush1.msra.mxu0 0.0
        %2931 = vmatprep.subr.mxu0 0.0
        %2932 = vmatpush1.msra.mxu0 0.0
        %2933 = vmatprep.subr.mxu0 0.0
        %2934 = vmatpush1.msra.mxu0 0.0
        %2935 = vmatprep.subr.mxu0 0.0
        %2936 = vmatpush1.msra.mxu0 0.0
        %2937 = vmatprep.subr.mxu0 0.0
        %2938 = vmatpush1.msra.mxu0 0.0
        %2939 = vmatprep.subr.mxu0 0.0
        %2940 = vmatpush1.msra.mxu0 0.0
        %2941 = vmatprep.mubr.f32.mxu0 0.0
        %2942 = vmatmul.mubr.f32.gmra.mrb[0].mxu0 %v2767
        %v2943 = vpop.f32.mrb[0].mxu0
        %v2944 = vpop.f32.mrb[0].mxu0
        %2945 = vmatprep.mubr.f32.mxu0 0.0
        %2946 = vmatmul.mubr.f32.gmra.mrb[0].mxu0 %v2770
        %v2947 = vpop.f32.mrb[0].mxu0
        %v2948 = vpop.f32.mrb[0].mxu0
        %2949 = vmatprep.mubr.f32.mxu0 0.0
        %2950 = vmatmul.mubr.f32.gmra.mrb[0].mxu0 %v2773
        %v2951 = vpop.f32.mrb[0].mxu0
        %v2952 = vpop.f32.mrb[0].mxu0
        %2953 = vmatprep.mubr.f32.mxu0 0.0
        %2954 = vmatmul.mubr.f32.gmra.mrb[0].mxu0 %v2776
        %v2955 = vpop.f32.mrb[0].mxu0
        %v2956 = vpop.f32.mrb[0].mxu0
        %2957 = vmatprep.mubr.f32.mxu0 0.0
        %2958 = vmatmul.mubr.f32.gmra.mrb[0].mxu0 %v2779
        %v2959 = vpop.f32.mrb[0].mxu0
        %v2960 = vadd.f32 0.0, %v2959
        %v2961 = vpop.f32.mrb[0].mxu0
        %2962 = vmatprep.mubr.f32.mxu0 0.0
        %2963 = vmatmul.mubr.f32.gmra.mrb[0].mxu0 %v2782
        %v2964 = vpop.f32.mrb[0].mxu0
        %v2965 = vadd.f32 0.0, %v2964
        %v2966 = vpop.f32.mrb[0].mxu0
        %2967 = vdwg.mxu0
        %v2968 = vadd.f32 %v2851, %v2862
        %v2969 = vadd.f32 %v2856, %v2867
        %v2970 = vadd.f32 %v2968, %v2960
        %v2971 = vadd.f32 %v2969, %v2965
        %v2972 = vadd.f32 %v2970, %v2272
        %v2973 = vadd.f32 %v2971, %v2272
        %2974 = vmatprep.subr.mxu0 0.0
        %2975 = vmatpush1.xpose.msra.mxu0 %v2292
        %2976 = vmatprep.subr.mxu0 0.0
        %2977 = vmatpush1.xpose.msra.mxu0 %v2295
        %2978 = vmatprep.subr.mxu0 0.0
        %2979 = vmatpush1.xpose.msra.mxu0 0.0
        %2980 = vmatprep.subr.mxu0 0.0
        %2981 = vmatpush1.xpose.msra.mxu0 0.0
        %2982 = vmatprep.subr.mxu0 0.0
        %2983 = vmatpush1.xpose.msra.mxu0 0.0
        %2984 = vmatprep.subr.mxu0 0.0
        %2985 = vmatpush1.xpose.msra.mxu0 0.0
        %2986 = vmatprep.subr.mxu0 0.0
        %2987 = vmatpush1.xpose.msra.mxu0 0.0
        %2988 = vmatprep.subr.mxu0 0.0
        %2989 = vmatpush1.xpose.msra.mxu0 0.0
        %2990 = vmatprep.subr.mxu0 0.0
        %2991 = vmatpush1.xpose.msra.mxu0 0.0
        %2992 = vmatprep.subr.mxu0 0.0
        %2993 = vmatpush1.xpose.msra.mxu0 0.0
        %2994 = vmatprep.subr.mxu0 0.0
        %2995 = vmatpush1.xpose.msra.mxu0 0.0
        %2996 = vmatprep.subr.mxu0 0.0
        %2997 = vmatpush1.xpose.msra.mxu0 0.0
        %2998 = vmatprep.subr.mxu0 0.0
        %2999 = vmatpush1.xpose.msra.mxu0 0.0
        %3000 = vmatprep.subr.mxu0 0.0
        %3001 = vmatpush1.xpose.msra.mxu0 0.0
        %3002 = vmatprep.subr.mxu0 0.0
        %3003 = vmatpush1.xpose.msra.mxu0 0.0
        %3004 = vmatprep.subr.mxu0 0.0
        %3005 = vmatpush1.xpose.msra.mxu0 0.0
        %3006 = vmatprep.subr.mxu0 0.0
        %3007 = vmatpush1.xpose.msra.mxu0 0.0
        %3008 = vmatprep.subr.mxu0 0.0
        %3009 = vmatpush1.xpose.msra.mxu0 0.0
        %3010 = vmatprep.subr.mxu0 0.0
        %3011 = vmatpush1.xpose.msra.mxu0 0.0
        %3012 = vmatprep.subr.mxu0 0.0
        %3013 = vmatpush1.xpose.msra.mxu0 0.0
        %3014 = vmatprep.subr.mxu0 0.0
        %3015 = vmatpush1.xpose.msra.mxu0 0.0
        %3016 = vmatprep.subr.mxu0 0.0
        %3017 = vmatpush1.xpose.msra.mxu0 0.0
        %3018 = vmatprep.subr.mxu0 0.0
        %3019 = vmatpush1.xpose.msra.mxu0 0.0
        %3020 = vmatprep.subr.mxu0 0.0
        %3021 = vmatpush1.xpose.msra.mxu0 0.0
        %3022 = vmatprep.subr.mxu0 0.0
        %3023 = vmatpush1.xpose.msra.mxu0 0.0
        %3024 = vmatprep.subr.mxu0 0.0
        %3025 = vmatpush1.xpose.msra.mxu0 0.0
        %3026 = vmatprep.subr.mxu0 0.0
        %3027 = vmatpush1.xpose.msra.mxu0 0.0
        %3028 = vmatprep.subr.mxu0 0.0
        %3029 = vmatpush1.xpose.msra.mxu0 0.0
        %3030 = vmatprep.subr.mxu0 0.0
        %3031 = vmatpush1.xpose.msra.mxu0 0.0
        %3032 = vmatprep.subr.mxu0 0.0
        %3033 = vmatpush1.xpose.msra.mxu0 0.0
        %3034 = vmatprep.subr.mxu0 0.0
        %3035 = vmatpush1.xpose.msra.mxu0 0.0
        %3036 = vmatprep.subr.mxu0 0.0
        %3037 = vmatpush1.xpose.msra.mxu0 0.0
        %3038 = vmatprep.mubr.f32.mxu0 0.0
        %3039 = vmatmul.mubr.f32.gmra.mrb[0].mxu0 %v2528
        %v3040 = vpop.f32.mrb[0].mxu0
        %v3041 = vadd.f32 0.0, %v3040
        %v3042 = vpop.f32.mrb[0].mxu0
        %3043 = vmatprep.mubr.f32.mxu0 0.0
        %3044 = vmatmul.mubr.f32.gmra.mrb[0].mxu0 %v2531
        %v3045 = vpop.f32.mrb[0].mxu0
        %v3046 = vadd.f32 0.0, %v3045
        %v3047 = vpop.f32.mrb[0].mxu0
        %3048 = vmatprep.mubr.f32.mxu0 0.0
        %3049 = vmatmul.mubr.f32.gmra.mrb[0].mxu0 %v2534
        %v3050 = vpop.f32.mrb[0].mxu0
        %v3051 = vadd.f32 0.0, %v3050
        %v3052 = vpop.f32.mrb[0].mxu0
        %3053 = vmatprep.mubr.f32.mxu0 0.0
        %3054 = vmatmul.mubr.f32.gmra.mrb[0].mxu0 %v2537
        %v3055 = vpop.f32.mrb[0].mxu0
        %v3056 = vadd.f32 0.0, %v3055
        %v3057 = vpop.f32.mrb[0].mxu0
        %3058 = vmatprep.mubr.f32.mxu0 0.0
        %3059 = vmatmul.mubr.f32.gmra.mrb[0].mxu0 %v2540
        %v3060 = vpop.f32.mrb[0].mxu0
        %v3061 = vadd.f32 0.0, %v3060
        %v3062 = vpop.f32.mrb[0].mxu0
        %3063 = vmatprep.mubr.f32.mxu0 0.0
        %3064 = vmatmul.mubr.f32.gmra.mrb[0].mxu0 %v2543
        %v3065 = vpop.f32.mrb[0].mxu0
        %v3066 = vadd.f32 0.0, %v3065
        %v3067 = vpop.f32.mrb[0].mxu0
        %3068 = vdwg.mxu0
        %v3069 = vmul.f32 %v2254, %v2279
        %v3070 = vmul.f32 %v2255, %v2280
        %v3071 = vmul.f32 %v2254, %v2281
        %v3072 = vmul.f32 %v2255, %v2282
        %v3073 = vmul.f32 %v2254, %v2283
        %v3074 = vmul.f32 %v2255, %v2284
        %v3075 = vsel %vm226, %v3069, 0.0
        %3076 = vadd.xlane.f32.xlu0 %v3075
        %v3077 = vpop.xlane.xlu0 %3076
        %v3078 = vsel %vm226, %v3070, 0.0
        %3079 = vadd.xlane.f32.xlu0 %v3078
        %v3080 = vpop.xlane.xlu0 %3079
        %v3081 = vsel %vm226, %v3071, 0.0
        %3082 = vadd.xlane.f32.xlu0 %v3081
        %v3083 = vpop.xlane.xlu0 %3082
        %v3084 = vsel %vm226, %v3072, 0.0
        %3085 = vadd.xlane.f32.xlu0 %v3084
        %v3086 = vpop.xlane.xlu0 %3085
        %v3087 = vsel %vm226, %v3073, 0.0
        %3088 = vadd.xlane.f32.xlu0 %v3087
        %v3089 = vpop.xlane.xlu0 %3088
        %v3090 = vsel %vm226, %v3074, 0.0
        %3091 = vadd.xlane.f32.xlu0 %v3090
        %v3092 = vpop.xlane.xlu0 %3091
        %v3093 = vadd.f32 %v3077, %v3041
        %v3094 = vadd.f32 %v3080, %v3046
        %v3095 = vadd.f32 %v3083, %v3051
        %v3096 = vadd.f32 %v3086, %v3056
        %v3097 = vadd.f32 %v3089, %v3061
        %v3098 = vadd.f32 %v3092, %v3066
        %vm3099 = vcmp.gt.f32.partialorder %v3093, 0.0
        %vm3100 = vcmp.gt.f32.partialorder %v3094, 0.0
        %vm3101 = vcmp.gt.f32.partialorder %v3095, 0.0
        %vm3102 = vcmp.gt.f32.partialorder %v3096, 0.0
        %vm3103 = vcmp.gt.f32.partialorder %v3097, 0.0
        %vm3104 = vcmp.gt.f32.partialorder %v3098, 0.0
        %v3105 = vmul.f32 %v3093, 0.2
        %v3106 = vmul.f32 %v3094, 0.2
        %v3107 = vmul.f32 %v3095, 0.2
        %v3108 = vmul.f32 %v3096, 0.2
        %v3109 = vmul.f32 %v3097, 0.2
        %v3110 = vmul.f32 %v3098, 0.2
        %v3111 = vsel %vm3099, %v3093, %v3105
        %v3112 = vsel %vm3100, %v3094, %v3106
        %v3113 = vsel %vm3101, %v3095, %v3107
        %v3114 = vsel %vm3102, %v3096, %v3108
        %v3115 = vsel %vm3103, %v3097, %v3109
        %v3116 = vsel %vm3104, %v3098, %v3110
        %v3117 = vadd.f32 %v3111, %v1066
        %v3118 = vadd.f32 %v3112, %v1067
        %v3119 = vadd.f32 %v3113, %v1068
        %v3120 = vadd.f32 %v3114, %v1069
        %v3121 = vadd.f32 %v3115, %v1070
        %v3122 = vadd.f32 %v3116, %v1071
        %v3123 = vsel %vm642, %v3117, -inf
        %3124 = vmax.xlane.f32.xlu0 %v3123
        %v3125 = vpop.xlane.xlu0 %3124
        %v3126 = vsel %vm642, %v3118, -inf
        %3127 = vmax.xlane.f32.xlu0 %v3126
        %v3128 = vpop.xlane.xlu0 %3127
        %v3129 = vsel %vm642, %v3119, -inf
        %3130 = vmax.xlane.f32.xlu0 %v3129
        %v3131 = vpop.xlane.xlu0 %3130
        %v3132 = vsel %vm642, %v3120, -inf
        %3133 = vmax.xlane.f32.xlu0 %v3132
        %v3134 = vpop.xlane.xlu0 %3133
        %v3135 = vsel %vm642, %v3121, -inf
        %3136 = vmax.xlane.f32.xlu0 %v3135
        %v3137 = vpop.xlane.xlu0 %3136
        %v3138 = vsel %vm642, %v3122, -inf
        %3139 = vmax.xlane.f32.xlu0 %v3138
        %v3140 = vpop.xlane.xlu0 %3139
        %v3141 = vsub.f32 %v3117, %v3125
        %v3142 = vsub.f32 %v3118, %v3128
        %v3143 = vsub.f32 %v3119, %v3131
        %v3144 = vsub.f32 %v3120, %v3134
        %v3145 = vsub.f32 %v3121, %v3137
        %v3146 = vsub.f32 %v3122, %v3140
        %v3147 = vmul.f32 %v3141, 1.442695
        %v3148 = vpow.pop %v3147
        %v3149 = vmul.f32 %v3142, 1.442695
        %v3150 = vpow.pop %v3149
        %v3151 = vmul.f32 %v3143, 1.442695
        %v3152 = vpow.pop %v3151
        %v3153 = vmul.f32 %v3144, 1.442695
        %v3154 = vpow.pop %v3153
        %v3155 = vmul.f32 %v3145, 1.442695
        %v3156 = vpow.pop %v3155
        %v3157 = vmul.f32 %v3146, 1.442695
        %v3158 = vpow.pop %v3157
        %v3159 = vsel %vm642, %v3148, 0.0
        %3160 = vadd.xlane.f32.xlu0 %v3159
        %v3161 = vpop.xlane.xlu0 %3160
        %v3162 = vsel %vm642, %v3150, 0.0
        %3163 = vadd.xlane.f32.xlu0 %v3162
        %v3164 = vpop.xlane.xlu0 %3163
        %v3165 = vsel %vm642, %v3152, 0.0
        %3166 = vadd.xlane.f32.xlu0 %v3165
        %v3167 = vpop.xlane.xlu0 %3166
        %v3168 = vsel %vm642, %v3154, 0.0
        %3169 = vadd.xlane.f32.xlu0 %v3168
        %v3170 = vpop.xlane.xlu0 %3169
        %v3171 = vsel %vm642, %v3156, 0.0
        %3172 = vadd.xlane.f32.xlu0 %v3171
        %v3173 = vpop.xlane.xlu0 %3172
        %v3174 = vsel %vm642, %v3158, 0.0
        %3175 = vadd.xlane.f32.xlu0 %v3174
        %v3176 = vpop.xlane.xlu0 %3175
        %v3177 = vrcp.pop %v3161
        %v3178 = vrcp.pop %v3164
        %v3179 = vrcp.pop %v3167
        %v3180 = vrcp.pop %v3170
        %v3181 = vrcp.pop %v3173
        %v3182 = vrcp.pop %v3176
        %v3183 = vmul.f32 %v3177, 0.33333334
        %v3184 = vmul.f32 %v3178, 0.33333334
        %v3185 = vmul.f32 %v3179, 0.33333334
        %v3186 = vmul.f32 %v3180, 0.33333334
        %v3187 = vmul.f32 %v3181, 0.33333334
        %v3188 = vmul.f32 %v3182, 0.33333334
        %v3189 = vmul.f32 %v3148, %v3183
        %v3190 = vmul.f32 %v3150, %v3184
        %v3191 = vmul.f32 %v3152, %v3185
        %v3192 = vmul.f32 %v3154, %v3186
        %v3193 = vmul.f32 %v3156, %v3187
        %v3194 = vmul.f32 %v3158, %v3188
        %v3196 = vsel %vm642, %v3189, 0
        %v3199 = vsel %vm642, %v3190, 0
        %v3202 = vsel %vm642, %v3191, 0
        %v3205 = vsel %vm642, %v3192, 0
        %v3208 = vsel %vm642, %v3193, 0
        %v3211 = vsel %vm642, %v3194, 0
        %3213 = vmatprep.subr.mxu0 %v2390
        %3214 = vmatpush1.msra.mxu0 %v2388
        %3215 = vmatprep.subr.mxu0 %v2396
        %3216 = vmatpush1.msra.mxu0 %v2394
        %3217 = vmatprep.subr.mxu0 0.0
        %3218 = vmatpush1.msra.mxu0 0.0
        %3219 = vmatprep.subr.mxu0 0.0
        %3220 = vmatpush1.msra.mxu0 0.0
        %3221 = vmatprep.subr.mxu0 0.0
        %3222 = vmatpush1.msra.mxu0 0.0
        %3223 = vmatprep.subr.mxu0 0.0
        %3224 = vmatpush1.msra.mxu0 0.0
        %3225 = vmatprep.subr.mxu0 0.0
        %3226 = vmatpush1.msra.mxu0 0.0
        %3227 = vmatprep.subr.mxu0 0.0
        %3228 = vmatpush1.msra.mxu0 0.0
        %3229 = vmatprep.subr.mxu0 0.0
        %3230 = vmatpush1.msra.mxu0 0.0
        %3231 = vmatprep.subr.mxu0 0.0
        %3232 = vmatpush1.msra.mxu0 0.0
        %3233 = vmatprep.subr.mxu0 0.0
        %3234 = vmatpush1.msra.mxu0 0.0
        %3235 = vmatprep.subr.mxu0 0.0
        %3236 = vmatpush1.msra.mxu0 0.0
        %3237 = vmatprep.subr.mxu0 0.0
        %3238 = vmatpush1.msra.mxu0 0.0
        %3239 = vmatprep.subr.mxu0 0.0
        %3240 = vmatpush1.msra.mxu0 0.0
        %3241 = vmatprep.subr.mxu0 0.0
        %3242 = vmatpush1.msra.mxu0 0.0
        %3243 = vmatprep.subr.mxu0 0.0
        %3244 = vmatpush1.msra.mxu0 0.0
        %3245 = vmatprep.subr.mxu0 0.0
        %3246 = vmatpush1.msra.mxu0 0.0
        %3247 = vmatprep.subr.mxu0 0.0
        %3248 = vmatpush1.msra.mxu0 0.0
        %3249 = vmatprep.subr.mxu0 0.0
        %3250 = vmatpush1.msra.mxu0 0.0
        %3251 = vmatprep.subr.mxu0 0.0
        %3252 = vmatpush1.msra.mxu0 0.0
        %3253 = vmatprep.subr.mxu0 0.0
        %3254 = vmatpush1.msra.mxu0 0.0
        %3255 = vmatprep.subr.mxu0 0.0
        %3256 = vmatpush1.msra.mxu0 0.0
        %3257 = vmatprep.subr.mxu0 0.0
        %3258 = vmatpush1.msra.mxu0 0.0
        %3259 = vmatprep.subr.mxu0 0.0
        %3260 = vmatpush1.msra.mxu0 0.0
        %3261 = vmatprep.subr.mxu0 0.0
        %3262 = vmatpush1.msra.mxu0 0.0
        %3263 = vmatprep.subr.mxu0 0.0
        %3264 = vmatpush1.msra.mxu0 0.0
        %3265 = vmatprep.subr.mxu0 0.0
        %3266 = vmatpush1.msra.mxu0 0.0
        %3267 = vmatprep.subr.mxu0 0.0
        %3268 = vmatpush1.msra.mxu0 0.0
        %3269 = vmatprep.subr.mxu0 0.0
        %3270 = vmatpush1.msra.mxu0 0.0
        %3271 = vmatprep.subr.mxu0 0.0
        %3272 = vmatpush1.msra.mxu0 0.0
        %3273 = vmatprep.subr.mxu0 0.0
        %3274 = vmatpush1.msra.mxu0 0.0
        %3275 = vmatprep.subr.mxu0 0.0
        %3276 = vmatpush1.msra.mxu0 0.0
        %3277 = vmatprep.mubr.f32.mxu0 0.0
        %3278 = vmatmul.mubr.f32.gmra.mrb[0].mxu0 %v3196
        %v3279 = vpop.f32.mrb[0].mxu0
        %v3280 = vadd.f32 0.0, %v3279
        %v3281 = vpop.f32.mrb[0].mxu0
        %3282 = vmatprep.mubr.f32.mxu0 0.0
        %3283 = vmatmul.mubr.f32.gmra.mrb[0].mxu0 %v3199
        %v3284 = vpop.f32.mrb[0].mxu0
        %v3285 = vadd.f32 0.0, %v3284
        %v3286 = vpop.f32.mrb[0].mxu0
        %3287 = vmatprep.mubr.f32.mxu0 0.0
        %3288 = vmatmul.mubr.f32.gmra.mrb[0].mxu0 %v3202
        %v3289 = vpop.f32.mrb[0].mxu0
        %v3290 = vpop.f32.mrb[0].mxu0
        %v3291 = vadd.f32 0.0, %v3290
        %3292 = vmatprep.mubr.f32.mxu0 0.0
        %3293 = vmatmul.mubr.f32.gmra.mrb[0].mxu0 %v3205
        %v3294 = vpop.f32.mrb[0].mxu0
        %v3295 = vpop.f32.mrb[0].mxu0
        %v3296 = vadd.f32 0.0, %v3295
        %3297 = vmatprep.mubr.f32.mxu0 0.0
        %3298 = vmatmul.mubr.f32.gmra.mrb[0].mxu0 %v3208
        %v3299 = vpop.f32.mrb[0].mxu0
        %v3300 = vpop.f32.mrb[0].mxu0
        %3301 = vmatprep.mubr.f32.mxu0 0.0
        %3302 = vmatmul.mubr.f32.gmra.mrb[0].mxu0 %v3211
        %v3303 = vpop.f32.mrb[0].mxu0
        %v3304 = vpop.f32.mrb[0].mxu0
        %3305 = vdwg.mxu0
        %3306 = vmatprep.subr.mxu0 0.0
        %3307 = vmatpush1.msra.mxu0 %v2499
        %3308 = vmatprep.subr.mxu0 0.0
        %3309 = vmatpush1.msra.mxu0 %v2504
        %3310 = vmatprep.subr.mxu0 0.0
        %3311 = vmatpush1.msra.mxu0 0.0
        %3312 = vmatprep.subr.mxu0 0.0
        %3313 = vmatpush1.msra.mxu0 0.0
        %3314 = vmatprep.subr.mxu0 0.0
        %3315 = vmatpush1.msra.mxu0 0.0
        %3316 = vmatprep.subr.mxu0 0.0
        %3317 = vmatpush1.msra.mxu0 0.0
        %3318 = vmatprep.subr.mxu0 0.0
        %3319 = vmatpush1.msra.mxu0 0.0
        %3320 = vmatprep.subr.mxu0 0.0
        %3321 = vmatpush1.msra.mxu0 0.0
        %3322 = vmatprep.subr.mxu0 0.0
        %3323 = vmatpush1.msra.mxu0 0.0
        %3324 = vmatprep.subr.mxu0 0.0
        %3325 = vmatpush1.msra.mxu0 0.0
        %3326 = vmatprep.subr.mxu0 0.0
        %3327 = vmatpush1.msra.mxu0 0.0
        %3328 = vmatprep.subr.mxu0 0.0
        %3329 = vmatpush1.msra.mxu0 0.0
        %3330 = vmatprep.subr.mxu0 0.0
        %3331 = vmatpush1.msra.mxu0 0.0
        %3332 = vmatprep.subr.mxu0 0.0
        %3333 = vmatpush1.msra.mxu0 0.0
        %3334 = vmatprep.subr.mxu0 0.0
        %3335 = vmatpush1.msra.mxu0 0.0
        %3336 = vmatprep.subr.mxu0 0.0
        %3337 = vmatpush1.msra.mxu0 0.0
        %3338 = vmatprep.subr.mxu0 0.0
        %3339 = vmatpush1.msra.mxu0 0.0
        %3340 = vmatprep.subr.mxu0 0.0
        %3341 = vmatpush1.msra.mxu0 0.0
        %3342 = vmatprep.subr.mxu0 0.0
        %3343 = vmatpush1.msra.mxu0 0.0
        %3344 = vmatprep.subr.mxu0 0.0
        %3345 = vmatpush1.msra.mxu0 0.0
        %3346 = vmatprep.subr.mxu0 0.0
        %3347 = vmatpush1.msra.mxu0 0.0
        %3348 = vmatprep.subr.mxu0 0.0
        %3349 = vmatpush1.msra.mxu0 0.0
        %3350 = vmatprep.subr.mxu0 0.0
        %3351 = vmatpush1.msra.mxu0 0.0
        %3352 = vmatprep.subr.mxu0 0.0
        %3353 = vmatpush1.msra.mxu0 0.0
        %3354 = vmatprep.subr.mxu0 0.0
        %3355 = vmatpush1.msra.mxu0 0.0
        %3356 = vmatprep.subr.mxu0 0.0
        %3357 = vmatpush1.msra.mxu0 0.0
        %3358 = vmatprep.subr.mxu0 0.0
        %3359 = vmatpush1.msra.mxu0 0.0
        %3360 = vmatprep.subr.mxu0 0.0
        %3361 = vmatpush1.msra.mxu0 0.0
        %3362 = vmatprep.subr.mxu0 0.0
        %3363 = vmatpush1.msra.mxu0 0.0
        %3364 = vmatprep.subr.mxu0 0.0
        %3365 = vmatpush1.msra.mxu0 0.0
        %3366 = vmatprep.subr.mxu0 0.0
        %3367 = vmatpush1.msra.mxu0 0.0
        %3368 = vmatprep.subr.mxu0 0.0
        %3369 = vmatpush1.msra.mxu0 0.0
        %3370 = vmatprep.mubr.f32.mxu0 0.0
        %3371 = vmatmul.mubr.f32.gmra.mrb[0].mxu0 %v3196
        %v3372 = vpop.f32.mrb[0].mxu0
        %v3373 = vpop.f32.mrb[0].mxu0
        %3374 = vmatprep.mubr.f32.mxu0 0.0
        %3375 = vmatmul.mubr.f32.gmra.mrb[0].mxu0 %v3199
        %v3376 = vpop.f32.mrb[0].mxu0
        %v3377 = vpop.f32.mrb[0].mxu0
        %3378 = vmatprep.mubr.f32.mxu0 0.0
        %3379 = vmatmul.mubr.f32.gmra.mrb[0].mxu0 %v3202
        %v3380 = vpop.f32.mrb[0].mxu0
        %v3381 = vpop.f32.mrb[0].mxu0
        %3382 = vmatprep.mubr.f32.mxu0 0.0
        %3383 = vmatmul.mubr.f32.gmra.mrb[0].mxu0 %v3205
        %v3384 = vpop.f32.mrb[0].mxu0
        %v3385 = vpop.f32.mrb[0].mxu0
        %3386 = vmatprep.mubr.f32.mxu0 0.0
        %3387 = vmatmul.mubr.f32.gmra.mrb[0].mxu0 %v3208
        %v3388 = vpop.f32.mrb[0].mxu0
        %v3389 = vadd.f32 0.0, %v3388
        %v3390 = vpop.f32.mrb[0].mxu0
        %3391 = vmatprep.mubr.f32.mxu0 0.0
        %3392 = vmatmul.mubr.f32.gmra.mrb[0].mxu0 %v3211
        %v3393 = vpop.f32.mrb[0].mxu0
        %v3394 = vadd.f32 0.0, %v3393
        %v3395 = vpop.f32.mrb[0].mxu0
        %3396 = vdwg.mxu0
        %v3397 = vadd.f32 %v3280, %v3291
        %v3398 = vadd.f32 %v3285, %v3296
        %v3399 = vadd.f32 %v3397, %v3389
        %v3400 = vadd.f32 %v3398, %v3394
        %v3401 = vadd.f32 %v3399, %v2272
        %v3402 = vadd.f32 %v3400, %v2272
        %3403 = vmatprep.subr.mxu0 0.0
        %3404 = vmatpush1.xpose.msra.mxu0 %v2298
        %3405 = vmatprep.subr.mxu0 0.0
        %3406 = vmatpush1.xpose.msra.mxu0 %v2301
        %3407 = vmatprep.subr.mxu0 0.0
        %3408 = vmatpush1.xpose.msra.mxu0 0.0
        %3409 = vmatprep.subr.mxu0 0.0
        %3410 = vmatpush1.xpose.msra.mxu0 0.0
        %3411 = vmatprep.subr.mxu0 0.0
        %3412 = vmatpush1.xpose.msra.mxu0 0.0
        %3413 = vmatprep.subr.mxu0 0.0
        %3414 = vmatpush1.xpose.msra.mxu0 0.0
        %3415 = vmatprep.subr.mxu0 0.0
        %3416 = vmatpush1.xpose.msra.mxu0 0.0
        %3417 = vmatprep.subr.mxu0 0.0
        %3418 = vmatpush1.xpose.msra.mxu0 0.0
        %3419 = vmatprep.subr.mxu0 0.0
        %3420 = vmatpush1.xpose.msra.mxu0 0.0
        %3421 = vmatprep.subr.mxu0 0.0
        %3422 = vmatpush1.xpose.msra.mxu0 0.0
        %3423 = vmatprep.subr.mxu0 0.0
        %3424 = vmatpush1.xpose.msra.mxu0 0.0
        %3425 = vmatprep.subr.mxu0 0.0
        %3426 = vmatpush1.xpose.msra.mxu0 0.0
        %3427 = vmatprep.subr.mxu0 0.0
        %3428 = vmatpush1.xpose.msra.mxu0 0.0
        %3429 = vmatprep.subr.mxu0 0.0
        %3430 = vmatpush1.xpose.msra.mxu0 0.0
        %3431 = vmatprep.subr.mxu0 0.0
        %3432 = vmatpush1.xpose.msra.mxu0 0.0
        %3433 = vmatprep.subr.mxu0 0.0
        %3434 = vmatpush1.xpose.msra.mxu0 0.0
        %3435 = vmatprep.subr.mxu0 0.0
        %3436 = vmatpush1.xpose.msra.mxu0 0.0
        %3437 = vmatprep.subr.mxu0 0.0
        %3438 = vmatpush1.xpose.msra.mxu0 0.0
        %3439 = vmatprep.subr.mxu0 0.0
        %3440 = vmatpush1.xpose.msra.mxu0 0.0
        %3441 = vmatprep.subr.mxu0 0.0
        %3442 = vmatpush1.xpose.msra.mxu0 0.0
        %3443 = vmatprep.subr.mxu0 0.0
        %3444 = vmatpush1.xpose.msra.mxu0 0.0
        %3445 = vmatprep.subr.mxu0 0.0
        %3446 = vmatpush1.xpose.msra.mxu0 0.0
        %3447 = vmatprep.subr.mxu0 0.0
        %3448 = vmatpush1.xpose.msra.mxu0 0.0
        %3449 = vmatprep.subr.mxu0 0.0
        %3450 = vmatpush1.xpose.msra.mxu0 0.0
        %3451 = vmatprep.subr.mxu0 0.0
        %3452 = vmatpush1.xpose.msra.mxu0 0.0
        %3453 = vmatprep.subr.mxu0 0.0
        %3454 = vmatpush1.xpose.msra.mxu0 0.0
        %3455 = vmatprep.subr.mxu0 0.0
        %3456 = vmatpush1.xpose.msra.mxu0 0.0
        %3457 = vmatprep.subr.mxu0 0.0
        %3458 = vmatpush1.xpose.msra.mxu0 0.0
        %3459 = vmatprep.subr.mxu0 0.0
        %3460 = vmatpush1.xpose.msra.mxu0 0.0
        %3461 = vmatprep.subr.mxu0 0.0
        %3462 = vmatpush1.xpose.msra.mxu0 0.0
        %3463 = vmatprep.subr.mxu0 0.0
        %3464 = vmatpush1.xpose.msra.mxu0 0.0
        %3465 = vmatprep.subr.mxu0 0.0
        %3466 = vmatpush1.xpose.msra.mxu0 0.0
        %3467 = vmatprep.mubr.f32.mxu0 0.0
        %3468 = vmatmul.mubr.f32.gmra.mrb[0].mxu0 %v2528
        %v3469 = vpop.f32.mrb[0].mxu0
        %v3470 = vadd.f32 0.0, %v3469
        %v3471 = vpop.f32.mrb[0].mxu0
        %3472 = vmatprep.mubr.f32.mxu0 0.0
        %3473 = vmatmul.mubr.f32.gmra.mrb[0].mxu0 %v2531
        %v3474 = vpop.f32.mrb[0].mxu0
        %v3475 = vadd.f32 0.0, %v3474
        %v3476 = vpop.f32.mrb[0].mxu0
        %3477 = vmatprep.mubr.f32.mxu0 0.0
        %3478 = vmatmul.mubr.f32.gmra.mrb[0].mxu0 %v2534
        %v3479 = vpop.f32.mrb[0].mxu0
        %v3480 = vadd.f32 0.0, %v3479
        %v3481 = vpop.f32.mrb[0].mxu0
        %3482 = vmatprep.mubr.f32.mxu0 0.0
        %3483 = vmatmul.mubr.f32.gmra.mrb[0].mxu0 %v2537
        %v3484 = vpop.f32.mrb[0].mxu0
        %v3485 = vadd.f32 0.0, %v3484
        %v3486 = vpop.f32.mrb[0].mxu0
        %3487 = vmatprep.mubr.f32.mxu0 0.0
        %3488 = vmatmul.mubr.f32.gmra.mrb[0].mxu0 %v2540
        %v3489 = vpop.f32.mrb[0].mxu0
        %v3490 = vadd.f32 0.0, %v3489
        %v3491 = vpop.f32.mrb[0].mxu0
        %3492 = vmatprep.mubr.f32.mxu0 0.0
        %3493 = vmatmul.mubr.f32.gmra.mrb[0].mxu0 %v2543
        %v3494 = vpop.f32.mrb[0].mxu0
        %v3495 = vadd.f32 0.0, %v3494
        %v3496 = vpop.f32.mrb[0].mxu0
        %3497 = vdwg.mxu0
        %v3498 = vmul.f32 %v2256, %v2279
        %v3499 = vmul.f32 %v2257, %v2280
        %v3500 = vmul.f32 %v2256, %v2281
        %v3501 = vmul.f32 %v2257, %v2282
        %v3502 = vmul.f32 %v2256, %v2283
        %v3503 = vmul.f32 %v2257, %v2284
        %v3504 = vsel %vm226, %v3498, 0.0
        %3505 = vadd.xlane.f32.xlu0 %v3504
        %v3506 = vpop.xlane.xlu0 %3505
        %v3507 = vsel %vm226, %v3499, 0.0
        %3508 = vadd.xlane.f32.xlu0 %v3507
        %v3509 = vpop.xlane.xlu0 %3508
        %v3510 = vsel %vm226, %v3500, 0.0
        %3511 = vadd.xlane.f32.xlu0 %v3510
        %v3512 = vpop.xlane.xlu0 %3511
        %v3513 = vsel %vm226, %v3501, 0.0
        %3514 = vadd.xlane.f32.xlu0 %v3513
        %v3515 = vpop.xlane.xlu0 %3514
        %v3516 = vsel %vm226, %v3502, 0.0
        %3517 = vadd.xlane.f32.xlu0 %v3516
        %v3518 = vpop.xlane.xlu0 %3517
        %v3519 = vsel %vm226, %v3503, 0.0
        %3520 = vadd.xlane.f32.xlu0 %v3519
        %v3521 = vpop.xlane.xlu0 %3520
        %v3522 = vadd.f32 %v3506, %v3470
        %v3523 = vadd.f32 %v3509, %v3475
        %v3524 = vadd.f32 %v3512, %v3480
        %v3525 = vadd.f32 %v3515, %v3485
        %v3526 = vadd.f32 %v3518, %v3490
        %v3527 = vadd.f32 %v3521, %v3495
        %vm3528 = vcmp.gt.f32.partialorder %v3522, 0.0
        %vm3529 = vcmp.gt.f32.partialorder %v3523, 0.0
        %vm3530 = vcmp.gt.f32.partialorder %v3524, 0.0
        %vm3531 = vcmp.gt.f32.partialorder %v3525, 0.0
        %vm3532 = vcmp.gt.f32.partialorder %v3526, 0.0
        %vm3533 = vcmp.gt.f32.partialorder %v3527, 0.0
        %v3534 = vmul.f32 %v3522, 0.2
        %v3535 = vmul.f32 %v3523, 0.2
        %v3536 = vmul.f32 %v3524, 0.2
        %v3537 = vmul.f32 %v3525, 0.2
        %v3538 = vmul.f32 %v3526, 0.2
        %v3539 = vmul.f32 %v3527, 0.2
        %v3540 = vsel %vm3528, %v3522, %v3534
        %v3541 = vsel %vm3529, %v3523, %v3535
        %v3542 = vsel %vm3530, %v3524, %v3536
        %v3543 = vsel %vm3531, %v3525, %v3537
        %v3544 = vsel %vm3532, %v3526, %v3538
        %v3545 = vsel %vm3533, %v3527, %v3539
        %v3546 = vadd.f32 %v3540, %v1501
        %v3547 = vadd.f32 %v3541, %v1502
        %v3548 = vadd.f32 %v3542, %v1503
        %v3549 = vadd.f32 %v3543, %v1504
        %v3550 = vadd.f32 %v3544, %v1505
        %v3551 = vadd.f32 %v3545, %v1506
        %v3552 = vsel %vm642, %v3546, -inf
        %3553 = vmax.xlane.f32.xlu0 %v3552
        %v3554 = vpop.xlane.xlu0 %3553
        %v3555 = vsel %vm642, %v3547, -inf
        %3556 = vmax.xlane.f32.xlu0 %v3555
        %v3557 = vpop.xlane.xlu0 %3556
        %v3558 = vsel %vm642, %v3548, -inf
        %3559 = vmax.xlane.f32.xlu0 %v3558
        %v3560 = vpop.xlane.xlu0 %3559
        %v3561 = vsel %vm642, %v3549, -inf
        %3562 = vmax.xlane.f32.xlu0 %v3561
        %v3563 = vpop.xlane.xlu0 %3562
        %v3564 = vsel %vm642, %v3550, -inf
        %3565 = vmax.xlane.f32.xlu0 %v3564
        %v3566 = vpop.xlane.xlu0 %3565
        %v3567 = vsel %vm642, %v3551, -inf
        %3568 = vmax.xlane.f32.xlu0 %v3567
        %v3569 = vpop.xlane.xlu0 %3568
        %v3570 = vsub.f32 %v3546, %v3554
        %v3571 = vsub.f32 %v3547, %v3557
        %v3572 = vsub.f32 %v3548, %v3560
        %v3573 = vsub.f32 %v3549, %v3563
        %v3574 = vsub.f32 %v3550, %v3566
        %v3575 = vsub.f32 %v3551, %v3569
        %v3576 = vmul.f32 %v3570, 1.442695
        %v3577 = vpow.pop %v3576
        %v3578 = vmul.f32 %v3571, 1.442695
        %v3579 = vpow.pop %v3578
        %v3580 = vmul.f32 %v3572, 1.442695
        %v3581 = vpow.pop %v3580
        %v3582 = vmul.f32 %v3573, 1.442695
        %v3583 = vpow.pop %v3582
        %v3584 = vmul.f32 %v3574, 1.442695
        %v3585 = vpow.pop %v3584
        %v3586 = vmul.f32 %v3575, 1.442695
        %v3587 = vpow.pop %v3586
        %v3588 = vsel %vm642, %v3577, 0.0
        %3589 = vadd.xlane.f32.xlu0 %v3588
        %v3590 = vpop.xlane.xlu0 %3589
        %v3591 = vsel %vm642, %v3579, 0.0
        %3592 = vadd.xlane.f32.xlu0 %v3591
        %v3593 = vpop.xlane.xlu0 %3592
        %v3594 = vsel %vm642, %v3581, 0.0
        %3595 = vadd.xlane.f32.xlu0 %v3594
        %v3596 = vpop.xlane.xlu0 %3595
        %v3597 = vsel %vm642, %v3583, 0.0
        %3598 = vadd.xlane.f32.xlu0 %v3597
        %v3599 = vpop.xlane.xlu0 %3598
        %v3600 = vsel %vm642, %v3585, 0.0
        %3601 = vadd.xlane.f32.xlu0 %v3600
        %v3602 = vpop.xlane.xlu0 %3601
        %v3603 = vsel %vm642, %v3587, 0.0
        %3604 = vadd.xlane.f32.xlu0 %v3603
        %v3605 = vpop.xlane.xlu0 %3604
        %v3606 = vrcp.pop %v3590
        %v3607 = vrcp.pop %v3593
        %v3608 = vrcp.pop %v3596
        %v3609 = vrcp.pop %v3599
        %v3610 = vrcp.pop %v3602
        %v3611 = vrcp.pop %v3605
        %v3612 = vmul.f32 %v3606, 0.33333334
        %v3613 = vmul.f32 %v3607, 0.33333334
        %v3614 = vmul.f32 %v3608, 0.33333334
        %v3615 = vmul.f32 %v3609, 0.33333334
        %v3616 = vmul.f32 %v3610, 0.33333334
        %v3617 = vmul.f32 %v3611, 0.33333334
        %v3618 = vmul.f32 %v3577, %v3612
        %v3619 = vmul.f32 %v3579, %v3613
        %v3620 = vmul.f32 %v3581, %v3614
        %v3621 = vmul.f32 %v3583, %v3615
        %v3622 = vmul.f32 %v3585, %v3616
        %v3623 = vmul.f32 %v3587, %v3617
        %v3625 = vsel %vm642, %v3618, 0
        %v3628 = vsel %vm642, %v3619, 0
        %v3631 = vsel %vm642, %v3620, 0
        %v3634 = vsel %vm642, %v3621, 0
        %v3637 = vsel %vm642, %v3622, 0
        %v3640 = vsel %vm642, %v3623, 0
        %3642 = vmatprep.subr.mxu0 %v2402
        %3643 = vmatpush1.msra.mxu0 %v2400
        %3644 = vmatprep.subr.mxu0 %v2408
        %3645 = vmatpush1.msra.mxu0 %v2406
        %3646 = vmatprep.subr.mxu0 0.0
        %3647 = vmatpush1.msra.mxu0 0.0
        %3648 = vmatprep.subr.mxu0 0.0
        %3649 = vmatpush1.msra.mxu0 0.0
        %3650 = vmatprep.subr.mxu0 0.0
        %3651 = vmatpush1.msra.mxu0 0.0
        %3652 = vmatprep.subr.mxu0 0.0
        %3653 = vmatpush1.msra.mxu0 0.0
        %3654 = vmatprep.subr.mxu0 0.0
        %3655 = vmatpush1.msra.mxu0 0.0
        %3656 = vmatprep.subr.mxu0 0.0
        %3657 = vmatpush1.msra.mxu0 0.0
        %3658 = vmatprep.subr.mxu0 0.0
        %3659 = vmatpush1.msra.mxu0 0.0
        %3660 = vmatprep.subr.mxu0 0.0
        %3661 = vmatpush1.msra.mxu0 0.0
        %3662 = vmatprep.subr.mxu0 0.0
        %3663 = vmatpush1.msra.mxu0 0.0
        %3664 = vmatprep.subr.mxu0 0.0
        %3665 = vmatpush1.msra.mxu0 0.0
        %3666 = vmatprep.subr.mxu0 0.0
        %3667 = vmatpush1.msra.mxu0 0.0
        %3668 = vmatprep.subr.mxu0 0.0
        %3669 = vmatpush1.msra.mxu0 0.0
        %3670 = vmatprep.subr.mxu0 0.0
        %3671 = vmatpush1.msra.mxu0 0.0
        %3672 = vmatprep.subr.mxu0 0.0
        %3673 = vmatpush1.msra.mxu0 0.0
        %3674 = vmatprep.subr.mxu0 0.0
        %3675 = vmatpush1.msra.mxu0 0.0
        %3676 = vmatprep.subr.mxu0 0.0
        %3677 = vmatpush1.msra.mxu0 0.0
        %3678 = vmatprep.subr.mxu0 0.0
        %3679 = vmatpush1.msra.mxu0 0.0
        %3680 = vmatprep.subr.mxu0 0.0
        %3681 = vmatpush1.msra.mxu0 0.0
        %3682 = vmatprep.subr.mxu0 0.0
        %3683 = vmatpush1.msra.mxu0 0.0
        %3684 = vmatprep.subr.mxu0 0.0
        %3685 = vmatpush1.msra.mxu0 0.0
        %3686 = vmatprep.subr.mxu0 0.0
        %3687 = vmatpush1.msra.mxu0 0.0
        %3688 = vmatprep.subr.mxu0 0.0
        %3689 = vmatpush1.msra.mxu0 0.0
        %3690 = vmatprep.subr.mxu0 0.0
        %3691 = vmatpush1.msra.mxu0 0.0
        %3692 = vmatprep.subr.mxu0 0.0
        %3693 = vmatpush1.msra.mxu0 0.0
        %3694 = vmatprep.subr.mxu0 0.0
        %3695 = vmatpush1.msra.mxu0 0.0
        %3696 = vmatprep.subr.mxu0 0.0
        %3697 = vmatpush1.msra.mxu0 0.0
        %3698 = vmatprep.subr.mxu0 0.0
        %3699 = vmatpush1.msra.mxu0 0.0
        %3700 = vmatprep.subr.mxu0 0.0
        %3701 = vmatpush1.msra.mxu0 0.0
        %3702 = vmatprep.subr.mxu0 0.0
        %3703 = vmatpush1.msra.mxu0 0.0
        %3704 = vmatprep.subr.mxu0 0.0
        %3705 = vmatpush1.msra.mxu0 0.0
        %3706 = vmatprep.mubr.f32.mxu0 0.0
        %3707 = vmatmul.mubr.f32.gmra.mrb[0].mxu0 %v3625
        %v3708 = vpop.f32.mrb[0].mxu0
        %v3709 = vadd.f32 0.0, %v3708
        %v3710 = vpop.f32.mrb[0].mxu0
        %3711 = vmatprep.mubr.f32.mxu0 0.0
        %3712 = vmatmul.mubr.f32.gmra.mrb[0].mxu0 %v3628
        %v3713 = vpop.f32.mrb[0].mxu0
        %v3714 = vadd.f32 0.0, %v3713
        %v3715 = vpop.f32.mrb[0].mxu0
        %3716 = vmatprep.mubr.f32.mxu0 0.0
        %3717 = vmatmul.mubr.f32.gmra.mrb[0].mxu0 %v3631
        %v3718 = vpop.f32.mrb[0].mxu0
        %v3719 = vpop.f32.mrb[0].mxu0
        %v3720 = vadd.f32 0.0, %v3719
        %3721 = vmatprep.mubr.f32.mxu0 0.0
        %3722 = vmatmul.mubr.f32.gmra.mrb[0].mxu0 %v3634
        %v3723 = vpop.f32.mrb[0].mxu0
        %v3724 = vpop.f32.mrb[0].mxu0
        %v3725 = vadd.f32 0.0, %v3724
        %3726 = vmatprep.mubr.f32.mxu0 0.0
        %3727 = vmatmul.mubr.f32.gmra.mrb[0].mxu0 %v3637
        %v3728 = vpop.f32.mrb[0].mxu0
        %v3729 = vpop.f32.mrb[0].mxu0
        %3730 = vmatprep.mubr.f32.mxu0 0.0
        %3731 = vmatmul.mubr.f32.gmra.mrb[0].mxu0 %v3640
        %v3732 = vpop.f32.mrb[0].mxu0
        %v3733 = vpop.f32.mrb[0].mxu0
        %3734 = vdwg.mxu0
        %3735 = vmatprep.subr.mxu0 0.0
        %3736 = vmatpush1.msra.mxu0 %v2509
        %3737 = vmatprep.subr.mxu0 0.0
        %3738 = vmatpush1.msra.mxu0 %v2514
        %3739 = vmatprep.subr.mxu0 0.0
        %3740 = vmatpush1.msra.mxu0 0.0
        %3741 = vmatprep.subr.mxu0 0.0
        %3742 = vmatpush1.msra.mxu0 0.0
        %3743 = vmatprep.subr.mxu0 0.0
        %3744 = vmatpush1.msra.mxu0 0.0
        %3745 = vmatprep.subr.mxu0 0.0
        %3746 = vmatpush1.msra.mxu0 0.0
        %3747 = vmatprep.subr.mxu0 0.0
        %3748 = vmatpush1.msra.mxu0 0.0
        %3749 = vmatprep.subr.mxu0 0.0
        %3750 = vmatpush1.msra.mxu0 0.0
        %3751 = vmatprep.subr.mxu0 0.0
        %3752 = vmatpush1.msra.mxu0 0.0
        %3753 = vmatprep.subr.mxu0 0.0
        %3754 = vmatpush1.msra.mxu0 0.0
        %3755 = vmatprep.subr.mxu0 0.0
        %3756 = vmatpush1.msra.mxu0 0.0
        %3757 = vmatprep.subr.mxu0 0.0
        %3758 = vmatpush1.msra.mxu0 0.0
        %3759 = vmatprep.subr.mxu0 0.0
        %3760 = vmatpush1.msra.mxu0 0.0
        %3761 = vmatprep.subr.mxu0 0.0
        %3762 = vmatpush1.msra.mxu0 0.0
        %3763 = vmatprep.subr.mxu0 0.0
        %3764 = vmatpush1.msra.mxu0 0.0
        %3765 = vmatprep.subr.mxu0 0.0
        %3766 = vmatpush1.msra.mxu0 0.0
        %3767 = vmatprep.subr.mxu0 0.0
        %3768 = vmatpush1.msra.mxu0 0.0
        %3769 = vmatprep.subr.mxu0 0.0
        %3770 = vmatpush1.msra.mxu0 0.0
        %3771 = vmatprep.subr.mxu0 0.0
        %3772 = vmatpush1.msra.mxu0 0.0
        %3773 = vmatprep.subr.mxu0 0.0
        %3774 = vmatpush1.msra.mxu0 0.0
        %3775 = vmatprep.subr.mxu0 0.0
        %3776 = vmatpush1.msra.mxu0 0.0
        %3777 = vmatprep.subr.mxu0 0.0
        %3778 = vmatpush1.msra.mxu0 0.0
        %3779 = vmatprep.subr.mxu0 0.0
        %3780 = vmatpush1.msra.mxu0 0.0
        %3781 = vmatprep.subr.mxu0 0.0
        %3782 = vmatpush1.msra.mxu0 0.0
        %3783 = vmatprep.subr.mxu0 0.0
        %3784 = vmatpush1.msra.mxu0 0.0
        %3785 = vmatprep.subr.mxu0 0.0
        %3786 = vmatpush1.msra.mxu0 0.0
        %3787 = vmatprep.subr.mxu0 0.0
        %3788 = vmatpush1.msra.mxu0 0.0
        %3789 = vmatprep.subr.mxu0 0.0
        %3790 = vmatpush1.msra.mxu0 0.0
        %3791 = vmatprep.subr.mxu0 0.0
        %3792 = vmatpush1.msra.mxu0 0.0
        %3793 = vmatprep.subr.mxu0 0.0
        %3794 = vmatpush1.msra.mxu0 0.0
        %3795 = vmatprep.subr.mxu0 0.0
        %3796 = vmatpush1.msra.mxu0 0.0
        %3797 = vmatprep.subr.mxu0 0.0
        %3798 = vmatpush1.msra.mxu0 0.0
        %3799 = vmatprep.mubr.f32.mxu0 0.0
        %3800 = vmatmul.mubr.f32.gmra.mrb[0].mxu0 %v3625
        %v3801 = vpop.f32.mrb[0].mxu0
        %v3802 = vpop.f32.mrb[0].mxu0
        %3803 = vmatprep.mubr.f32.mxu0 0.0
        %3804 = vmatmul.mubr.f32.gmra.mrb[0].mxu0 %v3628
        %v3805 = vpop.f32.mrb[0].mxu0
        %v3806 = vpop.f32.mrb[0].mxu0
        %3807 = vmatprep.mubr.f32.mxu0 0.0
        %3808 = vmatmul.mubr.f32.gmra.mrb[0].mxu0 %v3631
        %v3809 = vpop.f32.mrb[0].mxu0
        %v3810 = vpop.f32.mrb[0].mxu0
        %3811 = vmatprep.mubr.f32.mxu0 0.0
        %3812 = vmatmul.mubr.f32.gmra.mrb[0].mxu0 %v3634
        %v3813 = vpop.f32.mrb[0].mxu0
        %v3814 = vpop.f32.mrb[0].mxu0
        %3815 = vmatprep.mubr.f32.mxu0 0.0
        %3816 = vmatmul.mubr.f32.gmra.mrb[0].mxu0 %v3637
        %v3817 = vpop.f32.mrb[0].mxu0
        %v3818 = vadd.f32 0.0, %v3817
        %v3819 = vpop.f32.mrb[0].mxu0
        %3820 = vmatprep.mubr.f32.mxu0 0.0
        %3821 = vmatmul.mubr.f32.gmra.mrb[0].mxu0 %v3640
        %v3822 = vpop.f32.mrb[0].mxu0
        %v3823 = vadd.f32 0.0, %v3822
        %v3824 = vpop.f32.mrb[0].mxu0
        %3825 = vdwg.mxu0
        %v3826 = vadd.f32 %v3709, %v3720
        %v3827 = vadd.f32 %v3714, %v3725
        %v3828 = vadd.f32 %v3826, %v3818
        %v3829 = vadd.f32 %v3827, %v3823
        %v3830 = vadd.f32 %v3828, %v2272
        %v3831 = vadd.f32 %v3829, %v2272
        %3832 = vmatprep.subr.mxu0 0.0
        %3833 = vmatpush1.xpose.msra.mxu0 %v2304
        %3834 = vmatprep.subr.mxu0 0.0
        %3835 = vmatpush1.xpose.msra.mxu0 %v2307
        %3836 = vmatprep.subr.mxu0 0.0
        %3837 = vmatpush1.xpose.msra.mxu0 0.0
        %3838 = vmatprep.subr.mxu0 0.0
        %3839 = vmatpush1.xpose.msra.mxu0 0.0
        %3840 = vmatprep.subr.mxu0 0.0
        %3841 = vmatpush1.xpose.msra.mxu0 0.0
        %3842 = vmatprep.subr.mxu0 0.0
        %3843 = vmatpush1.xpose.msra.mxu0 0.0
        %3844 = vmatprep.subr.mxu0 0.0
        %3845 = vmatpush1.xpose.msra.mxu0 0.0
        %3846 = vmatprep.subr.mxu0 0.0
        %3847 = vmatpush1.xpose.msra.mxu0 0.0
        %3848 = vmatprep.subr.mxu0 0.0
        %3849 = vmatpush1.xpose.msra.mxu0 0.0
        %3850 = vmatprep.subr.mxu0 0.0
        %3851 = vmatpush1.xpose.msra.mxu0 0.0
        %3852 = vmatprep.subr.mxu0 0.0
        %3853 = vmatpush1.xpose.msra.mxu0 0.0
        %3854 = vmatprep.subr.mxu0 0.0
        %3855 = vmatpush1.xpose.msra.mxu0 0.0
        %3856 = vmatprep.subr.mxu0 0.0
        %3857 = vmatpush1.xpose.msra.mxu0 0.0
        %3858 = vmatprep.subr.mxu0 0.0
        %3859 = vmatpush1.xpose.msra.mxu0 0.0
        %3860 = vmatprep.subr.mxu0 0.0
        %3861 = vmatpush1.xpose.msra.mxu0 0.0
        %3862 = vmatprep.subr.mxu0 0.0
        %3863 = vmatpush1.xpose.msra.mxu0 0.0
        %3864 = vmatprep.subr.mxu0 0.0
        %3865 = vmatpush1.xpose.msra.mxu0 0.0
        %3866 = vmatprep.subr.mxu0 0.0
        %3867 = vmatpush1.xpose.msra.mxu0 0.0
        %3868 = vmatprep.subr.mxu0 0.0
        %3869 = vmatpush1.xpose.msra.mxu0 0.0
        %3870 = vmatprep.subr.mxu0 0.0
        %3871 = vmatpush1.xpose.msra.mxu0 0.0
        %3872 = vmatprep.subr.mxu0 0.0
        %3873 = vmatpush1.xpose.msra.mxu0 0.0
        %3874 = vmatprep.subr.mxu0 0.0
        %3875 = vmatpush1.xpose.msra.mxu0 0.0
        %3876 = vmatprep.subr.mxu0 0.0
        %3877 = vmatpush1.xpose.msra.mxu0 0.0
        %3878 = vmatprep.subr.mxu0 0.0
        %3879 = vmatpush1.xpose.msra.mxu0 0.0
        %3880 = vmatprep.subr.mxu0 0.0
        %3881 = vmatpush1.xpose.msra.mxu0 0.0
        %3882 = vmatprep.subr.mxu0 0.0
        %3883 = vmatpush1.xpose.msra.mxu0 0.0
        %3884 = vmatprep.subr.mxu0 0.0
        %3885 = vmatpush1.xpose.msra.mxu0 0.0
        %3886 = vmatprep.subr.mxu0 0.0
        %3887 = vmatpush1.xpose.msra.mxu0 0.0
        %3888 = vmatprep.subr.mxu0 0.0
        %3889 = vmatpush1.xpose.msra.mxu0 0.0
        %3890 = vmatprep.subr.mxu0 0.0
        %3891 = vmatpush1.xpose.msra.mxu0 0.0
        %3892 = vmatprep.subr.mxu0 0.0
        %3893 = vmatpush1.xpose.msra.mxu0 0.0
        %3894 = vmatprep.subr.mxu0 0.0
        %3895 = vmatpush1.xpose.msra.mxu0 0.0
        %3896 = vmatprep.mubr.f32.mxu0 0.0
        %3897 = vmatmul.mubr.f32.gmra.mrb[0].mxu0 %v2528
        %v3898 = vpop.f32.mrb[0].mxu0
        %v3899 = vadd.f32 0.0, %v3898
        %v3900 = vpop.f32.mrb[0].mxu0
        %3901 = vmatprep.mubr.f32.mxu0 0.0
        %3902 = vmatmul.mubr.f32.gmra.mrb[0].mxu0 %v2531
        %v3903 = vpop.f32.mrb[0].mxu0
        %v3904 = vadd.f32 0.0, %v3903
        %v3905 = vpop.f32.mrb[0].mxu0
        %3906 = vmatprep.mubr.f32.mxu0 0.0
        %3907 = vmatmul.mubr.f32.gmra.mrb[0].mxu0 %v2534
        %v3908 = vpop.f32.mrb[0].mxu0
        %v3909 = vadd.f32 0.0, %v3908
        %v3910 = vpop.f32.mrb[0].mxu0
        %3911 = vmatprep.mubr.f32.mxu0 0.0
        %3912 = vmatmul.mubr.f32.gmra.mrb[0].mxu0 %v2537
        %v3913 = vpop.f32.mrb[0].mxu0
        %v3914 = vadd.f32 0.0, %v3913
        %v3915 = vpop.f32.mrb[0].mxu0
        %3916 = vmatprep.mubr.f32.mxu0 0.0
        %3917 = vmatmul.mubr.f32.gmra.mrb[0].mxu0 %v2540
        %v3918 = vpop.f32.mrb[0].mxu0
        %v3919 = vadd.f32 0.0, %v3918
        %v3920 = vpop.f32.mrb[0].mxu0
        %3921 = vmatprep.mubr.f32.mxu0 0.0
        %3922 = vmatmul.mubr.f32.gmra.mrb[0].mxu0 %v2543
        %v3923 = vpop.f32.mrb[0].mxu0
        %v3924 = vadd.f32 0.0, %v3923
        %v3925 = vpop.f32.mrb[0].mxu0
        %3926 = vdwg.mxu0
        %v3927 = vmul.f32 %v2258, %v2279
        %v3928 = vmul.f32 %v2259, %v2280
        %v3929 = vmul.f32 %v2258, %v2281
        %v3930 = vmul.f32 %v2259, %v2282
        %v3931 = vmul.f32 %v2258, %v2283
        %v3932 = vmul.f32 %v2259, %v2284
        %v3933 = vsel %vm226, %v3927, 0.0
        %3934 = vadd.xlane.f32.xlu0 %v3933
        %v3935 = vpop.xlane.xlu0 %3934
        %v3936 = vsel %vm226, %v3928, 0.0
        %3937 = vadd.xlane.f32.xlu0 %v3936
        %v3938 = vpop.xlane.xlu0 %3937
        %v3939 = vsel %vm226, %v3929, 0.0
        %3940 = vadd.xlane.f32.xlu0 %v3939
        %v3941 = vpop.xlane.xlu0 %3940
        %v3942 = vsel %vm226, %v3930, 0.0
        %3943 = vadd.xlane.f32.xlu0 %v3942
        %v3944 = vpop.xlane.xlu0 %3943
        %v3945 = vsel %vm226, %v3931, 0.0
        %3946 = vadd.xlane.f32.xlu0 %v3945
        %v3947 = vpop.xlane.xlu0 %3946
        %v3948 = vsel %vm226, %v3932, 0.0
        %3949 = vadd.xlane.f32.xlu0 %v3948
        %v3950 = vpop.xlane.xlu0 %3949
        %v3951 = vadd.f32 %v3935, %v3899
        %v3952 = vadd.f32 %v3938, %v3904
        %v3953 = vadd.f32 %v3941, %v3909
        %v3954 = vadd.f32 %v3944, %v3914
        %v3955 = vadd.f32 %v3947, %v3919
        %v3956 = vadd.f32 %v3950, %v3924
        %vm3957 = vcmp.gt.f32.partialorder %v3951, 0.0
        %vm3958 = vcmp.gt.f32.partialorder %v3952, 0.0
        %vm3959 = vcmp.gt.f32.partialorder %v3953, 0.0
        %vm3960 = vcmp.gt.f32.partialorder %v3954, 0.0
        %vm3961 = vcmp.gt.f32.partialorder %v3955, 0.0
        %vm3962 = vcmp.gt.f32.partialorder %v3956, 0.0
        %v3963 = vmul.f32 %v3951, 0.2
        %v3964 = vmul.f32 %v3952, 0.2
        %v3965 = vmul.f32 %v3953, 0.2
        %v3966 = vmul.f32 %v3954, 0.2
        %v3967 = vmul.f32 %v3955, 0.2
        %v3968 = vmul.f32 %v3956, 0.2
        %v3969 = vsel %vm3957, %v3951, %v3963
        %v3970 = vsel %vm3958, %v3952, %v3964
        %v3971 = vsel %vm3959, %v3953, %v3965
        %v3972 = vsel %vm3960, %v3954, %v3966
        %v3973 = vsel %vm3961, %v3955, %v3967
        %v3974 = vsel %vm3962, %v3956, %v3968
        %v3975 = vadd.f32 %v3969, %v1936
        %v3976 = vadd.f32 %v3970, %v1937
        %v3977 = vadd.f32 %v3971, %v1938
        %v3978 = vadd.f32 %v3972, %v1939
        %v3979 = vadd.f32 %v3973, %v1940
        %v3980 = vadd.f32 %v3974, %v1941
        %v3981 = vsel %vm642, %v3975, -inf
        %3982 = vmax.xlane.f32.xlu0 %v3981
        %v3983 = vpop.xlane.xlu0 %3982
        %v3984 = vsel %vm642, %v3976, -inf
        %3985 = vmax.xlane.f32.xlu0 %v3984
        %v3986 = vpop.xlane.xlu0 %3985
        %v3987 = vsel %vm642, %v3977, -inf
        %3988 = vmax.xlane.f32.xlu0 %v3987
        %v3989 = vpop.xlane.xlu0 %3988
        %v3990 = vsel %vm642, %v3978, -inf
        %3991 = vmax.xlane.f32.xlu0 %v3990
        %v3992 = vpop.xlane.xlu0 %3991
        %v3993 = vsel %vm642, %v3979, -inf
        %3994 = vmax.xlane.f32.xlu0 %v3993
        %v3995 = vpop.xlane.xlu0 %3994
        %v3996 = vsel %vm642, %v3980, -inf
        %3997 = vmax.xlane.f32.xlu0 %v3996
        %v3998 = vpop.xlane.xlu0 %3997
        %v3999 = vsub.f32 %v3975, %v3983
        %v4000 = vsub.f32 %v3976, %v3986
        %v4001 = vsub.f32 %v3977, %v3989
        %v4002 = vsub.f32 %v3978, %v3992
        %v4003 = vsub.f32 %v3979, %v3995
        %v4004 = vsub.f32 %v3980, %v3998
        %v4005 = vmul.f32 %v3999, 1.442695
        %v4006 = vpow.pop %v4005
        %v4007 = vmul.f32 %v4000, 1.442695
        %v4008 = vpow.pop %v4007
        %v4009 = vmul.f32 %v4001, 1.442695
        %v4010 = vpow.pop %v4009
        %v4011 = vmul.f32 %v4002, 1.442695
        %v4012 = vpow.pop %v4011
        %v4013 = vmul.f32 %v4003, 1.442695
        %v4014 = vpow.pop %v4013
        %v4015 = vmul.f32 %v4004, 1.442695
        %v4016 = vpow.pop %v4015
        %v4017 = vsel %vm642, %v4006, 0.0
        %4018 = vadd.xlane.f32.xlu0 %v4017
        %v4019 = vpop.xlane.xlu0 %4018
        %v4020 = vsel %vm642, %v4008, 0.0
        %4021 = vadd.xlane.f32.xlu0 %v4020
        %v4022 = vpop.xlane.xlu0 %4021
        %v4023 = vsel %vm642, %v4010, 0.0
        %4024 = vadd.xlane.f32.xlu0 %v4023
        %v4025 = vpop.xlane.xlu0 %4024
        %v4026 = vsel %vm642, %v4012, 0.0
        %4027 = vadd.xlane.f32.xlu0 %v4026
        %v4028 = vpop.xlane.xlu0 %4027
        %v4029 = vsel %vm642, %v4014, 0.0
        %4030 = vadd.xlane.f32.xlu0 %v4029
        %v4031 = vpop.xlane.xlu0 %4030
        %v4032 = vsel %vm642, %v4016, 0.0
        %4033 = vadd.xlane.f32.xlu0 %v4032
        %v4034 = vpop.xlane.xlu0 %4033
        %v4035 = vrcp.pop %v4019
        %v4036 = vrcp.pop %v4022
        %v4037 = vrcp.pop %v4025
        %v4038 = vrcp.pop %v4028
        %v4039 = vrcp.pop %v4031
        %v4040 = vrcp.pop %v4034
        %v4041 = vmul.f32 %v4035, 0.33333334
        %v4042 = vmul.f32 %v4036, 0.33333334
        %v4043 = vmul.f32 %v4037, 0.33333334
        %v4044 = vmul.f32 %v4038, 0.33333334
        %v4045 = vmul.f32 %v4039, 0.33333334
        %v4046 = vmul.f32 %v4040, 0.33333334
        %v4047 = vmul.f32 %v4006, %v4041
        %v4048 = vmul.f32 %v4008, %v4042
        %v4049 = vmul.f32 %v4010, %v4043
        %v4050 = vmul.f32 %v4012, %v4044
        %v4051 = vmul.f32 %v4014, %v4045
        %v4052 = vmul.f32 %v4016, %v4046
        %v4054 = vsel %vm642, %v4047, 0
        %v4057 = vsel %vm642, %v4048, 0
        %v4060 = vsel %vm642, %v4049, 0
        %v4063 = vsel %vm642, %v4050, 0
        %v4066 = vsel %vm642, %v4051, 0
        %v4069 = vsel %vm642, %v4052, 0
        %4071 = vmatprep.subr.mxu0 %v2414
        %4072 = vmatpush1.msra.mxu0 %v2412
        %4073 = vmatprep.subr.mxu0 %v2420
        %4074 = vmatpush1.msra.mxu0 %v2418
        %4075 = vmatprep.subr.mxu0 0.0
        %4076 = vmatpush1.msra.mxu0 0.0
        %4077 = vmatprep.subr.mxu0 0.0
        %4078 = vmatpush1.msra.mxu0 0.0
        %4079 = vmatprep.subr.mxu0 0.0
        %4080 = vmatpush1.msra.mxu0 0.0
        %4081 = vmatprep.subr.mxu0 0.0
        %4082 = vmatpush1.msra.mxu0 0.0
        %4083 = vmatprep.subr.mxu0 0.0
        %4084 = vmatpush1.msra.mxu0 0.0
        %4085 = vmatprep.subr.mxu0 0.0
        %4086 = vmatpush1.msra.mxu0 0.0
        %4087 = vmatprep.subr.mxu0 0.0
        %4088 = vmatpush1.msra.mxu0 0.0
        %4089 = vmatprep.subr.mxu0 0.0
        %4090 = vmatpush1.msra.mxu0 0.0
        %4091 = vmatprep.subr.mxu0 0.0
        %4092 = vmatpush1.msra.mxu0 0.0
        %4093 = vmatprep.subr.mxu0 0.0
        %4094 = vmatpush1.msra.mxu0 0.0
        %4095 = vmatprep.subr.mxu0 0.0
        %4096 = vmatpush1.msra.mxu0 0.0
        %4097 = vmatprep.subr.mxu0 0.0
        %4098 = vmatpush1.msra.mxu0 0.0
        %4099 = vmatprep.subr.mxu0 0.0
        %4100 = vmatpush1.msra.mxu0 0.0
        %4101 = vmatprep.subr.mxu0 0.0
        %4102 = vmatpush1.msra.mxu0 0.0
        %4103 = vmatprep.subr.mxu0 0.0
        %4104 = vmatpush1.msra.mxu0 0.0
        %4105 = vmatprep.subr.mxu0 0.0
        %4106 = vmatpush1.msra.mxu0 0.0
        %4107 = vmatprep.subr.mxu0 0.0
        %4108 = vmatpush1.msra.mxu0 0.0
        %4109 = vmatprep.subr.mxu0 0.0
        %4110 = vmatpush1.msra.mxu0 0.0
        %4111 = vmatprep.subr.mxu0 0.0
        %4112 = vmatpush1.msra.mxu0 0.0
        %4113 = vmatprep.subr.mxu0 0.0
        %4114 = vmatpush1.msra.mxu0 0.0
        %4115 = vmatprep.subr.mxu0 0.0
        %4116 = vmatpush1.msra.mxu0 0.0
        %4117 = vmatprep.subr.mxu0 0.0
        %4118 = vmatpush1.msra.mxu0 0.0
        %4119 = vmatprep.subr.mxu0 0.0
        %4120 = vmatpush1.msra.mxu0 0.0
        %4121 = vmatprep.subr.mxu0 0.0
        %4122 = vmatpush1.msra.mxu0 0.0
        %4123 = vmatprep.subr.mxu0 0.0
        %4124 = vmatpush1.msra.mxu0 0.0
        %4125 = vmatprep.subr.mxu0 0.0
        %4126 = vmatpush1.msra.mxu0 0.0
        %4127 = vmatprep.subr.mxu0 0.0
        %4128 = vmatpush1.msra.mxu0 0.0
        %4129 = vmatprep.subr.mxu0 0.0
        %4130 = vmatpush1.msra.mxu0 0.0
        %4131 = vmatprep.subr.mxu0 0.0
        %4132 = vmatpush1.msra.mxu0 0.0
        %4133 = vmatprep.subr.mxu0 0.0
        %4134 = vmatpush1.msra.mxu0 0.0
        %4135 = vmatprep.mubr.f32.mxu0 0.0
        %4136 = vmatmul.mubr.f32.gmra.mrb[0].mxu0 %v4054
        %v4137 = vpop.f32.mrb[0].mxu0
        %v4138 = vadd.f32 0.0, %v4137
        %v4139 = vpop.f32.mrb[0].mxu0
        %4140 = vmatprep.mubr.f32.mxu0 0.0
        %4141 = vmatmul.mubr.f32.gmra.mrb[0].mxu0 %v4057
        %v4142 = vpop.f32.mrb[0].mxu0
        %v4143 = vadd.f32 0.0, %v4142
        %v4144 = vpop.f32.mrb[0].mxu0
        %4145 = vmatprep.mubr.f32.mxu0 0.0
        %4146 = vmatmul.mubr.f32.gmra.mrb[0].mxu0 %v4060
        %v4147 = vpop.f32.mrb[0].mxu0
        %v4148 = vpop.f32.mrb[0].mxu0
        %v4149 = vadd.f32 0.0, %v4148
        %4150 = vmatprep.mubr.f32.mxu0 0.0
        %4151 = vmatmul.mubr.f32.gmra.mrb[0].mxu0 %v4063
        %v4152 = vpop.f32.mrb[0].mxu0
        %v4153 = vpop.f32.mrb[0].mxu0
        %v4154 = vadd.f32 0.0, %v4153
        %4155 = vmatprep.mubr.f32.mxu0 0.0
        %4156 = vmatmul.mubr.f32.gmra.mrb[0].mxu0 %v4066
        %v4157 = vpop.f32.mrb[0].mxu0
        %v4158 = vpop.f32.mrb[0].mxu0
        %4159 = vmatprep.mubr.f32.mxu0 0.0
        %4160 = vmatmul.mubr.f32.gmra.mrb[0].mxu0 %v4069
        %v4161 = vpop.f32.mrb[0].mxu0
        %v4162 = vpop.f32.mrb[0].mxu0
        %4163 = vdwg.mxu0
        %4164 = vmatprep.subr.mxu0 0.0
        %4165 = vmatpush1.msra.mxu0 %v2519
        %4166 = vmatprep.subr.mxu0 0.0
        %4167 = vmatpush1.msra.mxu0 %v2524
        %4168 = vmatprep.subr.mxu0 0.0
        %4169 = vmatpush1.msra.mxu0 0.0
        %4170 = vmatprep.subr.mxu0 0.0
        %4171 = vmatpush1.msra.mxu0 0.0
        %4172 = vmatprep.subr.mxu0 0.0
        %4173 = vmatpush1.msra.mxu0 0.0
        %4174 = vmatprep.subr.mxu0 0.0
        %4175 = vmatpush1.msra.mxu0 0.0
        %4176 = vmatprep.subr.mxu0 0.0
        %4177 = vmatpush1.msra.mxu0 0.0
        %4178 = vmatprep.subr.mxu0 0.0
        %4179 = vmatpush1.msra.mxu0 0.0
        %4180 = vmatprep.subr.mxu0 0.0
        %4181 = vmatpush1.msra.mxu0 0.0
        %4182 = vmatprep.subr.mxu0 0.0
        %4183 = vmatpush1.msra.mxu0 0.0
        %4184 = vmatprep.subr.mxu0 0.0
        %4185 = vmatpush1.msra.mxu0 0.0
        %4186 = vmatprep.subr.mxu0 0.0
        %4187 = vmatpush1.msra.mxu0 0.0
        %4188 = vmatprep.subr.mxu0 0.0
        %4189 = vmatpush1.msra.mxu0 0.0
        %4190 = vmatprep.subr.mxu0 0.0
        %4191 = vmatpush1.msra.mxu0 0.0
        %4192 = vmatprep.subr.mxu0 0.0
        %4193 = vmatpush1.msra.mxu0 0.0
        %4194 = vmatprep.subr.mxu0 0.0
        %4195 = vmatpush1.msra.mxu0 0.0
        %4196 = vmatprep.subr.mxu0 0.0
        %4197 = vmatpush1.msra.mxu0 0.0
        %4198 = vmatprep.subr.mxu0 0.0
        %4199 = vmatpush1.msra.mxu0 0.0
        %4200 = vmatprep.subr.mxu0 0.0
        %4201 = vmatpush1.msra.mxu0 0.0
        %4202 = vmatprep.subr.mxu0 0.0
        %4203 = vmatpush1.msra.mxu0 0.0
        %4204 = vmatprep.subr.mxu0 0.0
        %4205 = vmatpush1.msra.mxu0 0.0
        %4206 = vmatprep.subr.mxu0 0.0
        %4207 = vmatpush1.msra.mxu0 0.0
        %4208 = vmatprep.subr.mxu0 0.0
        %4209 = vmatpush1.msra.mxu0 0.0
        %4210 = vmatprep.subr.mxu0 0.0
        %4211 = vmatpush1.msra.mxu0 0.0
        %4212 = vmatprep.subr.mxu0 0.0
        %4213 = vmatpush1.msra.mxu0 0.0
        %4214 = vmatprep.subr.mxu0 0.0
        %4215 = vmatpush1.msra.mxu0 0.0
        %4216 = vmatprep.subr.mxu0 0.0
        %4217 = vmatpush1.msra.mxu0 0.0
        %4218 = vmatprep.subr.mxu0 0.0
        %4219 = vmatpush1.msra.mxu0 0.0
        %4220 = vmatprep.subr.mxu0 0.0
        %4221 = vmatpush1.msra.mxu0 0.0
        %4222 = vmatprep.subr.mxu0 0.0
        %4223 = vmatpush1.msra.mxu0 0.0
        %4224 = vmatprep.subr.mxu0 0.0
        %4225 = vmatpush1.msra.mxu0 0.0
        %4226 = vmatprep.subr.mxu0 0.0
        %4227 = vmatpush1.msra.mxu0 0.0
        %4228 = vmatprep.mubr.f32.mxu0 0.0
        %4229 = vmatmul.mubr.f32.gmra.mrb[0].mxu0 %v4054
        %v4230 = vpop.f32.mrb[0].mxu0
        %v4231 = vpop.f32.mrb[0].mxu0
        %4232 = vmatprep.mubr.f32.mxu0 0.0
        %4233 = vmatmul.mubr.f32.gmra.mrb[0].mxu0 %v4057
        %v4234 = vpop.f32.mrb[0].mxu0
        %v4235 = vpop.f32.mrb[0].mxu0
        %4236 = vmatprep.mubr.f32.mxu0 0.0
        %4237 = vmatmul.mubr.f32.gmra.mrb[0].mxu0 %v4060
        %v4238 = vpop.f32.mrb[0].mxu0
        %v4239 = vpop.f32.mrb[0].mxu0
        %4240 = vmatprep.mubr.f32.mxu0 0.0
        %4241 = vmatmul.mubr.f32.gmra.mrb[0].mxu0 %v4063
        %v4242 = vpop.f32.mrb[0].mxu0
        %v4243 = vpop.f32.mrb[0].mxu0
        %4244 = vmatprep.mubr.f32.mxu0 0.0
        %4245 = vmatmul.mubr.f32.gmra.mrb[0].mxu0 %v4066
        %v4246 = vpop.f32.mrb[0].mxu0
        %v4247 = vadd.f32 0.0, %v4246
        %v4248 = vpop.f32.mrb[0].mxu0
        %4249 = vmatprep.mubr.f32.mxu0 0.0
        %4250 = vmatmul.mubr.f32.gmra.mrb[0].mxu0 %v4069
        %v4251 = vpop.f32.mrb[0].mxu0
        %v4252 = vadd.f32 0.0, %v4251
        %v4253 = vpop.f32.mrb[0].mxu0
        %4254 = vdwg.mxu0
        %v4255 = vadd.f32 %v4138, %v4149
        %v4256 = vadd.f32 %v4143, %v4154
        %v4257 = vadd.f32 %v4255, %v4247
        %v4258 = vadd.f32 %v4256, %v4252
        %v4259 = vadd.f32 %v4257, %v2272
        %v4260 = vadd.f32 %v4258, %v2272
        %4263 = vrot.lane.b32.xlu0 %v3401, 32
        %v4264 = vpop.permute.xlu0 %4263
        %4265 = vrot.lane.b32.xlu0 %v3402, 32
        %v4266 = vpop.permute.xlu0 %4265
        %4271 = vrot.lane.b32.xlu0 %v3830, 64
        %v4272 = vpop.permute.xlu0 %4271
        %4273 = vrot.lane.b32.xlu0 %v3831, 64
        %v4274 = vpop.permute.xlu0 %4273
        %4279 = vrot.lane.b32.xlu0 %v4259, 96
        %v4280 = vpop.permute.xlu0 %4279
        %4281 = vrot.lane.b32.xlu0 %v4260, 96
        %v4282 = vpop.permute.xlu0 %4281
        %v4285 = vsel %vm226, %v2972, %v4264
        %v4286 = vsel %vm226, %v2973, %v4266
        %vm4287 = vcmask 523264
        %v4288 = vsel %vm4287, %v4285, %v4272
        %v4289 = vsel %vm4287, %v4286, %v4274
        %vm4290 = vcmask 785408
        %v4291 = vsel %vm4290, %v4288, %v4280
        %v4292 = vsel %vm4290, %v4289, %v4282
        %4293 = vst [vmem:[%s180] sm:$0xff] %v4291
        %4294 = vst [vmem:[%s180 + $0x8] sm:$0xff] %v4292
        %s4295 = sand.u32 %s98, 1
        %s4296 = scalar_lea.sflag [#allocation3], %s4295
        %s4297 = sand.u32 %s98, 1
        %s4298 = smul.addr %s4297, 16
        %s4299 = scalar_lea.vmem [#allocation2], %s4298
        // Predicated region
        $region33: #{tpu_custom_call.1} parent=31 // pred_check
          %p4300 = pneg %p108
        $region34: #{tpu_custom_call.1} parent=31 // pred_check_branch
          %4302 = sbr.rel (%p4300) target = $region36
        $region35: #{tpu_custom_call.1} parent=31 // pred_region
          %s4304 = ssub.s32 256, 256
          %4305 = vsyncadd %s4296, %s4304
          %s4306 = smul.addr %s17, 128
          %s4307 = scalar_lea.hbm %s3, %s4306
          %s4308 = sshll.u32 %s4299, 4
          %s4309 = int_to_ptr.vmem [resolvable:$true] %s4308
          %4314 = dma.vmem_to_hbm [thread:$0]  %s4309, 256, %s4307, %s4296, 128, 256, 8
        $region36: #{tpu_custom_call.1} parent=31 // pred_fallthru
          _
      $region32: #{tpu_custom_call.1} parent=5 // pred_fallthru
        _
      %p4315 = scmp.le.s32.totalorder 2, %s12
      // Predicated region
      $region37: #{tpu_custom_call.1} parent=5 // pred_check
        %p4316 = pneg %p4315
      $region38: #{tpu_custom_call.1} parent=5 // pred_check_branch
        %4318 = sbr.rel (%p4316) target = $region40
      $region39: #{tpu_custom_call.1} parent=5 // pred_region
        %s4319 = ssub.s32 %s12, 2
        // Predicated region
        $region41: #{tpu_custom_call.1} parent=39 // pred_check
          %p4320 = pneg %p114
        $region42: #{tpu_custom_call.1} parent=39 // pred_check_branch
          %4322 = sbr.rel (%p4320) target = $region44
        $region43: #{tpu_custom_call.1} parent=39 // pred_region
          %s4323 = sand.u32 %s99, 1
          %s4324 = scalar_lea.sflag [#allocation3], %s4323
          %s4325 = sand.u32 %s99, 1
          %s4326 = smul.addr %s4325, 16
          %s4327 = scalar_lea.vmem [#allocation2], %s4326
          %4328 = dma.done %s4324, 256
        $region44: #{tpu_custom_call.1} parent=39 // pred_fallthru
          _
      $region40: #{tpu_custom_call.1} parent=5 // pred_fallthru
        _
    $region6: #{tpu_custom_call.1} parent=1 // loop_footer
      %s16 = sadd.s32 1, %s12
    $region7: #{tpu_custom_call.1} parent=1 // loop_footer_branch
      %11 = sbr.rel target = $region3
    $region8: #{tpu_custom_call.1} parent=1 // loop_exit
      _
    %4329 = vsyncpa [#allocation3], 1
    %s4330 = scalar_lea.sflag [#allocation3], 1
    %4331 = vsyncpa %s4330, 1

</llo_original>
